<compile_context>
chip_gen: v7x
topology: tpu7x:2x2x1
jax: 0.10.0
libtpu: 0.0.40
codegen_flags: <defaults>
</compile_context>

<pallas_src>
import functools

import jax
import jax.numpy as jnp
from jax.experimental import pallas as pl
from jax.experimental.pallas import tpu as pltpu


def _round_up(x, m):
    return (x + m - 1) // m * m


_TM_MAX = 512                       # max M tile (mem-bound pipeline sweet spot)
_VMEM_LIMIT = 32 * 1024 * 1024      # raise v5e's 16 MiB scoped default; safe on v6e/v7x


def _row_tiling(m):
    """Pick (padded_rows, row_tile).

    Rows are padded only to a multiple of 8 (sublane alignment, <=7 extra
    rows). The tile is chosen so that (a) there are at least 2 tiles whenever
    possible -> the "parallel" grid axis actually shards across v7x's two
    TensorCores, (b) tiles are large (<= _TM_MAX) for pipeline efficiency.
    Ragged last tiles are handled by grid = pl.cdiv (no tile-multiple padding).
    """
    mp = _round_up(max(m, 8), 8)
    if mp >= 2 * _TM_MAX:
        return mp, _TM_MAX
    if mp >= 16:
        return mp, _round_up(mp // 2, 8)   # exactly two (possibly ragged) tiles
    return mp, mp


# ----------------------------------------------------------------------------
# Pallas kernels
# ----------------------------------------------------------------------------
def _matmul_bias_kernel(x_ref, w_ref, b_ref, o_ref, *, relu):
    """out = relu?(x @ w + b); bf16 operands, f32 MXU accumulation."""
    acc = jnp.dot(x_ref[...], w_ref[...], preferred_element_type=jnp.float32)
    acc = acc + b_ref[...]            # (1, N) bias broadcasts over rows
    if relu:
        acc = jnp.maximum(acc, 0.0)
    o_ref[...] = acc.astype(o_ref.dtype)


def _fused_tail_kernel(p2_ref, w2_ref, b2_ref, w3s_ref, b3_ref,
                       w4_ref, b4_ref, w5_ref, b5_ref, o_ref):
    """conv2(+ReLU) -> conv3(+ReLU) -> fc1(+ReLU) -> fc2, one launch.

    p2_ref: (9, tm, 512) conv2 im2col patches, spatial position leading so the
    kernel indexes positions with a plain leading-dim index (no relayout).
    conv2's 3x3 output is exactly conv3's window, so conv3 is the sum over the
    9 positions of  relu(patch_p @ W2 + b2) @ W3_p.  All intermediates stay in
    vregs/VMEM; only the final Q block is stored (lane-dense, 128 wide).
    """
    w2 = w2_ref[...]
    b2 = b2_ref[...]

    def conv_pos(p):
        h2 = jnp.dot(p2_ref[p], w2, preferred_element_type=jnp.float32)
        h2 = jnp.maximum(h2 + b2, 0.0).astype(jnp.bfloat16)
        return jnp.dot(h2, w3s_ref[p], preferred_element_type=jnp.float32)

    acc = conv_pos(0)
    for p in range(1, 9):            # static unroll: 18 small MXU matmuls
        acc = acc + conv_pos(p)
    h = jnp.maximum(acc + b3_ref[...], 0.0).astype(jnp.bfloat16)
    h = jnp.dot(h, w4_ref[...], preferred_element_type=jnp.float32)
    h = jnp.maximum(h + b4_ref[...], 0.0).astype(jnp.bfloat16)
    h = jnp.dot(h, w5_ref[...], preferred_element_type=jnp.float32)
    o_ref[...] = (h + b5_ref[...]).astype(o_ref.dtype)


# ----------------------------------------------------------------------------
# Pallas wrappers
# ----------------------------------------------------------------------------
def fused_matmul_bias(x, w_p, b_p, n_out, *, relu, out_dtype=jnp.float32):
    """x:(M,K) bf16; w_p:(Kp,Np) bf16 zero-padded; b_p:(1,Np) f32 zero-padded.

    K is padded only when the weight was padded (conv1/conv2 K are already
    128-dense, so no copy there); M is padded only to a multiple of 8; the
    lane (N) axis stays 128-dense inside the kernel (unmasked stores) and the
    result is sliced back to (M, n_out) outside.
    """
    m, k = x.shape
    kp, np_ = w_p.shape
    if x.dtype != jnp.bfloat16:
        x = x.astype(jnp.bfloat16)
    if k != kp:                               # only the ragged-K layers pay this
        x = jnp.pad(x, ((0, 0), (0, kp - k)))
    mp, tm = _row_tiling(m)
    if mp != m:                               # <= 7 extra rows, usually a no-op
        x = jnp.pad(x, ((0, mp - m), (0, 0)))
    out = pl.pallas_call(
        functools.partial(_matmul_bias_kernel, relu=relu),
        out_shape=jax.ShapeDtypeStruct((mp, np_), out_dtype),
        grid=(pl.cdiv(mp, tm),),
        in_specs=[
            pl.BlockSpec((tm, kp), lambda i: (i, 0)),
            pl.BlockSpec((kp, np_), lambda i: (0, 0)),   # resident across M tiles
            pl.BlockSpec((1, np_), lambda i: (0, 0)),    # resident across M tiles
        ],
        out_specs=pl.BlockSpec((tm, np_), lambda i: (i, 0)),
        compiler_params=pltpu.CompilerParams(
            dimension_semantics=("parallel",),
            vmem_limit_bytes=_VMEM_LIMIT),
    )(x, w_p, b_p)
    return out[:m, :n_out]


def fused_tail(p2, p, out_size):
    """Single pallas_call for conv2 + conv3 + fc1 + fc2.

    p2: (batch, 9, 512) bf16 conv2 im2col patches (conv2 output spatial == 3x3).
    """
    n, pos, k2 = p2.shape
    assert pos == 9
    k2p, n2 = p["conv2_w"].shape
    s3, c3p, n3 = p["conv3_ws"].shape
    k4, n4 = p["fc1_w"].shape
    k5, n5 = p["fc2_w"].shape
    assert k2p == k2 and s3 == 9 and c3p == n2 and k4 == n3 and k5 == n4

    mp, tm = _row_tiling(n)
    if mp != n:
        p2 = jnp.pad(p2, ((0, mp - n), (0, 0), (0, 0)))
    # Spatial-position-leading layout so the kernel uses p2_ref[p] (leading-dim
    # index, zero in-kernel relayout). One small XLA transpose, far cheaper
    # than the conv2-output writeback + conv3 patch re-read it replaces.
    p2 = jnp.transpose(p2, (1, 0, 2))          # (9, mp, k2)

    out = pl.pallas_call(
        _fused_tail_kernel,
        out_shape=jax.ShapeDtypeStruct((mp, n5), jnp.float32),
        grid=(pl.cdiv(mp, tm),),
        in_specs=[
            pl.BlockSpec((9, tm, k2), lambda i: (0, i, 0)),
            pl.BlockSpec((k2p, n2), lambda i: (0, 0)),
            pl.BlockSpec((1, n2), lambda i: (0, 0)),
            pl.BlockSpec((9, c3p, n3), lambda i: (0, 0, 0)),
            pl.BlockSpec((1, n3), lambda i: (0, 0)),
            pl.BlockSpec((k4, n4), lambda i: (0, 0)),
            pl.BlockSpec((1, n4), lambda i: (0, 0)),
            pl.BlockSpec((k5, n5), lambda i: (0, 0)),
            pl.BlockSpec((1, n5), lambda i: (0, 0)),
        ],
        out_specs=pl.BlockSpec((tm, n5), lambda i: (i, 0)),
        compiler_params=pltpu.CompilerParams(
            dimension_semantics=("parallel",),
            vmem_limit_bytes=_VMEM_LIMIT),
    )(p2, p["conv2_w"], p["conv2_b"], p["conv3_ws"], p["conv3_b"],
      p["fc1_w"], p["fc1_b"], p["fc2_w"], p["fc2_b"])
    return out[:n, :out_size]


# ----------------------------------------------------------------------------
# im2col glue (one fused XLA op per conv; feature order = (cin, kh, kw))
# ----------------------------------------------------------------------------
def _extract_patches(x_nhwc, kh, kw, stride):
    return jax.lax.conv_general_dilated_patches(
        x_nhwc, (kh, kw), (stride, stride), "VALID",
        dimension_numbers=("NHWC", "HWIO", "NHWC"))   # (N, OH, OW, Cin*KH*KW)


def conv2d_relu(x_nhwc, w2d_p, b_p, *, kh, kw, stride, cout):
    n = x_nhwc.shape[0]
    patches = _extract_patches(x_nhwc, kh, kw, stride)     # bf16 patches
    _, oh, ow, f = patches.shape
    y = fused_matmul_bias(patches.reshape(n * oh * ow, f), w2d_p, b_p, cout,
                          relu=True, out_dtype=jnp.bfloat16)
    return y.reshape(n, oh, ow, cout)


# ----------------------------------------------------------------------------
# Parameters (raw = PyTorch layout) and one-time preparation (pad + bf16)
# ----------------------------------------------------------------------------
def init_params(key, input_dims, output_size):
    c_in, h, w = input_dims
    ks = jax.random.split(key, 10)

    def u(k, shape, fan_in):
        bound = 1.0 / (fan_in ** 0.5)
        return jax.random.uniform(k, shape, jnp.float32, -bound, bound)

    h1, w1 = (h - 8) // 4 + 1, (w - 8) // 4 + 1
    h2, w2 = (h1 - 4) // 2 + 1, (w1 - 4) // 2 + 1
    h3, w3 = h2 - 2, w2 - 2
    conv_out = 64 * h3 * w3

    return {
        # PyTorch conv layout (Cout, Cin, KH, KW); linear layout (out, in).
        "conv1_w": u(ks[0], (32, c_in, 8, 8), 64 * c_in),
        "conv1_b": u(ks[1], (32,), 64 * c_in),
        "conv2_w": u(ks[2], (64, 32, 4, 4), 512),
        "conv2_b": u(ks[3], (64,), 512),
        "conv3_w": u(ks[4], (64, 64, 3, 3), 576),
        "conv3_b": u(ks[5], (64,), 576),
        "fc1_w": u(ks[6], (512, conv_out), conv_out),
        "fc1_b": u(ks[7], (512,), conv_out),
        "fc2_w": u(ks[8], (output_size, 512), 512),
        "fc2_b": u(ks[9], (output_size,), 512),
    }


def _pad2d_bf16(w2d):
    k, n = w2d.shape
    # N is padded to 128 (lane-dense stores); do NOT pad further to "fill" the
    # 256-wide MXU on v6e/v7x -- these layers are HBM-bound, not MXU-bound.
    return jnp.pad(w2d, ((0, _round_up(k, 128) - k),
                         (0, _round_up(n, 128) - n))).astype(jnp.bfloat16)


def _pad_bias(b):
    n = b.shape[0]
    return jnp.pad(b.reshape(1, n),
                   ((0, 0), (0, _round_up(n, 128) - n))).astype(jnp.float32)


def _conv3_stack(w):
    """(Cout,Cin,3,3) -> (9, 128, 128): per-spatial-position (cin,cout) mats."""
    cout, cin, kh, kw = w.shape
    ws = jnp.transpose(w, (2, 3, 1, 0)).reshape(kh * kw, cin, cout)
    ws = jnp.pad(ws, ((0, 0), (0, 128 - cin), (0, 128 - cout)))
    return ws.astype(jnp.bfloat16)


def prepare_params(raw):
    """Transpose PyTorch-layout weights to (K, N), zero-pad to 128-lane dense
    shapes and cast to bf16 (biases stay f32). Done once, outside the step."""
    def conv_w(w):  # (Cout,Cin,KH,KW) -> (Cin*KH*KW, Cout), matches patch order
        cout, cin, kh, kw = w.shape
        return _pad2d_bf16(jnp.transpose(w, (1, 2, 3, 0)).reshape(cin * kh * kw, cout))

    def fc_w(w):    # (out, in) -> (in, out)
        return _pad2d_bf16(w.T)

    return {
        "conv1_w": conv_w(raw["conv1_w"]), "conv1_b": _pad_bias(raw["conv1_b"]),
        "conv2_w": conv_w(raw["conv2_w"]), "conv2_b": _pad_bias(raw["conv2_b"]),
        "conv3_w": conv_w(raw["conv3_w"]), "conv3_b": _pad_bias(raw["conv3_b"]),
        "conv3_ws": _conv3_stack(raw["conv3_w"]),   # for the fused tail
        "fc1_w": fc_w(raw["fc1_w"]), "fc1_b": _pad_bias(raw["fc1_b"]),
        "fc2_w": fc_w(raw["fc2_w"]), "fc2_b": _pad_bias(raw["fc2_b"]),
    }


# ----------------------------------------------------------------------------
# Forward pass
# ----------------------------------------------------------------------------
def deep_q_network_forward(prepared, state_nchw, *, out_size):
    # PyTorch NCHW -> NHWC, and cast to bf16 ONCE so every im2col tensor is
    # written/read from HBM at half width (f32 accumulation stays inside MXU).
    x = jnp.transpose(state_nchw, (0, 2, 3, 1)).astype(jnp.bfloat16)
    x = conv2d_relu(x, prepared["conv1_w"], prepared["conv1_b"],
                    kh=8, kw=8, stride=4, cout=32)
    n, h1, w1, _ = x.shape
    h2, w2 = (h1 - 4) // 2 + 1, (w1 - 4) // 2 + 1
    if h2 == 3 and w2 == 3:
        # conv2 output is 3x3 == conv3 window (and conv3 output is 1x1), so
        # conv2+conv3+fc1+fc2 collapse into one fused kernel launch; NHWC/NCHW
        # flatten orders coincide at 1x1 spatial.
        p2 = _extract_patches(x, 4, 4, 2).reshape(n, 9, -1)   # (n, 9, 512) bf16
        return fused_tail(p2, prepared, out_size)
    # General spatial sizes: unfused tail (still one Pallas matmul per layer).
    x = conv2d_relu(x, prepared["conv2_w"], prepared["conv2_b"],
                    kh=4, kw=4, stride=2, cout=64)
    x = conv2d_relu(x, prepared["conv3_w"], prepared["conv3_b"],
                    kh=3, kw=3, stride=1, cout=64)
    feats = jnp.transpose(x, (0, 3, 1, 2)).reshape(n, -1)  # NCHW flatten (torch)
    h = fused_matmul_bias(feats, prepared["fc1_w"], prepared["fc1_b"], 512,
                          relu=True, out_dtype=jnp.bfloat16)
    return fused_matmul_bias(h, prepared["fc2_w"], prepared["fc2_b"], out_size,
                             relu=False, out_dtype=jnp.float32)


# ----------------------------------------------------------------------------
# Pure-JAX f32 reference (PyTorch semantics) for a correctness self-check
# ----------------------------------------------------------------------------
def reference_forward(raw, state_nchw):
    def conv(x, w, b, s):
        y = jax.lax.conv_general_dilated(
            x, w, (s, s), "VALID",
            dimension_numbers=("NCHW", "OIHW", "NCHW"))
        return jax.nn.relu(y + b[None, :, None, None])

    x = conv(state_nchw, raw["conv1_w"], raw["conv1_b"], 4)
    x = conv(x, raw["conv2_w"], raw["conv2_b"], 2)
    x = conv(x, raw["conv3_w"], raw["conv3_b"], 1)
    feats = x.reshape(x.shape[0], -1)
    h = jax.nn.relu(feats @ raw["fc1_w"].T + raw["fc1_b"])
    return h @ raw["fc2_w"].T + raw["fc2_b"]


if __name__ == "__main__":
    key = jax.random.PRNGKey(0)
    k_param, k_state = jax.random.split(key)

    input_dims = (4, 36, 36)      # (C, H, W): conv stack -> 8x8 -> 3x3 -> 1x1
    output_size = 6               # number of actions
    batch = 2

    raw_params = init_params(k_param, input_dims, output_size)
    prepared = prepare_params(raw_params)
    state = jax.random.normal(k_state, (batch,) + input_dims, dtype=jnp.float32)

    fwd = jax.jit(functools.partial(deep_q_network_forward,
                                    out_size=output_size))
    q_values = fwd(prepared, state)
    jax.block_until_ready(q_values)

    assert q_values.shape == (batch, output_size)
    assert q_values.dtype == jnp.float32

    # Numerical self-check against an f32 XLA reference (bf16 MXU tolerance,
    # scaled by the Q-value magnitude so it stays meaningful if values grow).
    q_ref = reference_forward(raw_params, state)
    err = float(jnp.max(jnp.abs(q_values - q_ref)))
    scale = max(1.0, float(jnp.max(jnp.abs(q_ref))))
    assert err <= 2e-2 * scale, f"mismatch vs f32 reference: max abs err = {err}"

    print("KERNEL_OK")
</pallas_src>

<mosaic_0001>
module attributes {stable_mosaic.version = 11 : i64} {
  func.func @_matmul_bias_kernel(%arg0: i32, %arg1: memref<64x256xbf16, #tpu.memory_space<vmem>>, %arg2: memref<256x128xbf16, #tpu.memory_space<vmem>>, %arg3: memref<1x128xf32, #tpu.memory_space<vmem>>, %arg4: memref<64x128xbf16, #tpu.memory_space<vmem>>) attributes {dimension_semantics = [#tpu.dimension_semantics<parallel>], iteration_bounds = array<i64: 2>, scalar_prefetch = 0 : i64, scratch_operands = 0 : i64, tpu.core_type = #tpu.core_type<tc>, window_params = [{transform_indices = @transform_0, window_bounds = array<i64: 64, 256>}, {pipeline_mode = #tpu.pipeline_mode<synchronous>, transform_indices = @transform_1, window_bounds = array<i64: 256, 128>}, {pipeline_mode = #tpu.pipeline_mode<synchronous>, transform_indices = @transform_2, window_bounds = array<i64: 1, 128>}, {transform_indices = @transform_3, window_bounds = array<i64: 64, 128>}]} {
    %c0 = arith.constant 0 : index
    %c0_0 = arith.constant 0 : index
    %0 = vector.load %arg1[%c0, %c0_0] : memref<64x256xbf16, #tpu.memory_space<vmem>>, vector<64x256xbf16>
    %c0_1 = arith.constant 0 : index
    %c0_2 = arith.constant 0 : index
    %1 = vector.load %arg2[%c0_1, %c0_2] : memref<256x128xbf16, #tpu.memory_space<vmem>>, vector<256x128xbf16>
    %cst = arith.constant dense<0.000000e+00> : vector<64x128xf32>
    %2 = tpu.matmul %0, %1, %cst {dimension_numbers = #tpu.dot_dimension_numbers<[1], [0], [0], [1], [0, 0, 1, 1], [], []>} : vector<64x256xbf16>, vector<256x128xbf16>, vector<64x128xf32> -> vector<64x128xf32>
    %c0_3 = arith.constant 0 : index
    %c0_4 = arith.constant 0 : index
    %3 = vector.load %arg3[%c0_3, %c0_4] : memref<1x128xf32, #tpu.memory_space<vmem>>, vector<1x128xf32>
    %4 = vector.broadcast %3 : vector<1x128xf32> to vector<64x128xf32>
    %5 = arith.addf %2, %4 : vector<64x128xf32>
    %cst_5 = arith.constant 0.000000e+00 : f32
    %6 = vector.broadcast %cst_5 : f32 to vector<64x128xf32>
    %7 = arith.maximumf %5, %6 : vector<64x128xf32>
    %8 = arith.truncf %7 : vector<64x128xf32> to vector<64x128xbf16>
    %c0_6 = arith.constant 0 : index
    %c0_7 = arith.constant 0 : index
    %9 = vector.load %arg4[%c0_6, %c0_7] : memref<64x128xbf16, #tpu.memory_space<vmem>>, vector<64x128xbf16>
    tpu.vector_store %arg4[%c0_6, %c0_7], %8 {strides = array<i32>} : memref<64x128xbf16, #tpu.memory_space<vmem>>, vector<64x128xbf16>,
    return
  }
  func.func @transform_0(%arg0: i32) -> (i32, i32) {
    %c0_i32 = arith.constant 0 : i32
    %c0_i32_0 = arith.constant 0 : i32
    return %arg0, %c0_i32 : i32, i32
  }
  func.func @transform_1(%arg0: i32) -> (i32, i32) {
    %c0_i32 = arith.constant 0 : i32
    %c0_i32_0 = arith.constant 0 : i32
    %c0_i32_1 = arith.constant 0 : i32
    return %c0_i32, %c0_i32_0 : i32, i32
  }
  func.func @transform_2(%arg0: i32) -> (i32, i32) {
    %c0_i32 = arith.constant 0 : i32
    %c0_i32_0 = arith.constant 0 : i32
    %c0_i32_1 = arith.constant 0 : i32
    return %c0_i32, %c0_i32_0 : i32, i32
  }
  func.func @transform_3(%arg0: i32) -> (i32, i32) {
    %c0_i32 = arith.constant 0 : i32
    %c0_i32_0 = arith.constant 0 : i32
    return %arg0, %c0_i32 : i32, i32
  }
}

module attributes {stable_mosaic.version = 11 : i64} {
  func.func @_fused_tail_kernel(%arg0: i32, %arg1: memref<9x8x512xbf16, #tpu.memory_space<vmem>>, %arg2: memref<512x128xbf16, #tpu.memory_space<vmem>>, %arg3: memref<1x128xf32, #tpu.memory_space<vmem>>, %arg4: memref<9x128x128xbf16, #tpu.memory_space<vmem>>, %arg5: memref<1x128xf32, #tpu.memory_space<vmem>>, %arg6: memref<128x512xbf16, #tpu.memory_space<vmem>>, %arg7: memref<1x512xf32, #tpu.memory_space<vmem>>, %arg8: memref<512x128xbf16, #tpu.memory_space<vmem>>, %arg9: memref<1x128xf32, #tpu.memory_space<vmem>>, %arg10: memref<8x128xf32, #tpu.memory_space<vmem>>) attributes {dimension_semantics = [#tpu.dimension_semantics<parallel>], iteration_bounds = array<i64: 1>, scalar_prefetch = 0 : i64, scratch_operands = 0 : i64, tpu.core_type = #tpu.core_type<tc>, window_params = [{transform_indices = @transform_0, window_bounds = array<i64: 9, 8, 512>}, {pipeline_mode = #tpu.pipeline_mode<synchronous>, transform_indices = @transform_1, window_bounds = array<i64: 512, 128>}, {pipeline_mode = #tpu.pipeline_mode<synchronous>, transform_indices = @transform_2, window_bounds = array<i64: 1, 128>}, {pipeline_mode = #tpu.pipeline_mode<synchronous>, transform_indices = @transform_3, window_bounds = array<i64: 9, 128, 128>}, {pipeline_mode = #tpu.pipeline_mode<synchronous>, transform_indices = @transform_4, window_bounds = array<i64: 1, 128>}, {pipeline_mode = #tpu.pipeline_mode<synchronous>, transform_indices = @transform_5, window_bounds = array<i64: 128, 512>}, {pipeline_mode = #tpu.pipeline_mode<synchronous>, transform_indices = @transform_6, window_bounds = array<i64: 1, 512>}, {pipeline_mode = #tpu.pipeline_mode<synchronous>, transform_indices = @transform_7, window_bounds = array<i64: 512, 128>}, {pipeline_mode = #tpu.pipeline_mode<synchronous>, transform_indices = @transform_8, window_bounds = array<i64: 1, 128>}, {transform_indices = @transform_9, window_bounds = array<i64: 8, 128>}]} {
    %c0 = arith.constant 0 : index
    %c0_0 = arith.constant 0 : index
    %0 = vector.load %arg2[%c0, %c0_0] : memref<512x128xbf16, #tpu.memory_space<vmem>>, vector<512x128xbf16>
    %c0_1 = arith.constant 0 : index
    %c0_2 = arith.constant 0 : index
    %1 = vector.load %arg3[%c0_1, %c0_2] : memref<1x128xf32, #tpu.memory_space<vmem>>, vector<1x128xf32>
    %c0_3 = arith.constant 0 : index
    %c0_4 = arith.constant 0 : index
    %c0_5 = arith.constant 0 : index
    %2 = vector.load %arg1[%c0_3, %c0_4, %c0_5] : memref<9x8x512xbf16, #tpu.memory_space<vmem>>, vector<1x8x512xbf16>
    %3 = vector.shape_cast %2 : vector<1x8x512xbf16> to vector<8x512xbf16>
    %cst = arith.constant dense<0.000000e+00> : vector<8x128xf32>
    %4 = tpu.matmul %3, %0, %cst {dimension_numbers = #tpu.dot_dimension_numbers<[1], [0], [0], [1], [0, 0, 1, 1], [], []>} : vector<8x512xbf16>, vector<512x128xbf16>, vector<8x128xf32> -> vector<8x128xf32>
    %5 = vector.broadcast %1 : vector<1x128xf32> to vector<8x128xf32>
    %6 = arith.addf %4, %5 : vector<8x128xf32>
    %cst_6 = arith.constant 0.000000e+00 : f32
    %7 = vector.broadcast %cst_6 : f32 to vector<8x128xf32>
    %8 = arith.maximumf %6, %7 : vector<8x128xf32>
    %9 = arith.truncf %8 : vector<8x128xf32> to vector<8x128xbf16>
    %c0_7 = arith.constant 0 : index
    %c0_8 = arith.constant 0 : index
    %c0_9 = arith.constant 0 : index
    %10 = vector.load %arg4[%c0_7, %c0_8, %c0_9] : memref<9x128x128xbf16, #tpu.memory_space<vmem>>, vector<1x128x128xbf16>
    %11 = vector.shape_cast %10 : vector<1x128x128xbf16> to vector<128x128xbf16>
    %cst_10 = arith.constant dense<0.000000e+00> : vector<8x128xf32>
    %12 = tpu.matmul %9, %11, %cst_10 {dimension_numbers = #tpu.dot_dimension_numbers<[1], [0], [0], [1], [0, 0, 1, 1], [], []>} : vector<8x128xbf16>, vector<128x128xbf16>, vector<8x128xf32> -> vector<8x128xf32>
    %c1 = arith.constant 1 : index
    %c0_11 = arith.constant 0 : index
    %c0_12 = arith.constant 0 : index
    %13 = vector.load %arg1[%c1, %c0_11, %c0_12] : memref<9x8x512xbf16, #tpu.memory_space<vmem>>, vector<1x8x512xbf16>
    %14 = vector.shape_cast %13 : vector<1x8x512xbf16> to vector<8x512xbf16>
    %cst_13 = arith.constant dense<0.000000e+00> : vector<8x128xf32>
    %15 = tpu.matmul %14, %0, %cst_13 {dimension_numbers = #tpu.dot_dimension_numbers<[1], [0], [0], [1], [0, 0, 1, 1], [], []>} : vector<8x512xbf16>, vector<512x128xbf16>, vector<8x128xf32> -> vector<8x128xf32>
    %16 = vector.broadcast %1 : vector<1x128xf32> to vector<8x128xf32>
    %17 = arith.addf %15, %16 : vector<8x128xf32>
    %cst_14 = arith.constant 0.000000e+00 : f32
    %18 = vector.broadcast %cst_14 : f32 to vector<8x128xf32>
    %19 = arith.maximumf %17, %18 : vector<8x128xf32>
    %20 = arith.truncf %19 : vector<8x128xf32> to vector<8x128xbf16>
    %c1_15 = arith.constant 1 : index
    %c0_16 = arith.constant 0 : index
    %c0_17 = arith.constant 0 : index
    %21 = vector.load %arg4[%c1_15, %c0_16, %c0_17] : memref<9x128x128xbf16, #tpu.memory_space<vmem>>, vector<1x128x128xbf16>
    %22 = vector.shape_cast %21 : vector<1x128x128xbf16> to vector<128x128xbf16>
    %cst_18 = arith.constant dense<0.000000e+00> : vector<8x128xf32>
    %23 = tpu.matmul %20, %22, %cst_18 {dimension_numbers = #tpu.dot_dimension_numbers<[1], [0], [0], [1], [0, 0, 1, 1], [], []>} : vector<8x128xbf16>, vector<128x128xbf16>, vector<8x128xf32> -> vector<8x128xf32>
    %24 = arith.addf %12, %23 : vector<8x128xf32>
    %c2 = arith.constant 2 : index
    %c0_19 = arith.constant 0 : index
    %c0_20 = arith.constant 0 : index
    %25 = vector.load %arg1[%c2, %c0_19, %c0_20] : memref<9x8x512xbf16, #tpu.memory_space<vmem>>, vector<1x8x512xbf16>
    %26 = vector.shape_cast %25 : vector<1x8x512xbf16> to vector<8x512xbf16>
    %cst_21 = arith.constant dense<0.000000e+00> : vector<8x128xf32>
    %27 = tpu.matmul %26, %0, %cst_21 {dimension_numbers = #tpu.dot_dimension_numbers<[1], [0], [0], [1], [0, 0, 1, 1], [], []>} : vector<8x512xbf16>, vector<512x128xbf16>, vector<8x128xf32> -> vector<8x128xf32>
    %28 = vector.broadcast %1 : vector<1x128xf32> to vector<8x128xf32>
    %29 = arith.addf %27, %28 : vector<8x128xf32>
    %cst_22 = arith.constant 0.000000e+00 : f32
    %30 = vector.broadcast %cst_22 : f32 to vector<8x128xf32>
    %31 = arith.maximumf %29, %30 : vector<8x128xf32>
    %32 = arith.truncf %31 : vector<8x128xf32> to vector<8x128xbf16>
    %c2_23 = arith.constant 2 : index
    %c0_24 = arith.constant 0 : index
    %c0_25 = arith.constant 0 : index
    %33 = vector.load %arg4[%c2_23, %c0_24, %c0_25] : memref<9x128x128xbf16, #tpu.memory_space<vmem>>, vector<1x128x128xbf16>
    %34 = vector.shape_cast %33 : vector<1x128x128xbf16> to vector<128x128xbf16>
    %cst_26 = arith.constant dense<0.000000e+00> : vector<8x128xf32>
    %35 = tpu.matmul %32, %34, %cst_26 {dimension_numbers = #tpu.dot_dimension_numbers<[1], [0], [0], [1], [0, 0, 1, 1], [], []>} : vector<8x128xbf16>, vector<128x128xbf16>, vector<8x128xf32> -> vector<8x128xf32>
    %36 = arith.addf %24, %35 : vector<8x128xf32>
    %c3 = arith.constant 3 : index
    %c0_27 = arith.constant 0 : index
    %c0_28 = arith.constant 0 : index
    %37 = vector.load %arg1[%c3, %c0_27, %c0_28] : memref<9x8x512xbf16, #tpu.memory_space<vmem>>, vector<1x8x512xbf16>
    %38 = vector.shape_cast %37 : vector<1x8x512xbf16> to vector<8x512xbf16>
    %cst_29 = arith.constant dense<0.000000e+00> : vector<8x128xf32>
    %39 = tpu.matmul %38, %0, %cst_29 {dimension_numbers = #tpu.dot_dimension_numbers<[1], [0], [0], [1], [0, 0, 1, 1], [], []>} : vector<8x512xbf16>, vector<512x128xbf16>, vector<8x128xf32> -> vector<8x128xf32>
    %40 = vector.broadcast %1 : vector<1x128xf32> to vector<8x128xf32>
    %41 = arith.addf %39, %40 : vector<8x128xf32>
    %cst_30 = arith.constant 0.000000e+00 : f32
    %42 = vector.broadcast %cst_30 : f32 to vector<8x128xf32>
    %43 = arith.maximumf %41, %42 : vector<8x128xf32>
    %44 = arith.truncf %43 : vector<8x128xf32> to vector<8x128xbf16>
    %c3_31 = arith.constant 3 : index
    %c0_32 = arith.constant 0 : index
    %c0_33 = arith.constant 0 : index
    %45 = vector.load %arg4[%c3_31, %c0_32, %c0_33] : memref<9x128x128xbf16, #tpu.memory_space<vmem>>, vector<1x128x128xbf16>
    %46 = vector.shape_cast %45 : vector<1x128x128xbf16> to vector<128x128xbf16>
    %cst_34 = arith.constant dense<0.000000e+00> : vector<8x128xf32>
    %47 = tpu.matmul %44, %46, %cst_34 {dimension_numbers = #tpu.dot_dimension_numbers<[1], [0], [0], [1], [0, 0, 1, 1], [], []>} : vector<8x128xbf16>, vector<128x128xbf16>, vector<8x128xf32> -> vector<8x128xf32>
    %48 = arith.addf %36, %47 : vector<8x128xf32>
    %c4 = arith.constant 4 : index
    %c0_35 = arith.constant 0 : index
    %c0_36 = arith.constant 0 : index
    %49 = vector.load %arg1[%c4, %c0_35, %c0_36] : memref<9x8x512xbf16, #tpu.memory_space<vmem>>, vector<1x8x512xbf16>
    %50 = vector.shape_cast %49 : vector<1x8x512xbf16> to vector<8x512xbf16>
    %cst_37 = arith.constant dense<0.000000e+00> : vector<8x128xf32>
    %51 = tpu.matmul %50, %0, %cst_37 {dimension_numbers = #tpu.dot_dimension_numbers<[1], [0], [0], [1], [0, 0, 1, 1], [], []>} : vector<8x512xbf16>, vector<512x128xbf16>, vector<8x128xf32> -> vector<8x128xf32>
    %52 = vector.broadcast %1 : vector<1x128xf32> to vector<8x128xf32>
    %53 = arith.addf %51, %52 : vector<8x128xf32>
    %cst_38 = arith.constant 0.000000e+00 : f32
    %54 = vector.broadcast %cst_38 : f32 to vector<8x128xf32>
    %55 = arith.maximumf %53, %54 : vector<8x128xf32>
    %56 = arith.truncf %55 : vector<8x128xf32> to vector<8x128xbf16>
    %c4_39 = arith.constant 4 : index
    %c0_40 = arith.constant 0 : index
    %c0_41 = arith.constant 0 : index
    %57 = vector.load %arg4[%c4_39, %c0_40, %c0_41] : memref<9x128x128xbf16, #tpu.memory_space<vmem>>, vector<1x128x128xbf16>
    %58 = vector.shape_cast %57 : vector<1x128x128xbf16> to vector<128x128xbf16>
    %cst_42 = arith.constant dense<0.000000e+00> : vector<8x128xf32>
    %59 = tpu.matmul %56, %58, %cst_42 {dimension_numbers = #tpu.dot_dimension_numbers<[1], [0], [0], [1], [0, 0, 1, 1], [], []>} : vector<8x128xbf16>, vector<128x128xbf16>, vector<8x128xf32> -> vector<8x128xf32>
    %60 = arith.addf %48, %59 : vector<8x128xf32>
    %c5 = arith.constant 5 : index
    %c0_43 = arith.constant 0 : index
    %c0_44 = arith.constant 0 : index
    %61 = vector.load %arg1[%c5, %c0_43, %c0_44] : memref<9x8x512xbf16, #tpu.memory_space<vmem>>, vector<1x8x512xbf16>
    %62 = vector.shape_cast %61 : vector<1x8x512xbf16> to vector<8x512xbf16>
    %cst_45 = arith.constant dense<0.000000e+00> : vector<8x128xf32>
    %63 = tpu.matmul %62, %0, %cst_45 {dimension_numbers = #tpu.dot_dimension_numbers<[1], [0], [0], [1], [0, 0, 1, 1], [], []>} : vector<8x512xbf16>, vector<512x128xbf16>, vector<8x128xf32> -> vector<8x128xf32>
    %64 = vector.broadcast %1 : vector<1x128xf32> to vector<8x128xf32>
    %65 = arith.addf %63, %64 : vector<8x128xf32>
    %cst_46 = arith.constant 0.000000e+00 : f32
    %66 = vector.broadcast %cst_46 : f32 to vector<8x128xf32>
    %67 = arith.maximumf %65, %66 : vector<8x128xf32>
    %68 = arith.truncf %67 : vector<8x128xf32> to vector<8x128xbf16>
    %c5_47 = arith.constant 5 : index
    %c0_48 = arith.constant 0 : index
    %c0_49 = arith.constant 0 : index
    %69 = vector.load %arg4[%c5_47, %c0_48, %c0_49] : memref<9x128x128xbf16, #tpu.memory_space<vmem>>, vector<1x128x128xbf16>
    %70 = vector.shape_cast %69 : vector<1x128x128xbf16> to vector<128x128xbf16>
    %cst_50 = arith.constant dense<0.000000e+00> : vector<8x128xf32>
    %71 = tpu.matmul %68, %70, %cst_50 {dimension_numbers = #tpu.dot_dimension_numbers<[1], [0], [0], [1], [0, 0, 1, 1], [], []>} : vector<8x128xbf16>, vector<128x128xbf16>, vector<8x128xf32> -> vector<8x128xf32>
    %72 = arith.addf %60, %71 : vector<8x128xf32>
    %c6 = arith.constant 6 : index
    %c0_51 = arith.constant 0 : index
    %c0_52 = arith.constant 0 : index
    %73 = vector.load %arg1[%c6, %c0_51, %c0_52] : memref<9x8x512xbf16, #tpu.memory_space<vmem>>, vector<1x8x512xbf16>
    %74 = vector.shape_cast %73 : vector<1x8x512xbf16> to vector<8x512xbf16>
    %cst_53 = arith.constant dense<0.000000e+00> : vector<8x128xf32>
    %75 = tpu.matmul %74, %0, %cst_53 {dimension_numbers = #tpu.dot_dimension_numbers<[1], [0], [0], [1], [0, 0, 1, 1], [], []>} : vector<8x512xbf16>, vector<512x128xbf16>, vector<8x128xf32> -> vector<8x128xf32>
    %76 = vector.broadcast %1 : vector<1x128xf32> to vector<8x128xf32>
    %77 = arith.addf %75, %76 : vector<8x128xf32>
    %cst_54 = arith.constant 0.000000e+00 : f32
    %78 = vector.broadcast %cst_54 : f32 to vector<8x128xf32>
    %79 = arith.maximumf %77, %78 : vector<8x128xf32>
    %80 = arith.truncf %79 : vector<8x128xf32> to vector<8x128xbf16>
    %c6_55 = arith.constant 6 : index
    %c0_56 = arith.constant 0 : index
    %c0_57 = arith.constant 0 : index
    %81 = vector.load %arg4[%c6_55, %c0_56, %c0_57] : memref<9x128x128xbf16, #tpu.memory_space<vmem>>, vector<1x128x128xbf16>
    %82 = vector.shape_cast %81 : vector<1x128x128xbf16> to vector<128x128xbf16>
    %cst_58 = arith.constant dense<0.000000e+00> : vector<8x128xf32>
    %83 = tpu.matmul %80, %82, %cst_58 {dimension_numbers = #tpu.dot_dimension_numbers<[1], [0], [0], [1], [0, 0, 1, 1], [], []>} : vector<8x128xbf16>, vector<128x128xbf16>, vector<8x128xf32> -> vector<8x128xf32>
    %84 = arith.addf %72, %83 : vector<8x128xf32>
    %c7 = arith.constant 7 : index
    %c0_59 = arith.constant 0 : index
    %c0_60 = arith.constant 0 : index
    %85 = vector.load %arg1[%c7, %c0_59, %c0_60] : memref<9x8x512xbf16, #tpu.memory_space<vmem>>, vector<1x8x512xbf16>
    %86 = vector.shape_cast %85 : vector<1x8x512xbf16> to vector<8x512xbf16>
    %cst_61 = arith.constant dense<0.000000e+00> : vector<8x128xf32>
    %87 = tpu.matmul %86, %0, %cst_61 {dimension_numbers = #tpu.dot_dimension_numbers<[1], [0], [0], [1], [0, 0, 1, 1], [], []>} : vector<8x512xbf16>, vector<512x128xbf16>, vector<8x128xf32> -> vector<8x128xf32>
    %88 = vector.broadcast %1 : vector<1x128xf32> to vector<8x128xf32>
    %89 = arith.addf %87, %88 : vector<8x128xf32>
    %cst_62 = arith.constant 0.000000e+00 : f32
    %90 = vector.broadcast %cst_62 : f32 to vector<8x128xf32>
    %91 = arith.maximumf %89, %90 : vector<8x128xf32>
    %92 = arith.truncf %91 : vector<8x128xf32> to vector<8x128xbf16>
    %c7_63 = arith.constant 7 : index
    %c0_64 = arith.constant 0 : index
    %c0_65 = arith.constant 0 : index
    %93 = vector.load %arg4[%c7_63, %c0_64, %c0_65] : memref<9x128x128xbf16, #tpu.memory_space<vmem>>, vector<1x128x128xbf16>
    %94 = vector.shape_cast %93 : vector<1x128x128xbf16> to vector<128x128xbf16>
    %cst_66 = arith.constant dense<0.000000e+00> : vector<8x128xf32>
    %95 = tpu.matmul %92, %94, %cst_66 {dimension_numbers = #tpu.dot_dimension_numbers<[1], [0], [0], [1], [0, 0, 1, 1], [], []>} : vector<8x128xbf16>, vector<128x128xbf16>, vector<8x128xf32> -> vector<8x128xf32>
    %96 = arith.addf %84, %95 : vector<8x128xf32>
    %c8 = arith.constant 8 : index
    %c0_67 = arith.constant 0 : index
    %c0_68 = arith.constant 0 : index
    %97 = vector.load %arg1[%c8, %c0_67, %c0_68] : memref<9x8x512xbf16, #tpu.memory_space<vmem>>, vector<1x8x512xbf16>
    %98 = vector.shape_cast %97 : vector<1x8x512xbf16> to vector<8x512xbf16>
    %cst_69 = arith.constant dense<0.000000e+00> : vector<8x128xf32>
    %99 = tpu.matmul %98, %0, %cst_69 {dimension_numbers = #tpu.dot_dimension_numbers<[1], [0], [0], [1], [0, 0, 1, 1], [], []>} : vector<8x512xbf16>, vector<512x128xbf16>, vector<8x128xf32> -> vector<8x128xf32>
    %100 = vector.broadcast %1 : vector<1x128xf32> to vector<8x128xf32>
    %101 = arith.addf %99, %100 : vector<8x128xf32>
    %cst_70 = arith.constant 0.000000e+00 : f32
    %102 = vector.broadcast %cst_70 : f32 to vector<8x128xf32>
    %103 = arith.maximumf %101, %102 : vector<8x128xf32>
    %104 = arith.truncf %103 : vector<8x128xf32> to vector<8x128xbf16>
    %c8_71 = arith.constant 8 : index
    %c0_72 = arith.constant 0 : index
    %c0_73 = arith.constant 0 : index
    %105 = vector.load %arg4[%c8_71, %c0_72, %c0_73] : memref<9x128x128xbf16, #tpu.memory_space<vmem>>, vector<1x128x128xbf16>
    %106 = vector.shape_cast %105 : vector<1x128x128xbf16> to vector<128x128xbf16>
    %cst_74 = arith.constant dense<0.000000e+00> : vector<8x128xf32>
    %107 = tpu.matmul %104, %106, %cst_74 {dimension_numbers = #tpu.dot_dimension_numbers<[1], [0], [0], [1], [0, 0, 1, 1], [], []>} : vector<8x128xbf16>, vector<128x128xbf16>, vector<8x128xf32> -> vector<8x128xf32>
    %108 = arith.addf %96, %107 : vector<8x128xf32>
    %c0_75 = arith.constant 0 : index
    %c0_76 = arith.constant 0 : index
    %109 = vector.load %arg5[%c0_75, %c0_76] : memref<1x128xf32, #tpu.memory_space<vmem>>, vector<1x128xf32>
    %110 = vector.broadcast %109 : vector<1x128xf32> to vector<8x128xf32>
    %111 = arith.addf %108, %110 : vector<8x128xf32>
    %cst_77 = arith.constant 0.000000e+00 : f32
    %112 = vector.broadcast %cst_77 : f32 to vector<8x128xf32>
    %113 = arith.maximumf %111, %112 : vector<8x128xf32>
    %114 = arith.truncf %113 : vector<8x128xf32> to vector<8x128xbf16>
    %c0_78 = arith.constant 0 : index
    %c0_79 = arith.constant 0 : index
    %115 = vector.load %arg6[%c0_78, %c0_79] : memref<128x512xbf16, #tpu.memory_space<vmem>>, vector<128x512xbf16>
    %cst_80 = arith.constant dense<0.000000e+00> : vector<8x512xf32>
    %116 = tpu.matmul %114, %115, %cst_80 {dimension_numbers = #tpu.dot_dimension_numbers<[1], [0], [0], [1], [0, 0, 1, 1], [], []>} : vector<8x128xbf16>, vector<128x512xbf16>, vector<8x512xf32> -> vector<8x512xf32>
    %c0_81 = arith.constant 0 : index
    %c0_82 = arith.constant 0 : index
    %117 = vector.load %arg7[%c0_81, %c0_82] : memref<1x512xf32, #tpu.memory_space<vmem>>, vector<1x512xf32>
    %118 = vector.broadcast %117 : vector<1x512xf32> to vector<8x512xf32>
    %119 = arith.addf %116, %118 : vector<8x512xf32>
    %cst_83 = arith.constant 0.000000e+00 : f32
    %120 = vector.broadcast %cst_83 : f32 to vector<8x512xf32>
    %121 = arith.maximumf %119, %120 : vector<8x512xf32>
    %122 = arith.truncf %121 : vector<8x512xf32> to vector<8x512xbf16>
    %c0_84 = arith.constant 0 : index
    %c0_85 = arith.constant 0 : index
    %123 = vector.load %arg8[%c0_84, %c0_85] : memref<512x128xbf16, #tpu.memory_space<vmem>>, vector<512x128xbf16>
    %cst_86 = arith.constant dense<0.000000e+00> : vector<8x128xf32>
    %124 = tpu.matmul %122, %123, %cst_86 {dimension_numbers = #tpu.dot_dimension_numbers<[1], [0], [0], [1], [0, 0, 1, 1], [], []>} : vector<8x512xbf16>, vector<512x128xbf16>, vector<8x128xf32> -> vector<8x128xf32>
    %c0_87 = arith.constant 0 : index
    %c0_88 = arith.constant 0 : index
    %125 = vector.load %arg9[%c0_87, %c0_88] : memref<1x128xf32, #tpu.memory_space<vmem>>, vector<1x128xf32>
    %126 = vector.broadcast %125 : vector<1x128xf32> to vector<8x128xf32>
    %127 = arith.addf %124, %126 : vector<8x128xf32>
    %c0_89 = arith.constant 0 : index
    %c0_90 = arith.constant 0 : index
    %128 = vector.load %arg10[%c0_89, %c0_90] : memref<8x128xf32, #tpu.memory_space<vmem>>, vector<8x128xf32>
    tpu.vector_store %arg10[%c0_89, %c0_90], %127 {strides = array<i32>} : memref<8x128xf32, #tpu.memory_space<vmem>>, vector<8x128xf32>,
    return
  }
  func.func @transform_0(%arg0: i32) -> (i32, i32, i32) {
    %c0_i32 = arith.constant 0 : i32
    %c0_i32_0 = arith.constant 0 : i32
    %c0_i32_1 = arith.constant 0 : i32
    return %c0_i32, %arg0, %c0_i32_0 : i32, i32, i32
  }
  func.func @transform_1(%arg0: i32) -> (i32, i32) {
    %c0_i32 = arith.constant 0 : i32
    %c0_i32_0 = arith.constant 0 : i32
    %c0_i32_1 = arith.constant 0 : i32
    return %c0_i32, %c0_i32_0 : i32, i32
  }
  func.func @transform_2(%arg0: i32) -> (i32, i32) {
    %c0_i32 = arith.constant 0 : i32
    %c0_i32_0 = arith.constant 0 : i32
    %c0_i32_1 = arith.constant 0 : i32
    return %c0_i32, %c0_i32_0 : i32, i32
  }
  func.func @transform_3(%arg0: i32) -> (i32, i32, i32) {
    %c0_i32 = arith.constant 0 : i32
    %c0_i32_0 = arith.constant 0 : i32
    %c0_i32_1 = arith.constant 0 : i32
    %c0_i32_2 = arith.constant 0 : i32
    return %c0_i32, %c0_i32_0, %c0_i32_1 : i32, i32, i32
  }
  func.func @transform_4(%arg0: i32) -> (i32, i32) {
    %c0_i32 = arith.constant 0 : i32
    %c0_i32_0 = arith.constant 0 : i32
    %c0_i32_1 = arith.constant 0 : i32
    return %c0_i32, %c0_i32_0 : i32, i32
  }
  func.func @transform_5(%arg0: i32) -> (i32, i32) {
    %c0_i32 = arith.constant 0 : i32
    %c0_i32_0 = arith.constant 0 : i32
    %c0_i32_1 = arith.constant 0 : i32
    return %c0_i32, %c0_i32_0 : i32, i32
  }
  func.func @transform_6(%arg0: i32) -> (i32, i32) {
    %c0_i32 = arith.constant 0 : i32
    %c0_i32_0 = arith.constant 0 : i32
    %c0_i32_1 = arith.constant 0 : i32
    return %c0_i32, %c0_i32_0 : i32, i32
  }
  func.func @transform_7(%arg0: i32) -> (i32, i32) {
    %c0_i32 = arith.constant 0 : i32
    %c0_i32_0 = arith.constant 0 : i32
    %c0_i32_1 = arith.constant 0 : i32
    return %c0_i32, %c0_i32_0 : i32, i32
  }
  func.func @transform_8(%arg0: i32) -> (i32, i32) {
    %c0_i32 = arith.constant 0 : i32
    %c0_i32_0 = arith.constant 0 : i32
    %c0_i32_1 = arith.constant 0 : i32
    return %c0_i32, %c0_i32_0 : i32, i32
  }
  func.func @transform_9(%arg0: i32) -> (i32, i32) {
    %c0_i32 = arith.constant 0 : i32
    %c0_i32_0 = arith.constant 0 : i32
    return %arg0, %c0_i32 : i32, i32
  }
}

</mosaic_0001>

<llo_original>
// kernel: deep_q_network_forward.2
$region0: #{deep_q_network_forward.2}
  #allocation0 [shape = 'u32[]', space=smem, size = 0x4, offset = 0x4, fixed_abs, tag = 'smem constant byte address 0x4 - core index']
  #allocation1 [shape = 'u32[144,128]{1,0:T(1,128)}', space=vmem, size = 0x12000, scoped, tag = 'internal scratch']
  %s0 = inlined_call_operand.vmem [shape: bf16[128,256], index: 0, kind: input, shape index: {}]
  %s1 = inlined_call_operand.vmem [shape: bf16[256,128], index: 1, kind: input, shape index: {}]
  %s2 = inlined_call_operand.vmem [shape: f32[1,128], index: 2, kind: input, shape index: {}]
  %s3 = inlined_call_operand.vmem [shape: bf16[128,128], index: 3, kind: output, shape index: {}]
  %s4 = sld [smem:[#allocation0]]
  $region45: #{deep_q_network_forward.2} parent=0
    _
  %s6 = ssub.s32 1, %s4
  %s7 = scalar_select 0, %s6, %s4
  loop: start=0, step=1, limit=4
  $region2: #{deep_q_network_forward.2} parent=0 // loop_pre_header
    _
  $region3: #{deep_q_network_forward.2} parent=0 // loop_header
    %s9 = sphi 0, %s13
    %p10 = scmp.ge.s32.totalorder %s9, 4
    %s19 = sphi 0, %s21
    %s22 = sphi 0, %s19
    %s23 = sphi 0, %s22
    %s39 = sphi 0, %s23
    %s43 = sphi 0, %s43
    %s45 = sphi 0, %s43
    %s46 = sphi 0, %s45
    %s60 = sphi 0, %s46
    %s64 = sphi 0, %s64
    %s66 = sphi 0, %s64
    %s67 = sphi 0, %s66
    %s81 = sphi 0, %s67
    %s87 = sphi 0, %s89
    %s90 = sphi 0, %s87
    %s91 = sphi 0, %s90
    %s107 = sphi 0, %s91
  $region4: #{deep_q_network_forward.2} parent=0 // loop_header_branch
    %12 = sbr.rel (%p10) target = $region8
  $region5: #{deep_q_network_forward.2} parent=0 // loop_body
    %s14 = ssub.s32 %s9, 1
    %s15 = ssub.s32 %s9, 2
    %s16 = sadd.s32 %s9, 1
    %s17 = ssub.s32 %s9, %s16
    %p18 = scmp.eq.s32.totalorder %s17, 0
    %s20 = sadd.s32 %s19, 1
    %s21 = scalar_select %p18, %s19, %s20
    %p24 = pneg %p18
    %p25 = scmp.eq.s32.totalorder %s9, 1
    %p26 = por %p24, %p25
    %p27 = scmp.ne.s32.totalorder %s19, %s22
    %p28 = scmp.eq.s32.totalorder %s9, 0
    %p29 = por %p27, %p28
    %p30 = scmp.ne.s32.totalorder %s19, %s22
    %p31 = scmp.eq.s32.totalorder %s14, 1
    %p32 = por %p30, %p31
    %p33 = scmp.ne.s32.totalorder %s22, %s23
    %p34 = scmp.eq.s32.totalorder %s14, 0
    %p35 = por %p33, %p34
    %p36 = scmp.ne.s32.totalorder %s22, %s23
    %p37 = scmp.eq.s32.totalorder %s15, 1
    %p38 = por %p36, %p37
    %p40 = scmp.ne.s32.totalorder %s23, %s39
    %p41 = scmp.eq.s32.totalorder %s15, 0
    %p42 = por %p40, %p41
    %s44 = sadd.s32 %s43, 1
    %p47 = scmp.eq.s32.totalorder %s9, 1
    %p48 = scmp.ne.s32.totalorder %s43, %s45
    %p49 = scmp.eq.s32.totalorder %s9, 0
    %p50 = por %p48, %p49
    %p51 = scmp.ne.s32.totalorder %s43, %s45
    %p52 = scmp.eq.s32.totalorder %s14, 1
    %p53 = por %p51, %p52
    %p54 = scmp.ne.s32.totalorder %s45, %s46
    %p55 = scmp.eq.s32.totalorder %s14, 0
    %p56 = por %p54, %p55
    %p57 = scmp.ne.s32.totalorder %s45, %s46
    %p58 = scmp.eq.s32.totalorder %s15, 1
    %p59 = por %p57, %p58
    %p61 = scmp.ne.s32.totalorder %s46, %s60
    %p62 = scmp.eq.s32.totalorder %s15, 0
    %p63 = por %p61, %p62
    %s65 = sadd.s32 %s64, 1
    %p68 = scmp.eq.s32.totalorder %s9, 1
    %p69 = scmp.ne.s32.totalorder %s64, %s66
    %p70 = scmp.eq.s32.totalorder %s9, 0
    %p71 = por %p69, %p70
    %p72 = scmp.ne.s32.totalorder %s64, %s66
    %p73 = scmp.eq.s32.totalorder %s14, 1
    %p74 = por %p72, %p73
    %p75 = scmp.ne.s32.totalorder %s66, %s67
    %p76 = scmp.eq.s32.totalorder %s14, 0
    %p77 = por %p75, %p76
    %p78 = scmp.ne.s32.totalorder %s66, %s67
    %p79 = scmp.eq.s32.totalorder %s15, 1
    %p80 = por %p78, %p79
    %p82 = scmp.ne.s32.totalorder %s67, %s81
    %p83 = scmp.eq.s32.totalorder %s15, 0
    %p84 = por %p82, %p83
    %s85 = ssub.s32 %s9, %s16
    %p86 = scmp.eq.s32.totalorder %s85, 0
    %s88 = sadd.s32 %s87, 1
    %s89 = scalar_select %p86, %s87, %s88
    %p92 = pneg %p86
    %p93 = scmp.eq.s32.totalorder %s9, 1
    %p94 = por %p92, %p93
    %p95 = scmp.ne.s32.totalorder %s87, %s90
    %p96 = scmp.eq.s32.totalorder %s9, 0
    %p97 = por %p95, %p96
    %p98 = scmp.ne.s32.totalorder %s87, %s90
    %p99 = scmp.eq.s32.totalorder %s14, 1
    %p100 = por %p98, %p99
    %p101 = scmp.ne.s32.totalorder %s90, %s91
    %p102 = scmp.eq.s32.totalorder %s14, 0
    %p103 = por %p101, %p102
    %p104 = scmp.ne.s32.totalorder %s90, %s91
    %p105 = scmp.eq.s32.totalorder %s15, 1
    %p106 = por %p104, %p105
    %p108 = scmp.ne.s32.totalorder %s91, %s107
    %p109 = scmp.eq.s32.totalorder %s15, 0
    %p110 = por %p108, %p109
    %p111 = scmp.le.s32.totalorder 1, %s9
    %p112 = scmp.lt.s32.totalorder %s9, 3
    %p113 = pnand %p111, %p112
    %p114 = pneg %p113
    // Predicated region
    $region9: #{deep_q_network_forward.2} parent=5 // pred_check
      _
    $region10: #{deep_q_network_forward.2} parent=5 // pred_check_branch
      %116 = sbr.rel (%p113) target = $region12
    $region11: #{deep_q_network_forward.2} parent=5 // pred_region
      %s117 = ssub.s32 %s9, 1
      // Predicated region
      $region13: #{deep_q_network_forward.2} parent=11 // pred_check
        %p118 = pneg %p56
      $region14: #{deep_q_network_forward.2} parent=11 // pred_check_branch
        %120 = sbr.rel (%p118) target = $region16
      $region15: #{deep_q_network_forward.2} parent=11 // pred_region
        _
      $region16: #{deep_q_network_forward.2} parent=11 // pred_fallthru
        _
      // Predicated region
      $region17: #{deep_q_network_forward.2} parent=11 // pred_check
        %p121 = pneg %p77
      $region18: #{deep_q_network_forward.2} parent=11 // pred_check_branch
        %123 = sbr.rel (%p121) target = $region20
      $region19: #{deep_q_network_forward.2} parent=11 // pred_region
        _
      $region20: #{deep_q_network_forward.2} parent=11 // pred_fallthru
        _
    $region12: #{deep_q_network_forward.2} parent=5 // pred_fallthru
      _
    %p124 = scmp.lt.s32.totalorder %s9, 2
    // Predicated region
    $region21: #{deep_q_network_forward.2} parent=5 // pred_check
      %p125 = pneg %p124
    $region22: #{deep_q_network_forward.2} parent=5 // pred_check_branch
      %127 = sbr.rel (%p125) target = $region24
    $region23: #{deep_q_network_forward.2} parent=5 // pred_region
      // Predicated region
      $region25: #{deep_q_network_forward.2} parent=23 // pred_check
        %p128 = pneg %p29
      $region26: #{deep_q_network_forward.2} parent=23 // pred_check_branch
        %130 = sbr.rel (%p128) target = $region28
      $region27: #{deep_q_network_forward.2} parent=23 // pred_region
        %s131 = smul.u32 8, %s9
        %p132 = scmp.lt.s32.totalorder %s131, 15
        %s133 = scalar_select %p132, %s131, 15
        %s134 = smul.addr %s133, 2
        %s135 = smul.addr %s134, 4
        %s136 = scalar_lea.vmem %s0, %s135
        %s137 = smul.u32 8, %s9
      $region28: #{deep_q_network_forward.2} parent=23 // pred_fallthru
        _
    $region24: #{deep_q_network_forward.2} parent=5 // pred_fallthru
      _
    %p138 = scmp.le.s32.totalorder 1, %s9
    %p139 = scmp.lt.s32.totalorder %s9, 3
    %p140 = pnand %p138, %p139
    %p141 = pneg %p140
    // Predicated region
    $region29: #{deep_q_network_forward.2} parent=5 // pred_check
      _
    $region30: #{deep_q_network_forward.2} parent=5 // pred_check_branch
      %143 = sbr.rel (%p140) target = $region32
    $region31: #{deep_q_network_forward.2} parent=5 // pred_region
      %s144 = ssub.s32 %s9, 1
      %s145 = smul.u32 8, %s14
      %p146 = scmp.lt.s32.totalorder %s145, 15
      %s147 = scalar_select %p146, %s145, 15
      %s148 = smul.addr %s147, 2
      %s149 = smul.addr %s148, 4
      %s150 = scalar_lea.vmem %s0, %s149
      %p151 = pneg %p35
      %p152 = pneg %p32
      %p153 = pneg %p56
      %p154 = pneg %p53
      %p155 = pneg %p77
      %p156 = pneg %p74
      %p157 = pneg %p103
      %p158 = pneg %p100
      %s159 = smul.u32 8, %s14
      %p160 = scmp.lt.s32.totalorder %s159, 15
      %s161 = scalar_select %p160, %s159, 15
      %s162 = smul.addr %s161, 4
      %s163 = scalar_lea.vmem %s3, %s162
      %s164 = smul.u32 8, %s14
      %p165 = scmp.lt.s32.totalorder %s164, 15
      %s166 = scalar_select %p165, %s164, 15
      %s167 = smul.addr %s166, 2
      %s168 = smul.addr %s167, 4
      %s169 = scalar_lea.vmem %s0, %s168
      %s170 = smul.u32 8, %s14
      %s171 = smul.u32 8, %s14
      %p172 = scmp.lt.s32.totalorder %s171, 15
      %s173 = scalar_select %p172, %s171, 15
      %s174 = smul.addr %s173, 4
      %s175 = scalar_lea.vmem %s3, %s174
      %s176 = smul.u32 8, %s14
      %v178 = vld [vmem:[%s169] sm:$0xff]
      %v179 = vld [vmem:[%s169 + $0x8] sm:$0xff]
      %v180 = vld [vmem:[%s169 + $0x10] sm:$0xff]
      %v181 = vld [vmem:[%s169 + $0x18] sm:$0xff]
      %v182 = vld [vmem:[%s169 + $0x20] sm:$0xff]
      %v183 = vld [vmem:[%s169 + $0x28] sm:$0xff]
      %v184 = vld [vmem:[%s169 + $0x30] sm:$0xff]
      %v185 = vld [vmem:[%s169 + $0x38] sm:$0xff]
      %v186 = vld [vmem:[%s1] sm:$0xf]
      %v187 = vld [vmem:[%s1 + $0x4] sm:$0xf]
      %v188 = vld [vmem:[%s1 + $0x8] sm:$0xf]
      %v189 = vld [vmem:[%s1 + $0xc] sm:$0xf]
      %v190 = vld [vmem:[%s1 + $0x10] sm:$0xf]
      %v191 = vld [vmem:[%s1 + $0x14] sm:$0xf]
      %v192 = vld [vmem:[%s1 + $0x18] sm:$0xf]
      %v193 = vld [vmem:[%s1 + $0x1c] sm:$0xf]
      %v194 = vld [vmem:[%s1 + $0x20] sm:$0xf]
      %v195 = vld [vmem:[%s1 + $0x24] sm:$0xf]
      %v196 = vld [vmem:[%s1 + $0x28] sm:$0xf]
      %v197 = vld [vmem:[%s1 + $0x2c] sm:$0xf]
      %v198 = vld [vmem:[%s1 + $0x30] sm:$0xf]
      %v199 = vld [vmem:[%s1 + $0x34] sm:$0xf]
      %v200 = vld [vmem:[%s1 + $0x38] sm:$0xf]
      %v201 = vld [vmem:[%s1 + $0x3c] sm:$0xf]
      %v202 = vld [vmem:[%s1 + $0x40] sm:$0xf]
      %v203 = vld [vmem:[%s1 + $0x44] sm:$0xf]
      %v204 = vld [vmem:[%s1 + $0x48] sm:$0xf]
      %v205 = vld [vmem:[%s1 + $0x4c] sm:$0xf]
      %v206 = vld [vmem:[%s1 + $0x50] sm:$0xf]
      %v207 = vld [vmem:[%s1 + $0x54] sm:$0xf]
      %v208 = vld [vmem:[%s1 + $0x58] sm:$0xf]
      %v209 = vld [vmem:[%s1 + $0x5c] sm:$0xf]
      %v210 = vld [vmem:[%s1 + $0x60] sm:$0xf]
      %v211 = vld [vmem:[%s1 + $0x64] sm:$0xf]
      %v212 = vld [vmem:[%s1 + $0x68] sm:$0xf]
      %v213 = vld [vmem:[%s1 + $0x6c] sm:$0xf]
      %v214 = vld [vmem:[%s1 + $0x70] sm:$0xf]
      %v215 = vld [vmem:[%s1 + $0x74] sm:$0xf]
      %v216 = vld [vmem:[%s1 + $0x78] sm:$0xf]
      %v217 = vld [vmem:[%s1 + $0x7c] sm:$0xf]
      %v218 = vld [vmem:[%s2] sm:$0x1]
      %v220 = vlaneseq
      %v221 = vshrl.u32 %v220, 7
      %v222 = vsub.s32 0, %v221
      %v223 = vrot.slane %v218, %v222
      %v233 = vunpack.c.l.b16 %v178
      %v234 = vunpack.c.h.b16 %v178
      %v235 = vunpack.c.l.b16 %v179
      %v236 = vunpack.c.h.b16 %v179
      %v237 = vunpack.c.l.b16 %v180
      %v238 = vunpack.c.h.b16 %v180
      %v239 = vunpack.c.l.b16 %v181
      %v240 = vunpack.c.h.b16 %v181
      %v241 = vunpack.c.l.b16 %v182
      %v242 = vunpack.c.h.b16 %v182
      %v243 = vunpack.c.l.b16 %v183
      %v244 = vunpack.c.h.b16 %v183
      %v245 = vunpack.c.l.b16 %v184
      %v246 = vunpack.c.h.b16 %v184
      %v247 = vunpack.c.l.b16 %v185
      %v248 = vunpack.c.h.b16 %v185
      %v249 = vpack.c.b16 %v235, %v233
      %v250 = vpack.c.b16 %v236, %v234
      %v251 = vpack.c.b16 %v239, %v237
      %v252 = vpack.c.b16 %v240, %v238
      %v253 = vpack.c.b16 %v243, %v241
      %v254 = vpack.c.b16 %v244, %v242
      %v255 = vpack.c.b16 %v247, %v245
      %v256 = vpack.c.b16 %v248, %v246
      %v297 = vunpack.c.l.b16 %v186
      %v298 = vunpack.c.l.b16 %v187
      %v299 = vunpack.c.l.b16 %v188
      %v300 = vunpack.c.l.b16 %v189
      %v301 = vunpack.c.l.b16 %v190
      %v302 = vunpack.c.l.b16 %v191
      %v303 = vunpack.c.l.b16 %v192
      %v304 = vunpack.c.l.b16 %v193
      %v305 = vunpack.c.l.b16 %v194
      %v306 = vunpack.c.l.b16 %v195
      %v307 = vunpack.c.l.b16 %v196
      %v308 = vunpack.c.l.b16 %v197
      %v309 = vunpack.c.l.b16 %v198
      %v310 = vunpack.c.l.b16 %v199
      %v311 = vunpack.c.l.b16 %v200
      %v312 = vunpack.c.l.b16 %v201
      %v313 = vunpack.c.l.b16 %v202
      %v314 = vunpack.c.l.b16 %v203
      %v315 = vunpack.c.l.b16 %v204
      %v316 = vunpack.c.l.b16 %v205
      %v317 = vunpack.c.l.b16 %v206
      %v318 = vunpack.c.l.b16 %v207
      %v319 = vunpack.c.l.b16 %v208
      %v320 = vunpack.c.l.b16 %v209
      %v321 = vunpack.c.l.b16 %v210
      %v322 = vunpack.c.l.b16 %v211
      %v323 = vunpack.c.l.b16 %v212
      %v324 = vunpack.c.l.b16 %v213
      %v325 = vunpack.c.l.b16 %v214
      %v326 = vunpack.c.l.b16 %v215
      %v327 = vunpack.c.l.b16 %v216
      %v328 = vunpack.c.l.b16 %v217
      %v329 = vpack.c.b16 %v298, %v297
      %v330 = vpack.c.b16 %v300, %v299
      %v331 = vpack.c.b16 %v302, %v301
      %v332 = vpack.c.b16 %v304, %v303
      %v333 = vpack.c.b16 %v306, %v305
      %v334 = vpack.c.b16 %v308, %v307
      %v335 = vpack.c.b16 %v310, %v309
      %v336 = vpack.c.b16 %v312, %v311
      %v337 = vpack.c.b16 %v314, %v313
      %v338 = vpack.c.b16 %v316, %v315
      %v339 = vpack.c.b16 %v318, %v317
      %v340 = vpack.c.b16 %v320, %v319
      %v341 = vpack.c.b16 %v322, %v321
      %v342 = vpack.c.b16 %v324, %v323
      %v343 = vpack.c.b16 %v326, %v325
      %v344 = vpack.c.b16 %v328, %v327
      %361 = vmatprep.subr.bf16.mxu0 0
      %362 = vmatpush1.bf16.msra.mxu0 %v329
      %363 = vmatprep.subr.bf16.mxu0 0
      %364 = vmatpush1.bf16.msra.mxu0 %v330
      %365 = vmatprep.subr.bf16.mxu0 0
      %366 = vmatpush1.bf16.msra.mxu0 %v331
      %367 = vmatprep.subr.bf16.mxu0 0
      %368 = vmatpush1.bf16.msra.mxu0 %v332
      %369 = vmatprep.subr.bf16.mxu0 0
      %370 = vmatpush1.bf16.msra.mxu0 %v333
      %371 = vmatprep.subr.bf16.mxu0 0
      %372 = vmatpush1.bf16.msra.mxu0 %v334
      %373 = vmatprep.subr.bf16.mxu0 0
      %374 = vmatpush1.bf16.msra.mxu0 %v335
      %375 = vmatprep.subr.bf16.mxu0 0
      %376 = vmatpush1.bf16.msra.mxu0 %v336
      %377 = vmatprep.subr.bf16.mxu0 0
      %378 = vmatpush1.bf16.msra.mxu0 %v337
      %379 = vmatprep.subr.bf16.mxu0 0
      %380 = vmatpush1.bf16.msra.mxu0 %v338
      %381 = vmatprep.subr.bf16.mxu0 0
      %382 = vmatpush1.bf16.msra.mxu0 %v339
      %383 = vmatprep.subr.bf16.mxu0 0
      %384 = vmatpush1.bf16.msra.mxu0 %v340
      %385 = vmatprep.subr.bf16.mxu0 0
      %386 = vmatpush1.bf16.msra.mxu0 %v341
      %387 = vmatprep.subr.bf16.mxu0 0
      %388 = vmatpush1.bf16.msra.mxu0 %v342
      %389 = vmatprep.subr.bf16.mxu0 0
      %390 = vmatpush1.bf16.msra.mxu0 %v343
      %391 = vmatprep.subr.bf16.mxu0 0
      %392 = vmatpush1.bf16.msra.mxu0 %v344
      %393 = vmatprep.mubr.bf16.mxu0 %v250
      %394 = vmatmul.mubr.bf16.gmra.mrb[0].mxu0 %v249
      %v395 = vpop.f32.mrb[0].mxu0
      %v396 = vadd.f32 %v223, %v395
      %v397 = vpop.f32.mrb[0].mxu0
      %v398 = vpop.f32.mrb[0].mxu0
      %v399 = vadd.f32 %v223, %v398
      %v400 = vpop.f32.mrb[0].mxu0
      %401 = vmatprep.mubr.bf16.mxu0 %v252
      %402 = vmatmul.mubr.bf16.gmra.mrb[0].mxu0 %v251
      %v403 = vpop.f32.mrb[0].mxu0
      %v404 = vadd.f32 %v223, %v403
      %v405 = vpop.f32.mrb[0].mxu0
      %v406 = vpop.f32.mrb[0].mxu0
      %v407 = vadd.f32 %v223, %v406
      %v408 = vpop.f32.mrb[0].mxu0
      %409 = vmatprep.mubr.bf16.mxu0 %v254
      %410 = vmatmul.mubr.bf16.gmra.mrb[0].mxu0 %v253
      %v411 = vpop.f32.mrb[0].mxu0
      %v412 = vadd.f32 %v223, %v411
      %v413 = vpop.f32.mrb[0].mxu0
      %v414 = vpop.f32.mrb[0].mxu0
      %v415 = vadd.f32 %v223, %v414
      %v416 = vpop.f32.mrb[0].mxu0
      %417 = vmatprep.mubr.bf16.mxu0 %v256
      %418 = vmatmul.mubr.bf16.gmra.mrb[0].mxu0 %v255
      %v419 = vpop.f32.mrb[0].mxu0
      %v420 = vadd.f32 %v223, %v419
      %v421 = vpop.f32.mrb[0].mxu0
      %v422 = vpop.f32.mrb[0].mxu0
      %v423 = vadd.f32 %v223, %v422
      %v424 = vpop.f32.mrb[0].mxu0
      %425 = vdwg.mxu0
      %v426 = vmax.f32 %v396, 0.0
      %v427 = vmax.f32 %v399, 0.0
      %v428 = vmax.f32 %v404, 0.0
      %v429 = vmax.f32 %v407, 0.0
      %v430 = vmax.f32 %v412, 0.0
      %v431 = vmax.f32 %v415, 0.0
      %v432 = vmax.f32 %v420, 0.0
      %v433 = vmax.f32 %v423, 0.0
      %v434 = vpack.c.bf16 %v427, %v426
      %v435 = vpack.c.bf16 %v429, %v428
      %v436 = vpack.c.bf16 %v431, %v430
      %v437 = vpack.c.bf16 %v433, %v432
      %v442 = vunpack.c.l.b16 %v434
      %v443 = vunpack.c.h.b16 %v434
      %v444 = vunpack.c.l.b16 %v435
      %v445 = vunpack.c.h.b16 %v435
      %v446 = vunpack.c.l.b16 %v436
      %v447 = vunpack.c.h.b16 %v436
      %v448 = vunpack.c.l.b16 %v437
      %v449 = vunpack.c.h.b16 %v437
      %v450 = vpack.c.b16 %v442, %v442
      %v451 = vpack.c.b16 %v443, %v443
      %v452 = vpack.c.b16 %v444, %v444
      %v453 = vpack.c.b16 %v445, %v445
      %v454 = vpack.c.b16 %v446, %v446
      %v455 = vpack.c.b16 %v447, %v447
      %v456 = vpack.c.b16 %v448, %v448
      %v457 = vpack.c.b16 %v449, %v449
      %466 = vst [vmem:[%s175] sm:$0xf] %v450
      %467 = vst [vmem:[%s175 + $0x4] sm:$0xf] %v451
      %468 = vst [vmem:[%s175 + $0x8] sm:$0xf] %v452
      %469 = vst [vmem:[%s175 + $0xc] sm:$0xf] %v453
      %470 = vst [vmem:[%s175 + $0x10] sm:$0xf] %v454
      %471 = vst [vmem:[%s175 + $0x14] sm:$0xf] %v455
      %472 = vst [vmem:[%s175 + $0x18] sm:$0xf] %v456
      %473 = vst [vmem:[%s175 + $0x1c] sm:$0xf] %v457
      %s474 = smul.u32 8, %s14
      %p475 = scmp.lt.s32.totalorder %s474, 15
      %s476 = scalar_select %p475, %s474, 15
      %s477 = smul.addr %s476, 4
      %s478 = scalar_lea.vmem %s3, %s477
      // Predicated region
      $region33: #{deep_q_network_forward.2} parent=31 // pred_check
        %p479 = pneg %p100
      $region34: #{deep_q_network_forward.2} parent=31 // pred_check_branch
        %481 = sbr.rel (%p479) target = $region36
      $region35: #{deep_q_network_forward.2} parent=31 // pred_region
        %s482 = smul.u32 8, %s14
      $region36: #{deep_q_network_forward.2} parent=31 // pred_fallthru
        _
    $region32: #{deep_q_network_forward.2} parent=5 // pred_fallthru
      _
    %p483 = scmp.le.s32.totalorder 2, %s9
    // Predicated region
    $region37: #{deep_q_network_forward.2} parent=5 // pred_check
      %p484 = pneg %p483
    $region38: #{deep_q_network_forward.2} parent=5 // pred_check_branch
      %486 = sbr.rel (%p484) target = $region40
    $region39: #{deep_q_network_forward.2} parent=5 // pred_region
      %s487 = ssub.s32 %s9, 2
      // Predicated region
      $region41: #{deep_q_network_forward.2} parent=39 // pred_check
        %p488 = pneg %p106
      $region42: #{deep_q_network_forward.2} parent=39 // pred_check_branch
        %490 = sbr.rel (%p488) target = $region44
      $region43: #{deep_q_network_forward.2} parent=39 // pred_region
        %s491 = smul.u32 8, %s15
        %p492 = scmp.lt.s32.totalorder %s491, 15
        %s493 = scalar_select %p492, %s491, 15
        %s494 = smul.addr %s493, 4
        %s495 = scalar_lea.vmem %s3, %s494
      $region44: #{deep_q_network_forward.2} parent=39 // pred_fallthru
        _
    $region40: #{deep_q_network_forward.2} parent=5 // pred_fallthru
      _
  $region6: #{deep_q_network_forward.2} parent=0 // loop_footer
    %s13 = sadd.s32 1, %s9
  $region7: #{deep_q_network_forward.2} parent=0 // loop_footer_branch
    %8 = sbr.rel target = $region3
  $region8: #{deep_q_network_forward.2} parent=0 // loop_exit
    _

// kernel: deep_q_network_forward.3
$region0: #{deep_q_network_forward.3}
  #allocation0 [shape = 'u32[]', space=smem, size = 0x4, offset = 0x4, fixed_abs, tag = 'smem constant byte address 0x4 - core index']
  #allocation1 [shape = 'u32[144,128]{1,0:T(1,128)}', space=vmem, size = 0x12000, scoped, tag = 'internal scratch']
  %s0 = inlined_call_operand.vmem [shape: bf16[9,8,512], index: 0, kind: input, shape index: {}]
  %s1 = inlined_call_operand.vmem [shape: bf16[512,128], index: 1, kind: input, shape index: {}]
  %s2 = inlined_call_operand.vmem [shape: f32[1,128], index: 2, kind: input, shape index: {}]
  %s3 = inlined_call_operand.vmem [shape: bf16[9,128,128], index: 3, kind: input, shape index: {}]
  %s4 = inlined_call_operand.vmem [shape: f32[1,128], index: 4, kind: input, shape index: {}]
  %s5 = inlined_call_operand.vmem [shape: bf16[128,512], index: 5, kind: input, shape index: {}]
  %s6 = inlined_call_operand.vmem [shape: f32[1,512], index: 6, kind: input, shape index: {}]
  %s7 = inlined_call_operand.vmem [shape: bf16[512,128], index: 7, kind: input, shape index: {}]
  %s8 = inlined_call_operand.vmem [shape: f32[1,128], index: 8, kind: input, shape index: {}]
  %s9 = inlined_call_operand.vmem [shape: f32[8,128], index: 9, kind: output, shape index: {}]
  %s10 = sld [smem:[#allocation0]]
  $region46: #{deep_q_network_forward.3} parent=0
    _
  %s12 = ssub.s32 1, %s10
  %s13 = scalar_select 0, %s12, %s10
  // Predicated region
  $region2: #{deep_q_network_forward.3} parent=0 // pred_check
    _
  $region3: #{deep_q_network_forward.3} parent=0 // pred_check_branch
    %15 = sbr.rel (0) target = $region5
  $region4: #{deep_q_network_forward.3} parent=0 // pred_region
    _
  $region5: #{deep_q_network_forward.3} parent=0 // pred_fallthru
    _
  // Predicated region
  $region6: #{deep_q_network_forward.3} parent=0 // pred_check
    _
  $region7: #{deep_q_network_forward.3} parent=0 // pred_check_branch
    %17 = sbr.rel (0) target = $region9
  $region8: #{deep_q_network_forward.3} parent=0 // pred_region
    _
  $region9: #{deep_q_network_forward.3} parent=0 // pred_fallthru
    _
  // Predicated region
  $region10: #{deep_q_network_forward.3} parent=0 // pred_check
    _
  $region11: #{deep_q_network_forward.3} parent=0 // pred_check_branch
    %19 = sbr.rel (0) target = $region13
  $region12: #{deep_q_network_forward.3} parent=0 // pred_region
    _
  $region13: #{deep_q_network_forward.3} parent=0 // pred_fallthru
    _
  // Predicated region
  $region14: #{deep_q_network_forward.3} parent=0 // pred_check
    _
  $region15: #{deep_q_network_forward.3} parent=0 // pred_check_branch
    %21 = sbr.rel (0) target = $region17
  $region16: #{deep_q_network_forward.3} parent=0 // pred_region
    _
  $region17: #{deep_q_network_forward.3} parent=0 // pred_fallthru
    _
  // Predicated region
  $region18: #{deep_q_network_forward.3} parent=0 // pred_check
    _
  $region19: #{deep_q_network_forward.3} parent=0 // pred_check_branch
    %23 = sbr.rel (0) target = $region21
  $region20: #{deep_q_network_forward.3} parent=0 // pred_region
    _
  $region21: #{deep_q_network_forward.3} parent=0 // pred_fallthru
    _
  // Predicated region
  $region22: #{deep_q_network_forward.3} parent=0 // pred_check
    _
  $region23: #{deep_q_network_forward.3} parent=0 // pred_check_branch
    %25 = sbr.rel (0) target = $region25
  $region24: #{deep_q_network_forward.3} parent=0 // pred_region
    _
  $region25: #{deep_q_network_forward.3} parent=0 // pred_fallthru
    _
  // Predicated region
  $region26: #{deep_q_network_forward.3} parent=0 // pred_check
    _
  $region27: #{deep_q_network_forward.3} parent=0 // pred_check_branch
    %27 = sbr.rel (0) target = $region29
  $region28: #{deep_q_network_forward.3} parent=0 // pred_region
    _
  $region29: #{deep_q_network_forward.3} parent=0 // pred_fallthru
    _
  // Predicated region
  $region30: #{deep_q_network_forward.3} parent=0 // pred_check
    _
  $region31: #{deep_q_network_forward.3} parent=0 // pred_check_branch
    %29 = sbr.rel (0) target = $region33
  $region32: #{deep_q_network_forward.3} parent=0 // pred_region
    _
  $region33: #{deep_q_network_forward.3} parent=0 // pred_fallthru
    _
  // Predicated region
  $region34: #{deep_q_network_forward.3} parent=0 // pred_check
    _
  $region35: #{deep_q_network_forward.3} parent=0 // pred_check_branch
    %31 = sbr.rel (0) target = $region37
  $region36: #{deep_q_network_forward.3} parent=0 // pred_region
    _
  $region37: #{deep_q_network_forward.3} parent=0 // pred_fallthru
    _
  %v33 = vld [vmem:[%s1] sm:$0xf]
  %v34 = vld [vmem:[%s1 + $0x4] sm:$0xf]
  %v35 = vld [vmem:[%s1 + $0x8] sm:$0xf]
  %v36 = vld [vmem:[%s1 + $0xc] sm:$0xf]
  %v37 = vld [vmem:[%s1 + $0x10] sm:$0xf]
  %v38 = vld [vmem:[%s1 + $0x14] sm:$0xf]
  %v39 = vld [vmem:[%s1 + $0x18] sm:$0xf]
  %v40 = vld [vmem:[%s1 + $0x1c] sm:$0xf]
  %v41 = vld [vmem:[%s1 + $0x20] sm:$0xf]
  %v42 = vld [vmem:[%s1 + $0x24] sm:$0xf]
  %v43 = vld [vmem:[%s1 + $0x28] sm:$0xf]
  %v44 = vld [vmem:[%s1 + $0x2c] sm:$0xf]
  %v45 = vld [vmem:[%s1 + $0x30] sm:$0xf]
  %v46 = vld [vmem:[%s1 + $0x34] sm:$0xf]
  %v47 = vld [vmem:[%s1 + $0x38] sm:$0xf]
  %v48 = vld [vmem:[%s1 + $0x3c] sm:$0xf]
  %v49 = vld [vmem:[%s1 + $0x40] sm:$0xf]
  %v50 = vld [vmem:[%s1 + $0x44] sm:$0xf]
  %v51 = vld [vmem:[%s1 + $0x48] sm:$0xf]
  %v52 = vld [vmem:[%s1 + $0x4c] sm:$0xf]
  %v53 = vld [vmem:[%s1 + $0x50] sm:$0xf]
  %v54 = vld [vmem:[%s1 + $0x54] sm:$0xf]
  %v55 = vld [vmem:[%s1 + $0x58] sm:$0xf]
  %v56 = vld [vmem:[%s1 + $0x5c] sm:$0xf]
  %v57 = vld [vmem:[%s1 + $0x60] sm:$0xf]
  %v58 = vld [vmem:[%s1 + $0x64] sm:$0xf]
  %v59 = vld [vmem:[%s1 + $0x68] sm:$0xf]
  %v60 = vld [vmem:[%s1 + $0x6c] sm:$0xf]
  %v61 = vld [vmem:[%s1 + $0x70] sm:$0xf]
  %v62 = vld [vmem:[%s1 + $0x74] sm:$0xf]
  %v63 = vld [vmem:[%s1 + $0x78] sm:$0xf]
  %v64 = vld [vmem:[%s1 + $0x7c] sm:$0xf]
  %v65 = vld [vmem:[%s1 + $0x80] sm:$0xf]
  %v66 = vld [vmem:[%s1 + $0x84] sm:$0xf]
  %v67 = vld [vmem:[%s1 + $0x88] sm:$0xf]
  %v68 = vld [vmem:[%s1 + $0x8c] sm:$0xf]
  %v69 = vld [vmem:[%s1 + $0x90] sm:$0xf]
  %v70 = vld [vmem:[%s1 + $0x94] sm:$0xf]
  %v71 = vld [vmem:[%s1 + $0x98] sm:$0xf]
  %v72 = vld [vmem:[%s1 + $0x9c] sm:$0xf]
  %v73 = vld [vmem:[%s1 + $0xa0] sm:$0xf]
  %v74 = vld [vmem:[%s1 + $0xa4] sm:$0xf]
  %v75 = vld [vmem:[%s1 + $0xa8] sm:$0xf]
  %v76 = vld [vmem:[%s1 + $0xac] sm:$0xf]
  %v77 = vld [vmem:[%s1 + $0xb0] sm:$0xf]
  %v78 = vld [vmem:[%s1 + $0xb4] sm:$0xf]
  %v79 = vld [vmem:[%s1 + $0xb8] sm:$0xf]
  %v80 = vld [vmem:[%s1 + $0xbc] sm:$0xf]
  %v81 = vld [vmem:[%s1 + $0xc0] sm:$0xf]
  %v82 = vld [vmem:[%s1 + $0xc4] sm:$0xf]
  %v83 = vld [vmem:[%s1 + $0xc8] sm:$0xf]
  %v84 = vld [vmem:[%s1 + $0xcc] sm:$0xf]
  %v85 = vld [vmem:[%s1 + $0xd0] sm:$0xf]
  %v86 = vld [vmem:[%s1 + $0xd4] sm:$0xf]
  %v87 = vld [vmem:[%s1 + $0xd8] sm:$0xf]
  %v88 = vld [vmem:[%s1 + $0xdc] sm:$0xf]
  %v89 = vld [vmem:[%s1 + $0xe0] sm:$0xf]
  %v90 = vld [vmem:[%s1 + $0xe4] sm:$0xf]
  %v91 = vld [vmem:[%s1 + $0xe8] sm:$0xf]
  %v92 = vld [vmem:[%s1 + $0xec] sm:$0xf]
  %v93 = vld [vmem:[%s1 + $0xf0] sm:$0xf]
  %v94 = vld [vmem:[%s1 + $0xf4] sm:$0xf]
  %v95 = vld [vmem:[%s1 + $0xf8] sm:$0xf]
  %v96 = vld [vmem:[%s1 + $0xfc] sm:$0xf]
  %v97 = vld [vmem:[%s2] sm:$0x1]
  %v98 = vld [vmem:[%s0] sm:$0xff]
  %v99 = vld [vmem:[%s0 + $0x8] sm:$0xff]
  %v101 = vlaneseq
  %v102 = vshrl.u32 %v101, 7
  %v103 = vsub.s32 0, %v102
  %v104 = vrot.slane %v97, %v103
  %v108 = vunpack.c.l.b16 %v98
  %v109 = vunpack.c.h.b16 %v98
  %v110 = vunpack.c.l.b16 %v99
  %v111 = vunpack.c.h.b16 %v99
  %v112 = vpack.c.b16 %v108, %v108
  %v113 = vpack.c.b16 %v109, %v109
  %v114 = vpack.c.b16 %v110, %v110
  %v115 = vpack.c.b16 %v111, %v111
  %v184 = vunpack.c.l.b16 %v33
  %v185 = vunpack.c.l.b16 %v34
  %v186 = vunpack.c.l.b16 %v35
  %v187 = vunpack.c.l.b16 %v36
  %v188 = vunpack.c.l.b16 %v37
  %v189 = vunpack.c.l.b16 %v38
  %v190 = vunpack.c.l.b16 %v39
  %v191 = vunpack.c.l.b16 %v40
  %v192 = vunpack.c.l.b16 %v41
  %v193 = vunpack.c.l.b16 %v42
  %v194 = vunpack.c.l.b16 %v43
  %v195 = vunpack.c.l.b16 %v44
  %v196 = vunpack.c.l.b16 %v45
  %v197 = vunpack.c.l.b16 %v46
  %v198 = vunpack.c.l.b16 %v47
  %v199 = vunpack.c.l.b16 %v48
  %v200 = vunpack.c.l.b16 %v49
  %v201 = vunpack.c.l.b16 %v50
  %v202 = vunpack.c.l.b16 %v51
  %v203 = vunpack.c.l.b16 %v52
  %v204 = vunpack.c.l.b16 %v53
  %v205 = vunpack.c.l.b16 %v54
  %v206 = vunpack.c.l.b16 %v55
  %v207 = vunpack.c.l.b16 %v56
  %v208 = vunpack.c.l.b16 %v57
  %v209 = vunpack.c.l.b16 %v58
  %v210 = vunpack.c.l.b16 %v59
  %v211 = vunpack.c.l.b16 %v60
  %v212 = vunpack.c.l.b16 %v61
  %v213 = vunpack.c.l.b16 %v62
  %v214 = vunpack.c.l.b16 %v63
  %v215 = vunpack.c.l.b16 %v64
  %v216 = vunpack.c.l.b16 %v65
  %v217 = vunpack.c.l.b16 %v66
  %v218 = vunpack.c.l.b16 %v67
  %v219 = vunpack.c.l.b16 %v68
  %v220 = vunpack.c.l.b16 %v69
  %v221 = vunpack.c.l.b16 %v70
  %v222 = vunpack.c.l.b16 %v71
  %v223 = vunpack.c.l.b16 %v72
  %v224 = vunpack.c.l.b16 %v73
  %v225 = vunpack.c.l.b16 %v74
  %v226 = vunpack.c.l.b16 %v75
  %v227 = vunpack.c.l.b16 %v76
  %v228 = vunpack.c.l.b16 %v77
  %v229 = vunpack.c.l.b16 %v78
  %v230 = vunpack.c.l.b16 %v79
  %v231 = vunpack.c.l.b16 %v80
  %v232 = vunpack.c.l.b16 %v81
  %v233 = vunpack.c.l.b16 %v82
  %v234 = vunpack.c.l.b16 %v83
  %v235 = vunpack.c.l.b16 %v84
  %v236 = vunpack.c.l.b16 %v85
  %v237 = vunpack.c.l.b16 %v86
  %v238 = vunpack.c.l.b16 %v87
  %v239 = vunpack.c.l.b16 %v88
  %v240 = vunpack.c.l.b16 %v89
  %v241 = vunpack.c.l.b16 %v90
  %v242 = vunpack.c.l.b16 %v91
  %v243 = vunpack.c.l.b16 %v92
  %v244 = vunpack.c.l.b16 %v93
  %v245 = vunpack.c.l.b16 %v94
  %v246 = vunpack.c.l.b16 %v95
  %v247 = vunpack.c.l.b16 %v96
  %v248 = vpack.c.b16 %v185, %v184
  %v249 = vpack.c.b16 %v187, %v186
  %v250 = vpack.c.b16 %v189, %v188
  %v251 = vpack.c.b16 %v191, %v190
  %v252 = vpack.c.b16 %v193, %v192
  %v253 = vpack.c.b16 %v195, %v194
  %v254 = vpack.c.b16 %v197, %v196
  %v255 = vpack.c.b16 %v199, %v198
  %v256 = vpack.c.b16 %v201, %v200
  %v257 = vpack.c.b16 %v203, %v202
  %v258 = vpack.c.b16 %v205, %v204
  %v259 = vpack.c.b16 %v207, %v206
  %v260 = vpack.c.b16 %v209, %v208
  %v261 = vpack.c.b16 %v211, %v210
  %v262 = vpack.c.b16 %v213, %v212
  %v263 = vpack.c.b16 %v215, %v214
  %v264 = vpack.c.b16 %v217, %v216
  %v265 = vpack.c.b16 %v219, %v218
  %v266 = vpack.c.b16 %v221, %v220
  %v267 = vpack.c.b16 %v223, %v222
  %v268 = vpack.c.b16 %v225, %v224
  %v269 = vpack.c.b16 %v227, %v226
  %v270 = vpack.c.b16 %v229, %v228
  %v271 = vpack.c.b16 %v231, %v230
  %v272 = vpack.c.b16 %v233, %v232
  %v273 = vpack.c.b16 %v235, %v234
  %v274 = vpack.c.b16 %v237, %v236
  %v275 = vpack.c.b16 %v239, %v238
  %v276 = vpack.c.b16 %v241, %v240
  %v277 = vpack.c.b16 %v243, %v242
  %v278 = vpack.c.b16 %v245, %v244
  %v279 = vpack.c.b16 %v247, %v246
  %312 = vmatprep.subr.bf16.mxu0 0
  %313 = vmatpush1.bf16.msra.mxu0 %v248
  %314 = vmatprep.subr.bf16.mxu0 0
  %315 = vmatpush1.bf16.msra.mxu0 %v249
  %316 = vmatprep.subr.bf16.mxu0 0
  %317 = vmatpush1.bf16.msra.mxu0 %v250
  %318 = vmatprep.subr.bf16.mxu0 0
  %319 = vmatpush1.bf16.msra.mxu0 %v251
  %320 = vmatprep.subr.bf16.mxu0 0
  %321 = vmatpush1.bf16.msra.mxu0 %v252
  %322 = vmatprep.subr.bf16.mxu0 0
  %323 = vmatpush1.bf16.msra.mxu0 %v253
  %324 = vmatprep.subr.bf16.mxu0 0
  %325 = vmatpush1.bf16.msra.mxu0 %v254
  %326 = vmatprep.subr.bf16.mxu0 0
  %327 = vmatpush1.bf16.msra.mxu0 %v255
  %328 = vmatprep.subr.bf16.mxu0 0
  %329 = vmatpush1.bf16.msra.mxu0 %v256
  %330 = vmatprep.subr.bf16.mxu0 0
  %331 = vmatpush1.bf16.msra.mxu0 %v257
  %332 = vmatprep.subr.bf16.mxu0 0
  %333 = vmatpush1.bf16.msra.mxu0 %v258
  %334 = vmatprep.subr.bf16.mxu0 0
  %335 = vmatpush1.bf16.msra.mxu0 %v259
  %336 = vmatprep.subr.bf16.mxu0 0
  %337 = vmatpush1.bf16.msra.mxu0 %v260
  %338 = vmatprep.subr.bf16.mxu0 0
  %339 = vmatpush1.bf16.msra.mxu0 %v261
  %340 = vmatprep.subr.bf16.mxu0 0
  %341 = vmatpush1.bf16.msra.mxu0 %v262
  %342 = vmatprep.subr.bf16.mxu0 0
  %343 = vmatpush1.bf16.msra.mxu0 %v263
  %344 = vmatprep.mubr.bf16.mxu0 %v113
  %345 = vmatmul.mubr.bf16.gmra.mrb[0].mxu0 %v112
  %v346 = vpop.f32.mrb[0].mxu0
  %v347 = vadd.f32 %v104, %v346
  %v348 = vpop.f32.mrb[0].mxu0
  %v349 = vpop.f32.mrb[0].mxu0
  %v350 = vpop.f32.mrb[0].mxu0
  %351 = vdwg.mxu0
  %352 = vmatprep.subr.bf16.mxu0 0
  %353 = vmatpush1.bf16.msra.mxu0 %v264
  %354 = vmatprep.subr.bf16.mxu0 0
  %355 = vmatpush1.bf16.msra.mxu0 %v265
  %356 = vmatprep.subr.bf16.mxu0 0
  %357 = vmatpush1.bf16.msra.mxu0 %v266
  %358 = vmatprep.subr.bf16.mxu0 0
  %359 = vmatpush1.bf16.msra.mxu0 %v267
  %360 = vmatprep.subr.bf16.mxu0 0
  %361 = vmatpush1.bf16.msra.mxu0 %v268
  %362 = vmatprep.subr.bf16.mxu0 0
  %363 = vmatpush1.bf16.msra.mxu0 %v269
  %364 = vmatprep.subr.bf16.mxu0 0
  %365 = vmatpush1.bf16.msra.mxu0 %v270
  %366 = vmatprep.subr.bf16.mxu0 0
  %367 = vmatpush1.bf16.msra.mxu0 %v271
  %368 = vmatprep.subr.bf16.mxu0 0
  %369 = vmatpush1.bf16.msra.mxu0 %v272
  %370 = vmatprep.subr.bf16.mxu0 0
  %371 = vmatpush1.bf16.msra.mxu0 %v273
  %372 = vmatprep.subr.bf16.mxu0 0
  %373 = vmatpush1.bf16.msra.mxu0 %v274
  %374 = vmatprep.subr.bf16.mxu0 0
  %375 = vmatpush1.bf16.msra.mxu0 %v275
  %376 = vmatprep.subr.bf16.mxu0 0
  %377 = vmatpush1.bf16.msra.mxu0 %v276
  %378 = vmatprep.subr.bf16.mxu0 0
  %379 = vmatpush1.bf16.msra.mxu0 %v277
  %380 = vmatprep.subr.bf16.mxu0 0
  %381 = vmatpush1.bf16.msra.mxu0 %v278
  %382 = vmatprep.subr.bf16.mxu0 0
  %383 = vmatpush1.bf16.msra.mxu0 %v279
  %384 = vmatprep.mubr.bf16.mxu0 %v115
  %385 = vmatmul.mubr.bf16.gmra.mrb[0].mxu0 %v114
  %v386 = vpop.f32.mrb[0].mxu0
  %v387 = vadd.f32 %v347, %v386
  %v388 = vpop.f32.mrb[0].mxu0
  %v389 = vpop.f32.mrb[0].mxu0
  %v390 = vpop.f32.mrb[0].mxu0
  %391 = vdwg.mxu0
  %v392 = vmax.f32 %v387, 0.0
  %v393 = vpack.c.bf16 %v392, %v392
  %v394 = vld [vmem:[%s3] sm:$0xf]
  %v395 = vld [vmem:[%s3 + $0x4] sm:$0xf]
  %v396 = vld [vmem:[%s3 + $0x8] sm:$0xf]
  %v397 = vld [vmem:[%s3 + $0xc] sm:$0xf]
  %v398 = vld [vmem:[%s3 + $0x10] sm:$0xf]
  %v399 = vld [vmem:[%s3 + $0x14] sm:$0xf]
  %v400 = vld [vmem:[%s3 + $0x18] sm:$0xf]
  %v401 = vld [vmem:[%s3 + $0x1c] sm:$0xf]
  %v402 = vld [vmem:[%s3 + $0x20] sm:$0xf]
  %v403 = vld [vmem:[%s3 + $0x24] sm:$0xf]
  %v404 = vld [vmem:[%s3 + $0x28] sm:$0xf]
  %v405 = vld [vmem:[%s3 + $0x2c] sm:$0xf]
  %v406 = vld [vmem:[%s3 + $0x30] sm:$0xf]
  %v407 = vld [vmem:[%s3 + $0x34] sm:$0xf]
  %v408 = vld [vmem:[%s3 + $0x38] sm:$0xf]
  %v409 = vld [vmem:[%s3 + $0x3c] sm:$0xf]
  %s410 = scalar_lea.vmem %s0, 16
  %v411 = vld [vmem:[%s410] sm:$0xff]
  %v412 = vld [vmem:[%s410 + $0x8] sm:$0xff]
  %v415 = vunpack.c.l.b16 %v411
  %v416 = vunpack.c.h.b16 %v411
  %v417 = vunpack.c.l.b16 %v412
  %v418 = vunpack.c.h.b16 %v412
  %v419 = vpack.c.b16 %v415, %v415
  %v420 = vpack.c.b16 %v416, %v416
  %v421 = vpack.c.b16 %v417, %v417
  %v422 = vpack.c.b16 %v418, %v418
  %427 = vmatprep.subr.bf16.mxu0 0
  %428 = vmatpush1.bf16.msra.mxu0 %v248
  %429 = vmatprep.subr.bf16.mxu0 0
  %430 = vmatpush1.bf16.msra.mxu0 %v249
  %431 = vmatprep.subr.bf16.mxu0 0
  %432 = vmatpush1.bf16.msra.mxu0 %v250
  %433 = vmatprep.subr.bf16.mxu0 0
  %434 = vmatpush1.bf16.msra.mxu0 %v251
  %435 = vmatprep.subr.bf16.mxu0 0
  %436 = vmatpush1.bf16.msra.mxu0 %v252
  %437 = vmatprep.subr.bf16.mxu0 0
  %438 = vmatpush1.bf16.msra.mxu0 %v253
  %439 = vmatprep.subr.bf16.mxu0 0
  %440 = vmatpush1.bf16.msra.mxu0 %v254
  %441 = vmatprep.subr.bf16.mxu0 0
  %442 = vmatpush1.bf16.msra.mxu0 %v255
  %443 = vmatprep.subr.bf16.mxu0 0
  %444 = vmatpush1.bf16.msra.mxu0 %v256
  %445 = vmatprep.subr.bf16.mxu0 0
  %446 = vmatpush1.bf16.msra.mxu0 %v257
  %447 = vmatprep.subr.bf16.mxu0 0
  %448 = vmatpush1.bf16.msra.mxu0 %v258
  %449 = vmatprep.subr.bf16.mxu0 0
  %450 = vmatpush1.bf16.msra.mxu0 %v259
  %451 = vmatprep.subr.bf16.mxu0 0
  %452 = vmatpush1.bf16.msra.mxu0 %v260
  %453 = vmatprep.subr.bf16.mxu0 0
  %454 = vmatpush1.bf16.msra.mxu0 %v261
  %455 = vmatprep.subr.bf16.mxu0 0
  %456 = vmatpush1.bf16.msra.mxu0 %v262
  %457 = vmatprep.subr.bf16.mxu0 0
  %458 = vmatpush1.bf16.msra.mxu0 %v263
  %459 = vmatprep.mubr.bf16.mxu0 %v420
  %460 = vmatmul.mubr.bf16.gmra.mrb[0].mxu0 %v419
  %v461 = vpop.f32.mrb[0].mxu0
  %v462 = vadd.f32 %v104, %v461
  %v463 = vpop.f32.mrb[0].mxu0
  %v464 = vpop.f32.mrb[0].mxu0
  %v465 = vpop.f32.mrb[0].mxu0
  %466 = vdwg.mxu0
  %467 = vmatprep.subr.bf16.mxu0 0
  %468 = vmatpush1.bf16.msra.mxu0 %v264
  %469 = vmatprep.subr.bf16.mxu0 0
  %470 = vmatpush1.bf16.msra.mxu0 %v265
  %471 = vmatprep.subr.bf16.mxu0 0
  %472 = vmatpush1.bf16.msra.mxu0 %v266
  %473 = vmatprep.subr.bf16.mxu0 0
  %474 = vmatpush1.bf16.msra.mxu0 %v267
  %475 = vmatprep.subr.bf16.mxu0 0
  %476 = vmatpush1.bf16.msra.mxu0 %v268
  %477 = vmatprep.subr.bf16.mxu0 0
  %478 = vmatpush1.bf16.msra.mxu0 %v269
  %479 = vmatprep.subr.bf16.mxu0 0
  %480 = vmatpush1.bf16.msra.mxu0 %v270
  %481 = vmatprep.subr.bf16.mxu0 0
  %482 = vmatpush1.bf16.msra.mxu0 %v271
  %483 = vmatprep.subr.bf16.mxu0 0
  %484 = vmatpush1.bf16.msra.mxu0 %v272
  %485 = vmatprep.subr.bf16.mxu0 0
  %486 = vmatpush1.bf16.msra.mxu0 %v273
  %487 = vmatprep.subr.bf16.mxu0 0
  %488 = vmatpush1.bf16.msra.mxu0 %v274
  %489 = vmatprep.subr.bf16.mxu0 0
  %490 = vmatpush1.bf16.msra.mxu0 %v275
  %491 = vmatprep.subr.bf16.mxu0 0
  %492 = vmatpush1.bf16.msra.mxu0 %v276
  %493 = vmatprep.subr.bf16.mxu0 0
  %494 = vmatpush1.bf16.msra.mxu0 %v277
  %495 = vmatprep.subr.bf16.mxu0 0
  %496 = vmatpush1.bf16.msra.mxu0 %v278
  %497 = vmatprep.subr.bf16.mxu0 0
  %498 = vmatpush1.bf16.msra.mxu0 %v279
  %499 = vmatprep.mubr.bf16.mxu0 %v422
  %500 = vmatmul.mubr.bf16.gmra.mrb[0].mxu0 %v421
  %v501 = vpop.f32.mrb[0].mxu0
  %v502 = vadd.f32 %v462, %v501
  %v503 = vpop.f32.mrb[0].mxu0
  %v504 = vpop.f32.mrb[0].mxu0
  %v505 = vpop.f32.mrb[0].mxu0
  %506 = vdwg.mxu0
  %v507 = vmax.f32 %v502, 0.0
  %v508 = vpack.c.bf16 %v507, %v507
  %s509 = scalar_lea.vmem %s3, 64
  %v510 = vld [vmem:[%s509] sm:$0xf]
  %v511 = vld [vmem:[%s509 + $0x4] sm:$0xf]
  %v512 = vld [vmem:[%s509 + $0x8] sm:$0xf]
  %v513 = vld [vmem:[%s509 + $0xc] sm:$0xf]
  %v514 = vld [vmem:[%s509 + $0x10] sm:$0xf]
  %v515 = vld [vmem:[%s509 + $0x14] sm:$0xf]
  %v516 = vld [vmem:[%s509 + $0x18] sm:$0xf]
  %v517 = vld [vmem:[%s509 + $0x1c] sm:$0xf]
  %v518 = vld [vmem:[%s509 + $0x20] sm:$0xf]
  %v519 = vld [vmem:[%s509 + $0x24] sm:$0xf]
  %v520 = vld [vmem:[%s509 + $0x28] sm:$0xf]
  %v521 = vld [vmem:[%s509 + $0x2c] sm:$0xf]
  %v522 = vld [vmem:[%s509 + $0x30] sm:$0xf]
  %v523 = vld [vmem:[%s509 + $0x34] sm:$0xf]
  %v524 = vld [vmem:[%s509 + $0x38] sm:$0xf]
  %v525 = vld [vmem:[%s509 + $0x3c] sm:$0xf]
  %v542 = vunpack.c.l.b16 %v510
  %v543 = vunpack.c.l.b16 %v511
  %v544 = vunpack.c.l.b16 %v512
  %v545 = vunpack.c.l.b16 %v513
  %v546 = vunpack.c.l.b16 %v514
  %v547 = vunpack.c.l.b16 %v515
  %v548 = vunpack.c.l.b16 %v516
  %v549 = vunpack.c.l.b16 %v517
  %v550 = vunpack.c.l.b16 %v518
  %v551 = vunpack.c.l.b16 %v519
  %v552 = vunpack.c.l.b16 %v520
  %v553 = vunpack.c.l.b16 %v521
  %v554 = vunpack.c.l.b16 %v522
  %v555 = vunpack.c.l.b16 %v523
  %v556 = vunpack.c.l.b16 %v524
  %v557 = vunpack.c.l.b16 %v525
  %v558 = vpack.c.b16 %v543, %v542
  %v559 = vpack.c.b16 %v545, %v544
  %v560 = vpack.c.b16 %v547, %v546
  %v561 = vpack.c.b16 %v549, %v548
  %v562 = vpack.c.b16 %v551, %v550
  %v563 = vpack.c.b16 %v553, %v552
  %v564 = vpack.c.b16 %v555, %v554
  %v565 = vpack.c.b16 %v557, %v556
  %574 = vmatprep.subr.bf16.mxu0 0
  %575 = vmatpush1.bf16.msra.mxu0 %v558
  %576 = vmatprep.subr.bf16.mxu0 0
  %577 = vmatpush1.bf16.msra.mxu0 %v559
  %578 = vmatprep.subr.bf16.mxu0 0
  %579 = vmatpush1.bf16.msra.mxu0 %v560
  %580 = vmatprep.subr.bf16.mxu0 0
  %581 = vmatpush1.bf16.msra.mxu0 %v561
  %582 = vmatprep.subr.bf16.mxu0 0
  %583 = vmatpush1.bf16.msra.mxu0 %v562
  %584 = vmatprep.subr.bf16.mxu0 0
  %585 = vmatpush1.bf16.msra.mxu0 %v563
  %586 = vmatprep.subr.bf16.mxu0 0
  %587 = vmatpush1.bf16.msra.mxu0 %v564
  %588 = vmatprep.subr.bf16.mxu0 0
  %589 = vmatpush1.bf16.msra.mxu0 %v565
  %590 = vmatprep.subr.bf16.mxu0 0
  %591 = vmatpush1.bf16.msra.mxu0 0
  %592 = vmatprep.subr.bf16.mxu0 0
  %593 = vmatpush1.bf16.msra.mxu0 0
  %594 = vmatprep.subr.bf16.mxu0 0
  %595 = vmatpush1.bf16.msra.mxu0 0
  %596 = vmatprep.subr.bf16.mxu0 0
  %597 = vmatpush1.bf16.msra.mxu0 0
  %598 = vmatprep.subr.bf16.mxu0 0
  %599 = vmatpush1.bf16.msra.mxu0 0
  %600 = vmatprep.subr.bf16.mxu0 0
  %601 = vmatpush1.bf16.msra.mxu0 0
  %602 = vmatprep.subr.bf16.mxu0 0
  %603 = vmatpush1.bf16.msra.mxu0 0
  %604 = vmatprep.subr.bf16.mxu0 0
  %605 = vmatpush1.bf16.msra.mxu0 0
  %606 = vmatprep.mubr.bf16.mxu0 0
  %607 = vmatmul.mubr.bf16.gmra.mrb[0].mxu0 %v508
  %v608 = vpop.f32.mrb[0].mxu0
  %v609 = vadd.f32 0.0, %v608
  %v610 = vpop.f32.mrb[0].mxu0
  %v611 = vpop.f32.mrb[0].mxu0
  %v612 = vpop.f32.mrb[0].mxu0
  %613 = vdwg.mxu0
  %v630 = vunpack.c.l.b16 %v394
  %v631 = vunpack.c.l.b16 %v395
  %v632 = vunpack.c.l.b16 %v396
  %v633 = vunpack.c.l.b16 %v397
  %v634 = vunpack.c.l.b16 %v398
  %v635 = vunpack.c.l.b16 %v399
  %v636 = vunpack.c.l.b16 %v400
  %v637 = vunpack.c.l.b16 %v401
  %v638 = vunpack.c.l.b16 %v402
  %v639 = vunpack.c.l.b16 %v403
  %v640 = vunpack.c.l.b16 %v404
  %v641 = vunpack.c.l.b16 %v405
  %v642 = vunpack.c.l.b16 %v406
  %v643 = vunpack.c.l.b16 %v407
  %v644 = vunpack.c.l.b16 %v408
  %v645 = vunpack.c.l.b16 %v409
  %v646 = vpack.c.b16 %v631, %v630
  %v647 = vpack.c.b16 %v633, %v632
  %v648 = vpack.c.b16 %v635, %v634
  %v649 = vpack.c.b16 %v637, %v636
  %v650 = vpack.c.b16 %v639, %v638
  %v651 = vpack.c.b16 %v641, %v640
  %v652 = vpack.c.b16 %v643, %v642
  %v653 = vpack.c.b16 %v645, %v644
  %662 = vmatprep.subr.bf16.mxu0 0
  %663 = vmatpush1.bf16.msra.mxu0 %v646
  %664 = vmatprep.subr.bf16.mxu0 0
  %665 = vmatpush1.bf16.msra.mxu0 %v647
  %666 = vmatprep.subr.bf16.mxu0 0
  %667 = vmatpush1.bf16.msra.mxu0 %v648
  %668 = vmatprep.subr.bf16.mxu0 0
  %669 = vmatpush1.bf16.msra.mxu0 %v649
  %670 = vmatprep.subr.bf16.mxu0 0
  %671 = vmatpush1.bf16.msra.mxu0 %v650
  %672 = vmatprep.subr.bf16.mxu0 0
  %673 = vmatpush1.bf16.msra.mxu0 %v651
  %674 = vmatprep.subr.bf16.mxu0 0
  %675 = vmatpush1.bf16.msra.mxu0 %v652
  %676 = vmatprep.subr.bf16.mxu0 0
  %677 = vmatpush1.bf16.msra.mxu0 %v653
  %678 = vmatprep.subr.bf16.mxu0 0
  %679 = vmatpush1.bf16.msra.mxu0 0
  %680 = vmatprep.subr.bf16.mxu0 0
  %681 = vmatpush1.bf16.msra.mxu0 0
  %682 = vmatprep.subr.bf16.mxu0 0
  %683 = vmatpush1.bf16.msra.mxu0 0
  %684 = vmatprep.subr.bf16.mxu0 0
  %685 = vmatpush1.bf16.msra.mxu0 0
  %686 = vmatprep.subr.bf16.mxu0 0
  %687 = vmatpush1.bf16.msra.mxu0 0
  %688 = vmatprep.subr.bf16.mxu0 0
  %689 = vmatpush1.bf16.msra.mxu0 0
  %690 = vmatprep.subr.bf16.mxu0 0
  %691 = vmatpush1.bf16.msra.mxu0 0
  %692 = vmatprep.subr.bf16.mxu0 0
  %693 = vmatpush1.bf16.msra.mxu0 0
  %694 = vmatprep.mubr.bf16.mxu0 0
  %695 = vmatmul.mubr.bf16.gmra.mrb[0].mxu0 %v393
  %v696 = vpop.f32.mrb[0].mxu0
  %v697 = vadd.f32 %v609, %v696
  %v698 = vpop.f32.mrb[0].mxu0
  %v699 = vpop.f32.mrb[0].mxu0
  %v700 = vpop.f32.mrb[0].mxu0
  %701 = vdwg.mxu0
  %s702 = scalar_lea.vmem %s0, 32
  %v703 = vld [vmem:[%s702] sm:$0xff]
  %v704 = vld [vmem:[%s702 + $0x8] sm:$0xff]
  %v707 = vunpack.c.l.b16 %v703
  %v708 = vunpack.c.h.b16 %v703
  %v709 = vunpack.c.l.b16 %v704
  %v710 = vunpack.c.h.b16 %v704
  %v711 = vpack.c.b16 %v707, %v707
  %v712 = vpack.c.b16 %v708, %v708
  %v713 = vpack.c.b16 %v709, %v709
  %v714 = vpack.c.b16 %v710, %v710
  %719 = vmatprep.subr.bf16.mxu0 0
  %720 = vmatpush1.bf16.msra.mxu0 %v248
  %721 = vmatprep.subr.bf16.mxu0 0
  %722 = vmatpush1.bf16.msra.mxu0 %v249
  %723 = vmatprep.subr.bf16.mxu0 0
  %724 = vmatpush1.bf16.msra.mxu0 %v250
  %725 = vmatprep.subr.bf16.mxu0 0
  %726 = vmatpush1.bf16.msra.mxu0 %v251
  %727 = vmatprep.subr.bf16.mxu0 0
  %728 = vmatpush1.bf16.msra.mxu0 %v252
  %729 = vmatprep.subr.bf16.mxu0 0
  %730 = vmatpush1.bf16.msra.mxu0 %v253
  %731 = vmatprep.subr.bf16.mxu0 0
  %732 = vmatpush1.bf16.msra.mxu0 %v254
  %733 = vmatprep.subr.bf16.mxu0 0
  %734 = vmatpush1.bf16.msra.mxu0 %v255
  %735 = vmatprep.subr.bf16.mxu0 0
  %736 = vmatpush1.bf16.msra.mxu0 %v256
  %737 = vmatprep.subr.bf16.mxu0 0
  %738 = vmatpush1.bf16.msra.mxu0 %v257
  %739 = vmatprep.subr.bf16.mxu0 0
  %740 = vmatpush1.bf16.msra.mxu0 %v258
  %741 = vmatprep.subr.bf16.mxu0 0
  %742 = vmatpush1.bf16.msra.mxu0 %v259
  %743 = vmatprep.subr.bf16.mxu0 0
  %744 = vmatpush1.bf16.msra.mxu0 %v260
  %745 = vmatprep.subr.bf16.mxu0 0
  %746 = vmatpush1.bf16.msra.mxu0 %v261
  %747 = vmatprep.subr.bf16.mxu0 0
  %748 = vmatpush1.bf16.msra.mxu0 %v262
  %749 = vmatprep.subr.bf16.mxu0 0
  %750 = vmatpush1.bf16.msra.mxu0 %v263
  %751 = vmatprep.mubr.bf16.mxu0 %v712
  %752 = vmatmul.mubr.bf16.gmra.mrb[0].mxu0 %v711
  %v753 = vpop.f32.mrb[0].mxu0
  %v754 = vadd.f32 %v104, %v753
  %v755 = vpop.f32.mrb[0].mxu0
  %v756 = vpop.f32.mrb[0].mxu0
  %v757 = vpop.f32.mrb[0].mxu0
  %758 = vdwg.mxu0
  %759 = vmatprep.subr.bf16.mxu0 0
  %760 = vmatpush1.bf16.msra.mxu0 %v264
  %761 = vmatprep.subr.bf16.mxu0 0
  %762 = vmatpush1.bf16.msra.mxu0 %v265
  %763 = vmatprep.subr.bf16.mxu0 0
  %764 = vmatpush1.bf16.msra.mxu0 %v266
  %765 = vmatprep.subr.bf16.mxu0 0
  %766 = vmatpush1.bf16.msra.mxu0 %v267
  %767 = vmatprep.subr.bf16.mxu0 0
  %768 = vmatpush1.bf16.msra.mxu0 %v268
  %769 = vmatprep.subr.bf16.mxu0 0
  %770 = vmatpush1.bf16.msra.mxu0 %v269
  %771 = vmatprep.subr.bf16.mxu0 0
  %772 = vmatpush1.bf16.msra.mxu0 %v270
  %773 = vmatprep.subr.bf16.mxu0 0
  %774 = vmatpush1.bf16.msra.mxu0 %v271
  %775 = vmatprep.subr.bf16.mxu0 0
  %776 = vmatpush1.bf16.msra.mxu0 %v272
  %777 = vmatprep.subr.bf16.mxu0 0
  %778 = vmatpush1.bf16.msra.mxu0 %v273
  %779 = vmatprep.subr.bf16.mxu0 0
  %780 = vmatpush1.bf16.msra.mxu0 %v274
  %781 = vmatprep.subr.bf16.mxu0 0
  %782 = vmatpush1.bf16.msra.mxu0 %v275
  %783 = vmatprep.subr.bf16.mxu0 0
  %784 = vmatpush1.bf16.msra.mxu0 %v276
  %785 = vmatprep.subr.bf16.mxu0 0
  %786 = vmatpush1.bf16.msra.mxu0 %v277
  %787 = vmatprep.subr.bf16.mxu0 0
  %788 = vmatpush1.bf16.msra.mxu0 %v278
  %789 = vmatprep.subr.bf16.mxu0 0
  %790 = vmatpush1.bf16.msra.mxu0 %v279
  %791 = vmatprep.mubr.bf16.mxu0 %v714
  %792 = vmatmul.mubr.bf16.gmra.mrb[0].mxu0 %v713
  %v793 = vpop.f32.mrb[0].mxu0
  %v794 = vadd.f32 %v754, %v793
  %v795 = vpop.f32.mrb[0].mxu0
  %v796 = vpop.f32.mrb[0].mxu0
  %v797 = vpop.f32.mrb[0].mxu0
  %798 = vdwg.mxu0
  %v799 = vmax.f32 %v794, 0.0
  %v800 = vpack.c.bf16 %v799, %v799
  %s801 = scalar_lea.vmem %s3, 128
  %v802 = vld [vmem:[%s801] sm:$0xf]
  %v803 = vld [vmem:[%s801 + $0x4] sm:$0xf]
  %v804 = vld [vmem:[%s801 + $0x8] sm:$0xf]
  %v805 = vld [vmem:[%s801 + $0xc] sm:$0xf]
  %v806 = vld [vmem:[%s801 + $0x10] sm:$0xf]
  %v807 = vld [vmem:[%s801 + $0x14] sm:$0xf]
  %v808 = vld [vmem:[%s801 + $0x18] sm:$0xf]
  %v809 = vld [vmem:[%s801 + $0x1c] sm:$0xf]
  %v810 = vld [vmem:[%s801 + $0x20] sm:$0xf]
  %v811 = vld [vmem:[%s801 + $0x24] sm:$0xf]
  %v812 = vld [vmem:[%s801 + $0x28] sm:$0xf]
  %v813 = vld [vmem:[%s801 + $0x2c] sm:$0xf]
  %v814 = vld [vmem:[%s801 + $0x30] sm:$0xf]
  %v815 = vld [vmem:[%s801 + $0x34] sm:$0xf]
  %v816 = vld [vmem:[%s801 + $0x38] sm:$0xf]
  %v817 = vld [vmem:[%s801 + $0x3c] sm:$0xf]
  %v834 = vunpack.c.l.b16 %v802
  %v835 = vunpack.c.l.b16 %v803
  %v836 = vunpack.c.l.b16 %v804
  %v837 = vunpack.c.l.b16 %v805
  %v838 = vunpack.c.l.b16 %v806
  %v839 = vunpack.c.l.b16 %v807
  %v840 = vunpack.c.l.b16 %v808
  %v841 = vunpack.c.l.b16 %v809
  %v842 = vunpack.c.l.b16 %v810
  %v843 = vunpack.c.l.b16 %v811
  %v844 = vunpack.c.l.b16 %v812
  %v845 = vunpack.c.l.b16 %v813
  %v846 = vunpack.c.l.b16 %v814
  %v847 = vunpack.c.l.b16 %v815
  %v848 = vunpack.c.l.b16 %v816
  %v849 = vunpack.c.l.b16 %v817
  %v850 = vpack.c.b16 %v835, %v834
  %v851 = vpack.c.b16 %v837, %v836
  %v852 = vpack.c.b16 %v839, %v838
  %v853 = vpack.c.b16 %v841, %v840
  %v854 = vpack.c.b16 %v843, %v842
  %v855 = vpack.c.b16 %v845, %v844
  %v856 = vpack.c.b16 %v847, %v846
  %v857 = vpack.c.b16 %v849, %v848
  %866 = vmatprep.subr.bf16.mxu0 0
  %867 = vmatpush1.bf16.msra.mxu0 %v850
  %868 = vmatprep.subr.bf16.mxu0 0
  %869 = vmatpush1.bf16.msra.mxu0 %v851
  %870 = vmatprep.subr.bf16.mxu0 0
  %871 = vmatpush1.bf16.msra.mxu0 %v852
  %872 = vmatprep.subr.bf16.mxu0 0
  %873 = vmatpush1.bf16.msra.mxu0 %v853
  %874 = vmatprep.subr.bf16.mxu0 0
  %875 = vmatpush1.bf16.msra.mxu0 %v854
  %876 = vmatprep.subr.bf16.mxu0 0
  %877 = vmatpush1.bf16.msra.mxu0 %v855
  %878 = vmatprep.subr.bf16.mxu0 0
  %879 = vmatpush1.bf16.msra.mxu0 %v856
  %880 = vmatprep.subr.bf16.mxu0 0
  %881 = vmatpush1.bf16.msra.mxu0 %v857
  %882 = vmatprep.subr.bf16.mxu0 0
  %883 = vmatpush1.bf16.msra.mxu0 0
  %884 = vmatprep.subr.bf16.mxu0 0
  %885 = vmatpush1.bf16.msra.mxu0 0
  %886 = vmatprep.subr.bf16.mxu0 0
  %887 = vmatpush1.bf16.msra.mxu0 0
  %888 = vmatprep.subr.bf16.mxu0 0
  %889 = vmatpush1.bf16.msra.mxu0 0
  %890 = vmatprep.subr.bf16.mxu0 0
  %891 = vmatpush1.bf16.msra.mxu0 0
  %892 = vmatprep.subr.bf16.mxu0 0
  %893 = vmatpush1.bf16.msra.mxu0 0
  %894 = vmatprep.subr.bf16.mxu0 0
  %895 = vmatpush1.bf16.msra.mxu0 0
  %896 = vmatprep.subr.bf16.mxu0 0
  %897 = vmatpush1.bf16.msra.mxu0 0
  %898 = vmatprep.mubr.bf16.mxu0 0
  %899 = vmatmul.mubr.bf16.gmra.mrb[0].mxu0 %v800
  %v900 = vpop.f32.mrb[0].mxu0
  %v901 = vadd.f32 0.0, %v900
  %v902 = vpop.f32.mrb[0].mxu0
  %v903 = vpop.f32.mrb[0].mxu0
  %v904 = vpop.f32.mrb[0].mxu0
  %905 = vdwg.mxu0
  %v906 = vadd.f32 %v697, %v901
  %s907 = scalar_lea.vmem %s0, 48
  %v908 = vld [vmem:[%s907] sm:$0xff]
  %v909 = vld [vmem:[%s907 + $0x8] sm:$0xff]
  %v912 = vunpack.c.l.b16 %v908
  %v913 = vunpack.c.h.b16 %v908
  %v914 = vunpack.c.l.b16 %v909
  %v915 = vunpack.c.h.b16 %v909
  %v916 = vpack.c.b16 %v912, %v912
  %v917 = vpack.c.b16 %v913, %v913
  %v918 = vpack.c.b16 %v914, %v914
  %v919 = vpack.c.b16 %v915, %v915
  %924 = vmatprep.subr.bf16.mxu0 0
  %925 = vmatpush1.bf16.msra.mxu0 %v248
  %926 = vmatprep.subr.bf16.mxu0 0
  %927 = vmatpush1.bf16.msra.mxu0 %v249
  %928 = vmatprep.subr.bf16.mxu0 0
  %929 = vmatpush1.bf16.msra.mxu0 %v250
  %930 = vmatprep.subr.bf16.mxu0 0
  %931 = vmatpush1.bf16.msra.mxu0 %v251
  %932 = vmatprep.subr.bf16.mxu0 0
  %933 = vmatpush1.bf16.msra.mxu0 %v252
  %934 = vmatprep.subr.bf16.mxu0 0
  %935 = vmatpush1.bf16.msra.mxu0 %v253
  %936 = vmatprep.subr.bf16.mxu0 0
  %937 = vmatpush1.bf16.msra.mxu0 %v254
  %938 = vmatprep.subr.bf16.mxu0 0
  %939 = vmatpush1.bf16.msra.mxu0 %v255
  %940 = vmatprep.subr.bf16.mxu0 0
  %941 = vmatpush1.bf16.msra.mxu0 %v256
  %942 = vmatprep.subr.bf16.mxu0 0
  %943 = vmatpush1.bf16.msra.mxu0 %v257
  %944 = vmatprep.subr.bf16.mxu0 0
  %945 = vmatpush1.bf16.msra.mxu0 %v258
  %946 = vmatprep.subr.bf16.mxu0 0
  %947 = vmatpush1.bf16.msra.mxu0 %v259
  %948 = vmatprep.subr.bf16.mxu0 0
  %949 = vmatpush1.bf16.msra.mxu0 %v260
  %950 = vmatprep.subr.bf16.mxu0 0
  %951 = vmatpush1.bf16.msra.mxu0 %v261
  %952 = vmatprep.subr.bf16.mxu0 0
  %953 = vmatpush1.bf16.msra.mxu0 %v262
  %954 = vmatprep.subr.bf16.mxu0 0
  %955 = vmatpush1.bf16.msra.mxu0 %v263
  %956 = vmatprep.mubr.bf16.mxu0 %v917
  %957 = vmatmul.mubr.bf16.gmra.mrb[0].mxu0 %v916
  %v958 = vpop.f32.mrb[0].mxu0
  %v959 = vadd.f32 %v104, %v958
  %v960 = vpop.f32.mrb[0].mxu0
  %v961 = vpop.f32.mrb[0].mxu0
  %v962 = vpop.f32.mrb[0].mxu0
  %963 = vdwg.mxu0
  %964 = vmatprep.subr.bf16.mxu0 0
  %965 = vmatpush1.bf16.msra.mxu0 %v264
  %966 = vmatprep.subr.bf16.mxu0 0
  %967 = vmatpush1.bf16.msra.mxu0 %v265
  %968 = vmatprep.subr.bf16.mxu0 0
  %969 = vmatpush1.bf16.msra.mxu0 %v266
  %970 = vmatprep.subr.bf16.mxu0 0
  %971 = vmatpush1.bf16.msra.mxu0 %v267
  %972 = vmatprep.subr.bf16.mxu0 0
  %973 = vmatpush1.bf16.msra.mxu0 %v268
  %974 = vmatprep.subr.bf16.mxu0 0
  %975 = vmatpush1.bf16.msra.mxu0 %v269
  %976 = vmatprep.subr.bf16.mxu0 0
  %977 = vmatpush1.bf16.msra.mxu0 %v270
  %978 = vmatprep.subr.bf16.mxu0 0
  %979 = vmatpush1.bf16.msra.mxu0 %v271
  %980 = vmatprep.subr.bf16.mxu0 0
  %981 = vmatpush1.bf16.msra.mxu0 %v272
  %982 = vmatprep.subr.bf16.mxu0 0
  %983 = vmatpush1.bf16.msra.mxu0 %v273
  %984 = vmatprep.subr.bf16.mxu0 0
  %985 = vmatpush1.bf16.msra.mxu0 %v274
  %986 = vmatprep.subr.bf16.mxu0 0
  %987 = vmatpush1.bf16.msra.mxu0 %v275
  %988 = vmatprep.subr.bf16.mxu0 0
  %989 = vmatpush1.bf16.msra.mxu0 %v276
  %990 = vmatprep.subr.bf16.mxu0 0
  %991 = vmatpush1.bf16.msra.mxu0 %v277
  %992 = vmatprep.subr.bf16.mxu0 0
  %993 = vmatpush1.bf16.msra.mxu0 %v278
  %994 = vmatprep.subr.bf16.mxu0 0
  %995 = vmatpush1.bf16.msra.mxu0 %v279
  %996 = vmatprep.mubr.bf16.mxu0 %v919
  %997 = vmatmul.mubr.bf16.gmra.mrb[0].mxu0 %v918
  %v998 = vpop.f32.mrb[0].mxu0
  %v999 = vadd.f32 %v959, %v998
  %v1000 = vpop.f32.mrb[0].mxu0
  %v1001 = vpop.f32.mrb[0].mxu0
  %v1002 = vpop.f32.mrb[0].mxu0
  %1003 = vdwg.mxu0
  %v1004 = vmax.f32 %v999, 0.0
  %v1005 = vpack.c.bf16 %v1004, %v1004
  %s1006 = scalar_lea.vmem %s3, 192
  %v1007 = vld [vmem:[%s1006] sm:$0xf]
  %v1008 = vld [vmem:[%s1006 + $0x4] sm:$0xf]
  %v1009 = vld [vmem:[%s1006 + $0x8] sm:$0xf]
  %v1010 = vld [vmem:[%s1006 + $0xc] sm:$0xf]
  %v1011 = vld [vmem:[%s1006 + $0x10] sm:$0xf]
  %v1012 = vld [vmem:[%s1006 + $0x14] sm:$0xf]
  %v1013 = vld [vmem:[%s1006 + $0x18] sm:$0xf]
  %v1014 = vld [vmem:[%s1006 + $0x1c] sm:$0xf]
  %v1015 = vld [vmem:[%s1006 + $0x20] sm:$0xf]
  %v1016 = vld [vmem:[%s1006 + $0x24] sm:$0xf]
  %v1017 = vld [vmem:[%s1006 + $0x28] sm:$0xf]
  %v1018 = vld [vmem:[%s1006 + $0x2c] sm:$0xf]
  %v1019 = vld [vmem:[%s1006 + $0x30] sm:$0xf]
  %v1020 = vld [vmem:[%s1006 + $0x34] sm:$0xf]
  %v1021 = vld [vmem:[%s1006 + $0x38] sm:$0xf]
  %v1022 = vld [vmem:[%s1006 + $0x3c] sm:$0xf]
  %v1039 = vunpack.c.l.b16 %v1007
  %v1040 = vunpack.c.l.b16 %v1008
  %v1041 = vunpack.c.l.b16 %v1009
  %v1042 = vunpack.c.l.b16 %v1010
  %v1043 = vunpack.c.l.b16 %v1011
  %v1044 = vunpack.c.l.b16 %v1012
  %v1045 = vunpack.c.l.b16 %v1013
  %v1046 = vunpack.c.l.b16 %v1014
  %v1047 = vunpack.c.l.b16 %v1015
  %v1048 = vunpack.c.l.b16 %v1016
  %v1049 = vunpack.c.l.b16 %v1017
  %v1050 = vunpack.c.l.b16 %v1018
  %v1051 = vunpack.c.l.b16 %v1019
  %v1052 = vunpack.c.l.b16 %v1020
  %v1053 = vunpack.c.l.b16 %v1021
  %v1054 = vunpack.c.l.b16 %v1022
  %v1055 = vpack.c.b16 %v1040, %v1039
  %v1056 = vpack.c.b16 %v1042, %v1041
  %v1057 = vpack.c.b16 %v1044, %v1043
  %v1058 = vpack.c.b16 %v1046, %v1045
  %v1059 = vpack.c.b16 %v1048, %v1047
  %v1060 = vpack.c.b16 %v1050, %v1049
  %v1061 = vpack.c.b16 %v1052, %v1051
  %v1062 = vpack.c.b16 %v1054, %v1053
  %1071 = vmatprep.subr.bf16.mxu0 0
  %1072 = vmatpush1.bf16.msra.mxu0 %v1055
  %1073 = vmatprep.subr.bf16.mxu0 0
  %1074 = vmatpush1.bf16.msra.mxu0 %v1056
  %1075 = vmatprep.subr.bf16.mxu0 0
  %1076 = vmatpush1.bf16.msra.mxu0 %v1057
  %1077 = vmatprep.subr.bf16.mxu0 0
  %1078 = vmatpush1.bf16.msra.mxu0 %v1058
  %1079 = vmatprep.subr.bf16.mxu0 0
  %1080 = vmatpush1.bf16.msra.mxu0 %v1059
  %1081 = vmatprep.subr.bf16.mxu0 0
  %1082 = vmatpush1.bf16.msra.mxu0 %v1060
  %1083 = vmatprep.subr.bf16.mxu0 0
  %1084 = vmatpush1.bf16.msra.mxu0 %v1061
  %1085 = vmatprep.subr.bf16.mxu0 0
  %1086 = vmatpush1.bf16.msra.mxu0 %v1062
  %1087 = vmatprep.subr.bf16.mxu0 0
  %1088 = vmatpush1.bf16.msra.mxu0 0
  %1089 = vmatprep.subr.bf16.mxu0 0
  %1090 = vmatpush1.bf16.msra.mxu0 0
  %1091 = vmatprep.subr.bf16.mxu0 0
  %1092 = vmatpush1.bf16.msra.mxu0 0
  %1093 = vmatprep.subr.bf16.mxu0 0
  %1094 = vmatpush1.bf16.msra.mxu0 0
  %1095 = vmatprep.subr.bf16.mxu0 0
  %1096 = vmatpush1.bf16.msra.mxu0 0
  %1097 = vmatprep.subr.bf16.mxu0 0
  %1098 = vmatpush1.bf16.msra.mxu0 0
  %1099 = vmatprep.subr.bf16.mxu0 0
  %1100 = vmatpush1.bf16.msra.mxu0 0
  %1101 = vmatprep.subr.bf16.mxu0 0
  %1102 = vmatpush1.bf16.msra.mxu0 0
  %1103 = vmatprep.mubr.bf16.mxu0 0
  %1104 = vmatmul.mubr.bf16.gmra.mrb[0].mxu0 %v1005
  %v1105 = vpop.f32.mrb[0].mxu0
  %v1106 = vadd.f32 0.0, %v1105
  %v1107 = vpop.f32.mrb[0].mxu0
  %v1108 = vpop.f32.mrb[0].mxu0
  %v1109 = vpop.f32.mrb[0].mxu0
  %1110 = vdwg.mxu0
  %v1111 = vadd.f32 %v906, %v1106
  %s1112 = scalar_lea.vmem %s0, 64
  %v1113 = vld [vmem:[%s1112] sm:$0xff]
  %v1114 = vld [vmem:[%s1112 + $0x8] sm:$0xff]
  %v1117 = vunpack.c.l.b16 %v1113
  %v1118 = vunpack.c.h.b16 %v1113
  %v1119 = vunpack.c.l.b16 %v1114
  %v1120 = vunpack.c.h.b16 %v1114
  %v1121 = vpack.c.b16 %v1117, %v1117
  %v1122 = vpack.c.b16 %v1118, %v1118
  %v1123 = vpack.c.b16 %v1119, %v1119
  %v1124 = vpack.c.b16 %v1120, %v1120
  %1129 = vmatprep.subr.bf16.mxu0 0
  %1130 = vmatpush1.bf16.msra.mxu0 %v248
  %1131 = vmatprep.subr.bf16.mxu0 0
  %1132 = vmatpush1.bf16.msra.mxu0 %v249
  %1133 = vmatprep.subr.bf16.mxu0 0
  %1134 = vmatpush1.bf16.msra.mxu0 %v250
  %1135 = vmatprep.subr.bf16.mxu0 0
  %1136 = vmatpush1.bf16.msra.mxu0 %v251
  %1137 = vmatprep.subr.bf16.mxu0 0
  %1138 = vmatpush1.bf16.msra.mxu0 %v252
  %1139 = vmatprep.subr.bf16.mxu0 0
  %1140 = vmatpush1.bf16.msra.mxu0 %v253
  %1141 = vmatprep.subr.bf16.mxu0 0
  %1142 = vmatpush1.bf16.msra.mxu0 %v254
  %1143 = vmatprep.subr.bf16.mxu0 0
  %1144 = vmatpush1.bf16.msra.mxu0 %v255
  %1145 = vmatprep.subr.bf16.mxu0 0
  %1146 = vmatpush1.bf16.msra.mxu0 %v256
  %1147 = vmatprep.subr.bf16.mxu0 0
  %1148 = vmatpush1.bf16.msra.mxu0 %v257
  %1149 = vmatprep.subr.bf16.mxu0 0
  %1150 = vmatpush1.bf16.msra.mxu0 %v258
  %1151 = vmatprep.subr.bf16.mxu0 0
  %1152 = vmatpush1.bf16.msra.mxu0 %v259
  %1153 = vmatprep.subr.bf16.mxu0 0
  %1154 = vmatpush1.bf16.msra.mxu0 %v260
  %1155 = vmatprep.subr.bf16.mxu0 0
  %1156 = vmatpush1.bf16.msra.mxu0 %v261
  %1157 = vmatprep.subr.bf16.mxu0 0
  %1158 = vmatpush1.bf16.msra.mxu0 %v262
  %1159 = vmatprep.subr.bf16.mxu0 0
  %1160 = vmatpush1.bf16.msra.mxu0 %v263
  %1161 = vmatprep.mubr.bf16.mxu0 %v1122
  %1162 = vmatmul.mubr.bf16.gmra.mrb[0].mxu0 %v1121
  %v1163 = vpop.f32.mrb[0].mxu0
  %v1164 = vadd.f32 %v104, %v1163
  %v1165 = vpop.f32.mrb[0].mxu0
  %v1166 = vpop.f32.mrb[0].mxu0
  %v1167 = vpop.f32.mrb[0].mxu0
  %1168 = vdwg.mxu0
  %1169 = vmatprep.subr.bf16.mxu0 0
  %1170 = vmatpush1.bf16.msra.mxu0 %v264
  %1171 = vmatprep.subr.bf16.mxu0 0
  %1172 = vmatpush1.bf16.msra.mxu0 %v265
  %1173 = vmatprep.subr.bf16.mxu0 0
  %1174 = vmatpush1.bf16.msra.mxu0 %v266
  %1175 = vmatprep.subr.bf16.mxu0 0
  %1176 = vmatpush1.bf16.msra.mxu0 %v267
  %1177 = vmatprep.subr.bf16.mxu0 0
  %1178 = vmatpush1.bf16.msra.mxu0 %v268
  %1179 = vmatprep.subr.bf16.mxu0 0
  %1180 = vmatpush1.bf16.msra.mxu0 %v269
  %1181 = vmatprep.subr.bf16.mxu0 0
  %1182 = vmatpush1.bf16.msra.mxu0 %v270
  %1183 = vmatprep.subr.bf16.mxu0 0
  %1184 = vmatpush1.bf16.msra.mxu0 %v271
  %1185 = vmatprep.subr.bf16.mxu0 0
  %1186 = vmatpush1.bf16.msra.mxu0 %v272
  %1187 = vmatprep.subr.bf16.mxu0 0
  %1188 = vmatpush1.bf16.msra.mxu0 %v273
  %1189 = vmatprep.subr.bf16.mxu0 0
  %1190 = vmatpush1.bf16.msra.mxu0 %v274
  %1191 = vmatprep.subr.bf16.mxu0 0
  %1192 = vmatpush1.bf16.msra.mxu0 %v275
  %1193 = vmatprep.subr.bf16.mxu0 0
  %1194 = vmatpush1.bf16.msra.mxu0 %v276
  %1195 = vmatprep.subr.bf16.mxu0 0
  %1196 = vmatpush1.bf16.msra.mxu0 %v277
  %1197 = vmatprep.subr.bf16.mxu0 0
  %1198 = vmatpush1.bf16.msra.mxu0 %v278
  %1199 = vmatprep.subr.bf16.mxu0 0
  %1200 = vmatpush1.bf16.msra.mxu0 %v279
  %1201 = vmatprep.mubr.bf16.mxu0 %v1124
  %1202 = vmatmul.mubr.bf16.gmra.mrb[0].mxu0 %v1123
  %v1203 = vpop.f32.mrb[0].mxu0
  %v1204 = vadd.f32 %v1164, %v1203
  %v1205 = vpop.f32.mrb[0].mxu0
  %v1206 = vpop.f32.mrb[0].mxu0
  %v1207 = vpop.f32.mrb[0].mxu0
  %1208 = vdwg.mxu0
  %v1209 = vmax.f32 %v1204, 0.0
  %v1210 = vpack.c.bf16 %v1209, %v1209
  %s1211 = scalar_lea.vmem %s3, 256
  %v1212 = vld [vmem:[%s1211] sm:$0xf]
  %v1213 = vld [vmem:[%s1211 + $0x4] sm:$0xf]
  %v1214 = vld [vmem:[%s1211 + $0x8] sm:$0xf]
  %v1215 = vld [vmem:[%s1211 + $0xc] sm:$0xf]
  %v1216 = vld [vmem:[%s1211 + $0x10] sm:$0xf]
  %v1217 = vld [vmem:[%s1211 + $0x14] sm:$0xf]
  %v1218 = vld [vmem:[%s1211 + $0x18] sm:$0xf]
  %v1219 = vld [vmem:[%s1211 + $0x1c] sm:$0xf]
  %v1220 = vld [vmem:[%s1211 + $0x20] sm:$0xf]
  %v1221 = vld [vmem:[%s1211 + $0x24] sm:$0xf]
  %v1222 = vld [vmem:[%s1211 + $0x28] sm:$0xf]
  %v1223 = vld [vmem:[%s1211 + $0x2c] sm:$0xf]
  %v1224 = vld [vmem:[%s1211 + $0x30] sm:$0xf]
  %v1225 = vld [vmem:[%s1211 + $0x34] sm:$0xf]
  %v1226 = vld [vmem:[%s1211 + $0x38] sm:$0xf]
  %v1227 = vld [vmem:[%s1211 + $0x3c] sm:$0xf]
  %v1244 = vunpack.c.l.b16 %v1212
  %v1245 = vunpack.c.l.b16 %v1213
  %v1246 = vunpack.c.l.b16 %v1214
  %v1247 = vunpack.c.l.b16 %v1215
  %v1248 = vunpack.c.l.b16 %v1216
  %v1249 = vunpack.c.l.b16 %v1217
  %v1250 = vunpack.c.l.b16 %v1218
  %v1251 = vunpack.c.l.b16 %v1219
  %v1252 = vunpack.c.l.b16 %v1220
  %v1253 = vunpack.c.l.b16 %v1221
  %v1254 = vunpack.c.l.b16 %v1222
  %v1255 = vunpack.c.l.b16 %v1223
  %v1256 = vunpack.c.l.b16 %v1224
  %v1257 = vunpack.c.l.b16 %v1225
  %v1258 = vunpack.c.l.b16 %v1226
  %v1259 = vunpack.c.l.b16 %v1227
  %v1260 = vpack.c.b16 %v1245, %v1244
  %v1261 = vpack.c.b16 %v1247, %v1246
  %v1262 = vpack.c.b16 %v1249, %v1248
  %v1263 = vpack.c.b16 %v1251, %v1250
  %v1264 = vpack.c.b16 %v1253, %v1252
  %v1265 = vpack.c.b16 %v1255, %v1254
  %v1266 = vpack.c.b16 %v1257, %v1256
  %v1267 = vpack.c.b16 %v1259, %v1258
  %1276 = vmatprep.subr.bf16.mxu0 0
  %1277 = vmatpush1.bf16.msra.mxu0 %v1260
  %1278 = vmatprep.subr.bf16.mxu0 0
  %1279 = vmatpush1.bf16.msra.mxu0 %v1261
  %1280 = vmatprep.subr.bf16.mxu0 0
  %1281 = vmatpush1.bf16.msra.mxu0 %v1262
  %1282 = vmatprep.subr.bf16.mxu0 0
  %1283 = vmatpush1.bf16.msra.mxu0 %v1263
  %1284 = vmatprep.subr.bf16.mxu0 0
  %1285 = vmatpush1.bf16.msra.mxu0 %v1264
  %1286 = vmatprep.subr.bf16.mxu0 0
  %1287 = vmatpush1.bf16.msra.mxu0 %v1265
  %1288 = vmatprep.subr.bf16.mxu0 0
  %1289 = vmatpush1.bf16.msra.mxu0 %v1266
  %1290 = vmatprep.subr.bf16.mxu0 0
  %1291 = vmatpush1.bf16.msra.mxu0 %v1267
  %1292 = vmatprep.subr.bf16.mxu0 0
  %1293 = vmatpush1.bf16.msra.mxu0 0
  %1294 = vmatprep.subr.bf16.mxu0 0
  %1295 = vmatpush1.bf16.msra.mxu0 0
  %1296 = vmatprep.subr.bf16.mxu0 0
  %1297 = vmatpush1.bf16.msra.mxu0 0
  %1298 = vmatprep.subr.bf16.mxu0 0
  %1299 = vmatpush1.bf16.msra.mxu0 0
  %1300 = vmatprep.subr.bf16.mxu0 0
  %1301 = vmatpush1.bf16.msra.mxu0 0
  %1302 = vmatprep.subr.bf16.mxu0 0
  %1303 = vmatpush1.bf16.msra.mxu0 0
  %1304 = vmatprep.subr.bf16.mxu0 0
  %1305 = vmatpush1.bf16.msra.mxu0 0
  %1306 = vmatprep.subr.bf16.mxu0 0
  %1307 = vmatpush1.bf16.msra.mxu0 0
  %1308 = vmatprep.mubr.bf16.mxu0 0
  %1309 = vmatmul.mubr.bf16.gmra.mrb[0].mxu0 %v1210
  %v1310 = vpop.f32.mrb[0].mxu0
  %v1311 = vadd.f32 0.0, %v1310
  %v1312 = vpop.f32.mrb[0].mxu0
  %v1313 = vpop.f32.mrb[0].mxu0
  %v1314 = vpop.f32.mrb[0].mxu0
  %1315 = vdwg.mxu0
  %v1316 = vadd.f32 %v1111, %v1311
  %s1317 = scalar_lea.vmem %s0, 80
  %v1318 = vld [vmem:[%s1317] sm:$0xff]
  %v1319 = vld [vmem:[%s1317 + $0x8] sm:$0xff]
  %v1322 = vunpack.c.l.b16 %v1318
  %v1323 = vunpack.c.h.b16 %v1318
  %v1324 = vunpack.c.l.b16 %v1319
  %v1325 = vunpack.c.h.b16 %v1319
  %v1326 = vpack.c.b16 %v1322, %v1322
  %v1327 = vpack.c.b16 %v1323, %v1323
  %v1328 = vpack.c.b16 %v1324, %v1324
  %v1329 = vpack.c.b16 %v1325, %v1325
  %1334 = vmatprep.subr.bf16.mxu0 0
  %1335 = vmatpush1.bf16.msra.mxu0 %v248
  %1336 = vmatprep.subr.bf16.mxu0 0
  %1337 = vmatpush1.bf16.msra.mxu0 %v249
  %1338 = vmatprep.subr.bf16.mxu0 0
  %1339 = vmatpush1.bf16.msra.mxu0 %v250
  %1340 = vmatprep.subr.bf16.mxu0 0
  %1341 = vmatpush1.bf16.msra.mxu0 %v251
  %1342 = vmatprep.subr.bf16.mxu0 0
  %1343 = vmatpush1.bf16.msra.mxu0 %v252
  %1344 = vmatprep.subr.bf16.mxu0 0
  %1345 = vmatpush1.bf16.msra.mxu0 %v253
  %1346 = vmatprep.subr.bf16.mxu0 0
  %1347 = vmatpush1.bf16.msra.mxu0 %v254
  %1348 = vmatprep.subr.bf16.mxu0 0
  %1349 = vmatpush1.bf16.msra.mxu0 %v255
  %1350 = vmatprep.subr.bf16.mxu0 0
  %1351 = vmatpush1.bf16.msra.mxu0 %v256
  %1352 = vmatprep.subr.bf16.mxu0 0
  %1353 = vmatpush1.bf16.msra.mxu0 %v257
  %1354 = vmatprep.subr.bf16.mxu0 0
  %1355 = vmatpush1.bf16.msra.mxu0 %v258
  %1356 = vmatprep.subr.bf16.mxu0 0
  %1357 = vmatpush1.bf16.msra.mxu0 %v259
  %1358 = vmatprep.subr.bf16.mxu0 0
  %1359 = vmatpush1.bf16.msra.mxu0 %v260
  %1360 = vmatprep.subr.bf16.mxu0 0
  %1361 = vmatpush1.bf16.msra.mxu0 %v261
  %1362 = vmatprep.subr.bf16.mxu0 0
  %1363 = vmatpush1.bf16.msra.mxu0 %v262
  %1364 = vmatprep.subr.bf16.mxu0 0
  %1365 = vmatpush1.bf16.msra.mxu0 %v263
  %1366 = vmatprep.mubr.bf16.mxu0 %v1327
  %1367 = vmatmul.mubr.bf16.gmra.mrb[0].mxu0 %v1326
  %v1368 = vpop.f32.mrb[0].mxu0
  %v1369 = vadd.f32 %v104, %v1368
  %v1370 = vpop.f32.mrb[0].mxu0
  %v1371 = vpop.f32.mrb[0].mxu0
  %v1372 = vpop.f32.mrb[0].mxu0
  %1373 = vdwg.mxu0
  %1374 = vmatprep.subr.bf16.mxu0 0
  %1375 = vmatpush1.bf16.msra.mxu0 %v264
  %1376 = vmatprep.subr.bf16.mxu0 0
  %1377 = vmatpush1.bf16.msra.mxu0 %v265
  %1378 = vmatprep.subr.bf16.mxu0 0
  %1379 = vmatpush1.bf16.msra.mxu0 %v266
  %1380 = vmatprep.subr.bf16.mxu0 0
  %1381 = vmatpush1.bf16.msra.mxu0 %v267
  %1382 = vmatprep.subr.bf16.mxu0 0
  %1383 = vmatpush1.bf16.msra.mxu0 %v268
  %1384 = vmatprep.subr.bf16.mxu0 0
  %1385 = vmatpush1.bf16.msra.mxu0 %v269
  %1386 = vmatprep.subr.bf16.mxu0 0
  %1387 = vmatpush1.bf16.msra.mxu0 %v270
  %1388 = vmatprep.subr.bf16.mxu0 0
  %1389 = vmatpush1.bf16.msra.mxu0 %v271
  %1390 = vmatprep.subr.bf16.mxu0 0
  %1391 = vmatpush1.bf16.msra.mxu0 %v272
  %1392 = vmatprep.subr.bf16.mxu0 0
  %1393 = vmatpush1.bf16.msra.mxu0 %v273
  %1394 = vmatprep.subr.bf16.mxu0 0
  %1395 = vmatpush1.bf16.msra.mxu0 %v274
  %1396 = vmatprep.subr.bf16.mxu0 0
  %1397 = vmatpush1.bf16.msra.mxu0 %v275
  %1398 = vmatprep.subr.bf16.mxu0 0
  %1399 = vmatpush1.bf16.msra.mxu0 %v276
  %1400 = vmatprep.subr.bf16.mxu0 0
  %1401 = vmatpush1.bf16.msra.mxu0 %v277
  %1402 = vmatprep.subr.bf16.mxu0 0
  %1403 = vmatpush1.bf16.msra.mxu0 %v278
  %1404 = vmatprep.subr.bf16.mxu0 0
  %1405 = vmatpush1.bf16.msra.mxu0 %v279
  %1406 = vmatprep.mubr.bf16.mxu0 %v1329
  %1407 = vmatmul.mubr.bf16.gmra.mrb[0].mxu0 %v1328
  %v1408 = vpop.f32.mrb[0].mxu0
  %v1409 = vadd.f32 %v1369, %v1408
  %v1410 = vpop.f32.mrb[0].mxu0
  %v1411 = vpop.f32.mrb[0].mxu0
  %v1412 = vpop.f32.mrb[0].mxu0
  %1413 = vdwg.mxu0
  %v1414 = vmax.f32 %v1409, 0.0
  %v1415 = vpack.c.bf16 %v1414, %v1414
  %s1416 = scalar_lea.vmem %s3, 320
  %v1417 = vld [vmem:[%s1416] sm:$0xf]
  %v1418 = vld [vmem:[%s1416 + $0x4] sm:$0xf]
  %v1419 = vld [vmem:[%s1416 + $0x8] sm:$0xf]
  %v1420 = vld [vmem:[%s1416 + $0xc] sm:$0xf]
  %v1421 = vld [vmem:[%s1416 + $0x10] sm:$0xf]
  %v1422 = vld [vmem:[%s1416 + $0x14] sm:$0xf]
  %v1423 = vld [vmem:[%s1416 + $0x18] sm:$0xf]
  %v1424 = vld [vmem:[%s1416 + $0x1c] sm:$0xf]
  %v1425 = vld [vmem:[%s1416 + $0x20] sm:$0xf]
  %v1426 = vld [vmem:[%s1416 + $0x24] sm:$0xf]
  %v1427 = vld [vmem:[%s1416 + $0x28] sm:$0xf]
  %v1428 = vld [vmem:[%s1416 + $0x2c] sm:$0xf]
  %v1429 = vld [vmem:[%s1416 + $0x30] sm:$0xf]
  %v1430 = vld [vmem:[%s1416 + $0x34] sm:$0xf]
  %v1431 = vld [vmem:[%s1416 + $0x38] sm:$0xf]
  %v1432 = vld [vmem:[%s1416 + $0x3c] sm:$0xf]
  %v1449 = vunpack.c.l.b16 %v1417
  %v1450 = vunpack.c.l.b16 %v1418
  %v1451 = vunpack.c.l.b16 %v1419
  %v1452 = vunpack.c.l.b16 %v1420
  %v1453 = vunpack.c.l.b16 %v1421
  %v1454 = vunpack.c.l.b16 %v1422
  %v1455 = vunpack.c.l.b16 %v1423
  %v1456 = vunpack.c.l.b16 %v1424
  %v1457 = vunpack.c.l.b16 %v1425
  %v1458 = vunpack.c.l.b16 %v1426
  %v1459 = vunpack.c.l.b16 %v1427
  %v1460 = vunpack.c.l.b16 %v1428
  %v1461 = vunpack.c.l.b16 %v1429
  %v1462 = vunpack.c.l.b16 %v1430
  %v1463 = vunpack.c.l.b16 %v1431
  %v1464 = vunpack.c.l.b16 %v1432
  %v1465 = vpack.c.b16 %v1450, %v1449
  %v1466 = vpack.c.b16 %v1452, %v1451
  %v1467 = vpack.c.b16 %v1454, %v1453
  %v1468 = vpack.c.b16 %v1456, %v1455
  %v1469 = vpack.c.b16 %v1458, %v1457
  %v1470 = vpack.c.b16 %v1460, %v1459
  %v1471 = vpack.c.b16 %v1462, %v1461
  %v1472 = vpack.c.b16 %v1464, %v1463
  %1481 = vmatprep.subr.bf16.mxu0 0
  %1482 = vmatpush1.bf16.msra.mxu0 %v1465
  %1483 = vmatprep.subr.bf16.mxu0 0
  %1484 = vmatpush1.bf16.msra.mxu0 %v1466
  %1485 = vmatprep.subr.bf16.mxu0 0
  %1486 = vmatpush1.bf16.msra.mxu0 %v1467
  %1487 = vmatprep.subr.bf16.mxu0 0
  %1488 = vmatpush1.bf16.msra.mxu0 %v1468
  %1489 = vmatprep.subr.bf16.mxu0 0
  %1490 = vmatpush1.bf16.msra.mxu0 %v1469
  %1491 = vmatprep.subr.bf16.mxu0 0
  %1492 = vmatpush1.bf16.msra.mxu0 %v1470
  %1493 = vmatprep.subr.bf16.mxu0 0
  %1494 = vmatpush1.bf16.msra.mxu0 %v1471
  %1495 = vmatprep.subr.bf16.mxu0 0
  %1496 = vmatpush1.bf16.msra.mxu0 %v1472
  %1497 = vmatprep.subr.bf16.mxu0 0
  %1498 = vmatpush1.bf16.msra.mxu0 0
  %1499 = vmatprep.subr.bf16.mxu0 0
  %1500 = vmatpush1.bf16.msra.mxu0 0
  %1501 = vmatprep.subr.bf16.mxu0 0
  %1502 = vmatpush1.bf16.msra.mxu0 0
  %1503 = vmatprep.subr.bf16.mxu0 0
  %1504 = vmatpush1.bf16.msra.mxu0 0
  %1505 = vmatprep.subr.bf16.mxu0 0
  %1506 = vmatpush1.bf16.msra.mxu0 0
  %1507 = vmatprep.subr.bf16.mxu0 0
  %1508 = vmatpush1.bf16.msra.mxu0 0
  %1509 = vmatprep.subr.bf16.mxu0 0
  %1510 = vmatpush1.bf16.msra.mxu0 0
  %1511 = vmatprep.subr.bf16.mxu0 0
  %1512 = vmatpush1.bf16.msra.mxu0 0
  %1513 = vmatprep.mubr.bf16.mxu0 0
  %1514 = vmatmul.mubr.bf16.gmra.mrb[0].mxu0 %v1415
  %v1515 = vpop.f32.mrb[0].mxu0
  %v1516 = vadd.f32 0.0, %v1515
  %v1517 = vpop.f32.mrb[0].mxu0
  %v1518 = vpop.f32.mrb[0].mxu0
  %v1519 = vpop.f32.mrb[0].mxu0
  %1520 = vdwg.mxu0
  %v1521 = vadd.f32 %v1316, %v1516
  %s1522 = scalar_lea.vmem %s0, 96
  %v1523 = vld [vmem:[%s1522] sm:$0xff]
  %v1524 = vld [vmem:[%s1522 + $0x8] sm:$0xff]
  %v1527 = vunpack.c.l.b16 %v1523
  %v1528 = vunpack.c.h.b16 %v1523
  %v1529 = vunpack.c.l.b16 %v1524
  %v1530 = vunpack.c.h.b16 %v1524
  %v1531 = vpack.c.b16 %v1527, %v1527
  %v1532 = vpack.c.b16 %v1528, %v1528
  %v1533 = vpack.c.b16 %v1529, %v1529
  %v1534 = vpack.c.b16 %v1530, %v1530
  %1539 = vmatprep.subr.bf16.mxu0 0
  %1540 = vmatpush1.bf16.msra.mxu0 %v248
  %1541 = vmatprep.subr.bf16.mxu0 0
  %1542 = vmatpush1.bf16.msra.mxu0 %v249
  %1543 = vmatprep.subr.bf16.mxu0 0
  %1544 = vmatpush1.bf16.msra.mxu0 %v250
  %1545 = vmatprep.subr.bf16.mxu0 0
  %1546 = vmatpush1.bf16.msra.mxu0 %v251
  %1547 = vmatprep.subr.bf16.mxu0 0
  %1548 = vmatpush1.bf16.msra.mxu0 %v252
  %1549 = vmatprep.subr.bf16.mxu0 0
  %1550 = vmatpush1.bf16.msra.mxu0 %v253
  %1551 = vmatprep.subr.bf16.mxu0 0
  %1552 = vmatpush1.bf16.msra.mxu0 %v254
  %1553 = vmatprep.subr.bf16.mxu0 0
  %1554 = vmatpush1.bf16.msra.mxu0 %v255
  %1555 = vmatprep.subr.bf16.mxu0 0
  %1556 = vmatpush1.bf16.msra.mxu0 %v256
  %1557 = vmatprep.subr.bf16.mxu0 0
  %1558 = vmatpush1.bf16.msra.mxu0 %v257
  %1559 = vmatprep.subr.bf16.mxu0 0
  %1560 = vmatpush1.bf16.msra.mxu0 %v258
  %1561 = vmatprep.subr.bf16.mxu0 0
  %1562 = vmatpush1.bf16.msra.mxu0 %v259
  %1563 = vmatprep.subr.bf16.mxu0 0
  %1564 = vmatpush1.bf16.msra.mxu0 %v260
  %1565 = vmatprep.subr.bf16.mxu0 0
  %1566 = vmatpush1.bf16.msra.mxu0 %v261
  %1567 = vmatprep.subr.bf16.mxu0 0
  %1568 = vmatpush1.bf16.msra.mxu0 %v262
  %1569 = vmatprep.subr.bf16.mxu0 0
  %1570 = vmatpush1.bf16.msra.mxu0 %v263
  %1571 = vmatprep.mubr.bf16.mxu0 %v1532
  %1572 = vmatmul.mubr.bf16.gmra.mrb[0].mxu0 %v1531
  %v1573 = vpop.f32.mrb[0].mxu0
  %v1574 = vadd.f32 %v104, %v1573
  %v1575 = vpop.f32.mrb[0].mxu0
  %v1576 = vpop.f32.mrb[0].mxu0
  %v1577 = vpop.f32.mrb[0].mxu0
  %1578 = vdwg.mxu0
  %1579 = vmatprep.subr.bf16.mxu0 0
  %1580 = vmatpush1.bf16.msra.mxu0 %v264
  %1581 = vmatprep.subr.bf16.mxu0 0
  %1582 = vmatpush1.bf16.msra.mxu0 %v265
  %1583 = vmatprep.subr.bf16.mxu0 0
  %1584 = vmatpush1.bf16.msra.mxu0 %v266
  %1585 = vmatprep.subr.bf16.mxu0 0
  %1586 = vmatpush1.bf16.msra.mxu0 %v267
  %1587 = vmatprep.subr.bf16.mxu0 0
  %1588 = vmatpush1.bf16.msra.mxu0 %v268
  %1589 = vmatprep.subr.bf16.mxu0 0
  %1590 = vmatpush1.bf16.msra.mxu0 %v269
  %1591 = vmatprep.subr.bf16.mxu0 0
  %1592 = vmatpush1.bf16.msra.mxu0 %v270
  %1593 = vmatprep.subr.bf16.mxu0 0
  %1594 = vmatpush1.bf16.msra.mxu0 %v271
  %1595 = vmatprep.subr.bf16.mxu0 0
  %1596 = vmatpush1.bf16.msra.mxu0 %v272
  %1597 = vmatprep.subr.bf16.mxu0 0
  %1598 = vmatpush1.bf16.msra.mxu0 %v273
  %1599 = vmatprep.subr.bf16.mxu0 0
  %1600 = vmatpush1.bf16.msra.mxu0 %v274
  %1601 = vmatprep.subr.bf16.mxu0 0
  %1602 = vmatpush1.bf16.msra.mxu0 %v275
  %1603 = vmatprep.subr.bf16.mxu0 0
  %1604 = vmatpush1.bf16.msra.mxu0 %v276
  %1605 = vmatprep.subr.bf16.mxu0 0
  %1606 = vmatpush1.bf16.msra.mxu0 %v277
  %1607 = vmatprep.subr.bf16.mxu0 0
  %1608 = vmatpush1.bf16.msra.mxu0 %v278
  %1609 = vmatprep.subr.bf16.mxu0 0
  %1610 = vmatpush1.bf16.msra.mxu0 %v279
  %1611 = vmatprep.mubr.bf16.mxu0 %v1534
  %1612 = vmatmul.mubr.bf16.gmra.mrb[0].mxu0 %v1533
  %v1613 = vpop.f32.mrb[0].mxu0
  %v1614 = vadd.f32 %v1574, %v1613
  %v1615 = vpop.f32.mrb[0].mxu0
  %v1616 = vpop.f32.mrb[0].mxu0
  %v1617 = vpop.f32.mrb[0].mxu0
  %1618 = vdwg.mxu0
  %v1619 = vmax.f32 %v1614, 0.0
  %v1620 = vpack.c.bf16 %v1619, %v1619
  %s1621 = scalar_lea.vmem %s3, 384
  %v1622 = vld [vmem:[%s1621] sm:$0xf]
  %v1623 = vld [vmem:[%s1621 + $0x4] sm:$0xf]
  %v1624 = vld [vmem:[%s1621 + $0x8] sm:$0xf]
  %v1625 = vld [vmem:[%s1621 + $0xc] sm:$0xf]
  %v1626 = vld [vmem:[%s1621 + $0x10] sm:$0xf]
  %v1627 = vld [vmem:[%s1621 + $0x14] sm:$0xf]
  %v1628 = vld [vmem:[%s1621 + $0x18] sm:$0xf]
  %v1629 = vld [vmem:[%s1621 + $0x1c] sm:$0xf]
  %v1630 = vld [vmem:[%s1621 + $0x20] sm:$0xf]
  %v1631 = vld [vmem:[%s1621 + $0x24] sm:$0xf]
  %v1632 = vld [vmem:[%s1621 + $0x28] sm:$0xf]
  %v1633 = vld [vmem:[%s1621 + $0x2c] sm:$0xf]
  %v1634 = vld [vmem:[%s1621 + $0x30] sm:$0xf]
  %v1635 = vld [vmem:[%s1621 + $0x34] sm:$0xf]
  %v1636 = vld [vmem:[%s1621 + $0x38] sm:$0xf]
  %v1637 = vld [vmem:[%s1621 + $0x3c] sm:$0xf]
  %v1654 = vunpack.c.l.b16 %v1622
  %v1655 = vunpack.c.l.b16 %v1623
  %v1656 = vunpack.c.l.b16 %v1624
  %v1657 = vunpack.c.l.b16 %v1625
  %v1658 = vunpack.c.l.b16 %v1626
  %v1659 = vunpack.c.l.b16 %v1627
  %v1660 = vunpack.c.l.b16 %v1628
  %v1661 = vunpack.c.l.b16 %v1629
  %v1662 = vunpack.c.l.b16 %v1630
  %v1663 = vunpack.c.l.b16 %v1631
  %v1664 = vunpack.c.l.b16 %v1632
  %v1665 = vunpack.c.l.b16 %v1633
  %v1666 = vunpack.c.l.b16 %v1634
  %v1667 = vunpack.c.l.b16 %v1635
  %v1668 = vunpack.c.l.b16 %v1636
  %v1669 = vunpack.c.l.b16 %v1637
  %v1670 = vpack.c.b16 %v1655, %v1654
  %v1671 = vpack.c.b16 %v1657, %v1656
  %v1672 = vpack.c.b16 %v1659, %v1658
  %v1673 = vpack.c.b16 %v1661, %v1660
  %v1674 = vpack.c.b16 %v1663, %v1662
  %v1675 = vpack.c.b16 %v1665, %v1664
  %v1676 = vpack.c.b16 %v1667, %v1666
  %v1677 = vpack.c.b16 %v1669, %v1668
  %1686 = vmatprep.subr.bf16.mxu0 0
  %1687 = vmatpush1.bf16.msra.mxu0 %v1670
  %1688 = vmatprep.subr.bf16.mxu0 0
  %1689 = vmatpush1.bf16.msra.mxu0 %v1671
  %1690 = vmatprep.subr.bf16.mxu0 0
  %1691 = vmatpush1.bf16.msra.mxu0 %v1672
  %1692 = vmatprep.subr.bf16.mxu0 0
  %1693 = vmatpush1.bf16.msra.mxu0 %v1673
  %1694 = vmatprep.subr.bf16.mxu0 0
  %1695 = vmatpush1.bf16.msra.mxu0 %v1674
  %1696 = vmatprep.subr.bf16.mxu0 0
  %1697 = vmatpush1.bf16.msra.mxu0 %v1675
  %1698 = vmatprep.subr.bf16.mxu0 0
  %1699 = vmatpush1.bf16.msra.mxu0 %v1676
  %1700 = vmatprep.subr.bf16.mxu0 0
  %1701 = vmatpush1.bf16.msra.mxu0 %v1677
  %1702 = vmatprep.subr.bf16.mxu0 0
  %1703 = vmatpush1.bf16.msra.mxu0 0
  %1704 = vmatprep.subr.bf16.mxu0 0
  %1705 = vmatpush1.bf16.msra.mxu0 0
  %1706 = vmatprep.subr.bf16.mxu0 0
  %1707 = vmatpush1.bf16.msra.mxu0 0
  %1708 = vmatprep.subr.bf16.mxu0 0
  %1709 = vmatpush1.bf16.msra.mxu0 0
  %1710 = vmatprep.subr.bf16.mxu0 0
  %1711 = vmatpush1.bf16.msra.mxu0 0
  %1712 = vmatprep.subr.bf16.mxu0 0
  %1713 = vmatpush1.bf16.msra.mxu0 0
  %1714 = vmatprep.subr.bf16.mxu0 0
  %1715 = vmatpush1.bf16.msra.mxu0 0
  %1716 = vmatprep.subr.bf16.mxu0 0
  %1717 = vmatpush1.bf16.msra.mxu0 0
  %1718 = vmatprep.mubr.bf16.mxu0 0
  %1719 = vmatmul.mubr.bf16.gmra.mrb[0].mxu0 %v1620
  %v1720 = vpop.f32.mrb[0].mxu0
  %v1721 = vadd.f32 0.0, %v1720
  %v1722 = vpop.f32.mrb[0].mxu0
  %v1723 = vpop.f32.mrb[0].mxu0
  %v1724 = vpop.f32.mrb[0].mxu0
  %1725 = vdwg.mxu0
  %v1726 = vadd.f32 %v1521, %v1721
  %s1727 = scalar_lea.vmem %s0, 112
  %v1728 = vld [vmem:[%s1727] sm:$0xff]
  %v1729 = vld [vmem:[%s1727 + $0x8] sm:$0xff]
  %v1732 = vunpack.c.l.b16 %v1728
  %v1733 = vunpack.c.h.b16 %v1728
  %v1734 = vunpack.c.l.b16 %v1729
  %v1735 = vunpack.c.h.b16 %v1729
  %v1736 = vpack.c.b16 %v1732, %v1732
  %v1737 = vpack.c.b16 %v1733, %v1733
  %v1738 = vpack.c.b16 %v1734, %v1734
  %v1739 = vpack.c.b16 %v1735, %v1735
  %1744 = vmatprep.subr.bf16.mxu0 0
  %1745 = vmatpush1.bf16.msra.mxu0 %v248
  %1746 = vmatprep.subr.bf16.mxu0 0
  %1747 = vmatpush1.bf16.msra.mxu0 %v249
  %1748 = vmatprep.subr.bf16.mxu0 0
  %1749 = vmatpush1.bf16.msra.mxu0 %v250
  %1750 = vmatprep.subr.bf16.mxu0 0
  %1751 = vmatpush1.bf16.msra.mxu0 %v251
  %1752 = vmatprep.subr.bf16.mxu0 0
  %1753 = vmatpush1.bf16.msra.mxu0 %v252
  %1754 = vmatprep.subr.bf16.mxu0 0
  %1755 = vmatpush1.bf16.msra.mxu0 %v253
  %1756 = vmatprep.subr.bf16.mxu0 0
  %1757 = vmatpush1.bf16.msra.mxu0 %v254
  %1758 = vmatprep.subr.bf16.mxu0 0
  %1759 = vmatpush1.bf16.msra.mxu0 %v255
  %1760 = vmatprep.subr.bf16.mxu0 0
  %1761 = vmatpush1.bf16.msra.mxu0 %v256
  %1762 = vmatprep.subr.bf16.mxu0 0
  %1763 = vmatpush1.bf16.msra.mxu0 %v257
  %1764 = vmatprep.subr.bf16.mxu0 0
  %1765 = vmatpush1.bf16.msra.mxu0 %v258
  %1766 = vmatprep.subr.bf16.mxu0 0
  %1767 = vmatpush1.bf16.msra.mxu0 %v259
  %1768 = vmatprep.subr.bf16.mxu0 0
  %1769 = vmatpush1.bf16.msra.mxu0 %v260
  %1770 = vmatprep.subr.bf16.mxu0 0
  %1771 = vmatpush1.bf16.msra.mxu0 %v261
  %1772 = vmatprep.subr.bf16.mxu0 0
  %1773 = vmatpush1.bf16.msra.mxu0 %v262
  %1774 = vmatprep.subr.bf16.mxu0 0
  %1775 = vmatpush1.bf16.msra.mxu0 %v263
  %1776 = vmatprep.mubr.bf16.mxu0 %v1737
  %1777 = vmatmul.mubr.bf16.gmra.mrb[0].mxu0 %v1736
  %v1778 = vpop.f32.mrb[0].mxu0
  %v1779 = vadd.f32 %v104, %v1778
  %v1780 = vpop.f32.mrb[0].mxu0
  %v1781 = vpop.f32.mrb[0].mxu0
  %v1782 = vpop.f32.mrb[0].mxu0
  %1783 = vdwg.mxu0
  %1784 = vmatprep.subr.bf16.mxu0 0
  %1785 = vmatpush1.bf16.msra.mxu0 %v264
  %1786 = vmatprep.subr.bf16.mxu0 0
  %1787 = vmatpush1.bf16.msra.mxu0 %v265
  %1788 = vmatprep.subr.bf16.mxu0 0
  %1789 = vmatpush1.bf16.msra.mxu0 %v266
  %1790 = vmatprep.subr.bf16.mxu0 0
  %1791 = vmatpush1.bf16.msra.mxu0 %v267
  %1792 = vmatprep.subr.bf16.mxu0 0
  %1793 = vmatpush1.bf16.msra.mxu0 %v268
  %1794 = vmatprep.subr.bf16.mxu0 0
  %1795 = vmatpush1.bf16.msra.mxu0 %v269
  %1796 = vmatprep.subr.bf16.mxu0 0
  %1797 = vmatpush1.bf16.msra.mxu0 %v270
  %1798 = vmatprep.subr.bf16.mxu0 0
  %1799 = vmatpush1.bf16.msra.mxu0 %v271
  %1800 = vmatprep.subr.bf16.mxu0 0
  %1801 = vmatpush1.bf16.msra.mxu0 %v272
  %1802 = vmatprep.subr.bf16.mxu0 0
  %1803 = vmatpush1.bf16.msra.mxu0 %v273
  %1804 = vmatprep.subr.bf16.mxu0 0
  %1805 = vmatpush1.bf16.msra.mxu0 %v274
  %1806 = vmatprep.subr.bf16.mxu0 0
  %1807 = vmatpush1.bf16.msra.mxu0 %v275
  %1808 = vmatprep.subr.bf16.mxu0 0
  %1809 = vmatpush1.bf16.msra.mxu0 %v276
  %1810 = vmatprep.subr.bf16.mxu0 0
  %1811 = vmatpush1.bf16.msra.mxu0 %v277
  %1812 = vmatprep.subr.bf16.mxu0 0
  %1813 = vmatpush1.bf16.msra.mxu0 %v278
  %1814 = vmatprep.subr.bf16.mxu0 0
  %1815 = vmatpush1.bf16.msra.mxu0 %v279
  %1816 = vmatprep.mubr.bf16.mxu0 %v1739
  %1817 = vmatmul.mubr.bf16.gmra.mrb[0].mxu0 %v1738
  %v1818 = vpop.f32.mrb[0].mxu0
  %v1819 = vadd.f32 %v1779, %v1818
  %v1820 = vpop.f32.mrb[0].mxu0
  %v1821 = vpop.f32.mrb[0].mxu0
  %v1822 = vpop.f32.mrb[0].mxu0
  %1823 = vdwg.mxu0
  %v1824 = vmax.f32 %v1819, 0.0
  %v1825 = vpack.c.bf16 %v1824, %v1824
  %s1826 = scalar_lea.vmem %s3, 448
  %v1827 = vld [vmem:[%s1826] sm:$0xf]
  %v1828 = vld [vmem:[%s1826 + $0x4] sm:$0xf]
  %v1829 = vld [vmem:[%s1826 + $0x8] sm:$0xf]
  %v1830 = vld [vmem:[%s1826 + $0xc] sm:$0xf]
  %v1831 = vld [vmem:[%s1826 + $0x10] sm:$0xf]
  %v1832 = vld [vmem:[%s1826 + $0x14] sm:$0xf]
  %v1833 = vld [vmem:[%s1826 + $0x18] sm:$0xf]
  %v1834 = vld [vmem:[%s1826 + $0x1c] sm:$0xf]
  %v1835 = vld [vmem:[%s1826 + $0x20] sm:$0xf]
  %v1836 = vld [vmem:[%s1826 + $0x24] sm:$0xf]
  %v1837 = vld [vmem:[%s1826 + $0x28] sm:$0xf]
  %v1838 = vld [vmem:[%s1826 + $0x2c] sm:$0xf]
  %v1839 = vld [vmem:[%s1826 + $0x30] sm:$0xf]
  %v1840 = vld [vmem:[%s1826 + $0x34] sm:$0xf]
  %v1841 = vld [vmem:[%s1826 + $0x38] sm:$0xf]
  %v1842 = vld [vmem:[%s1826 + $0x3c] sm:$0xf]
  %v1859 = vunpack.c.l.b16 %v1827
  %v1860 = vunpack.c.l.b16 %v1828
  %v1861 = vunpack.c.l.b16 %v1829
  %v1862 = vunpack.c.l.b16 %v1830
  %v1863 = vunpack.c.l.b16 %v1831
  %v1864 = vunpack.c.l.b16 %v1832
  %v1865 = vunpack.c.l.b16 %v1833
  %v1866 = vunpack.c.l.b16 %v1834
  %v1867 = vunpack.c.l.b16 %v1835
  %v1868 = vunpack.c.l.b16 %v1836
  %v1869 = vunpack.c.l.b16 %v1837
  %v1870 = vunpack.c.l.b16 %v1838
  %v1871 = vunpack.c.l.b16 %v1839
  %v1872 = vunpack.c.l.b16 %v1840
  %v1873 = vunpack.c.l.b16 %v1841
  %v1874 = vunpack.c.l.b16 %v1842
  %v1875 = vpack.c.b16 %v1860, %v1859
  %v1876 = vpack.c.b16 %v1862, %v1861
  %v1877 = vpack.c.b16 %v1864, %v1863
  %v1878 = vpack.c.b16 %v1866, %v1865
  %v1879 = vpack.c.b16 %v1868, %v1867
  %v1880 = vpack.c.b16 %v1870, %v1869
  %v1881 = vpack.c.b16 %v1872, %v1871
  %v1882 = vpack.c.b16 %v1874, %v1873
  %1891 = vmatprep.subr.bf16.mxu0 0
  %1892 = vmatpush1.bf16.msra.mxu0 %v1875
  %1893 = vmatprep.subr.bf16.mxu0 0
  %1894 = vmatpush1.bf16.msra.mxu0 %v1876
  %1895 = vmatprep.subr.bf16.mxu0 0
  %1896 = vmatpush1.bf16.msra.mxu0 %v1877
  %1897 = vmatprep.subr.bf16.mxu0 0
  %1898 = vmatpush1.bf16.msra.mxu0 %v1878
  %1899 = vmatprep.subr.bf16.mxu0 0
  %1900 = vmatpush1.bf16.msra.mxu0 %v1879
  %1901 = vmatprep.subr.bf16.mxu0 0
  %1902 = vmatpush1.bf16.msra.mxu0 %v1880
  %1903 = vmatprep.subr.bf16.mxu0 0
  %1904 = vmatpush1.bf16.msra.mxu0 %v1881
  %1905 = vmatprep.subr.bf16.mxu0 0
  %1906 = vmatpush1.bf16.msra.mxu0 %v1882
  %1907 = vmatprep.subr.bf16.mxu0 0
  %1908 = vmatpush1.bf16.msra.mxu0 0
  %1909 = vmatprep.subr.bf16.mxu0 0
  %1910 = vmatpush1.bf16.msra.mxu0 0
  %1911 = vmatprep.subr.bf16.mxu0 0
  %1912 = vmatpush1.bf16.msra.mxu0 0
  %1913 = vmatprep.subr.bf16.mxu0 0
  %1914 = vmatpush1.bf16.msra.mxu0 0
  %1915 = vmatprep.subr.bf16.mxu0 0
  %1916 = vmatpush1.bf16.msra.mxu0 0
  %1917 = vmatprep.subr.bf16.mxu0 0
  %1918 = vmatpush1.bf16.msra.mxu0 0
  %1919 = vmatprep.subr.bf16.mxu0 0
  %1920 = vmatpush1.bf16.msra.mxu0 0
  %1921 = vmatprep.subr.bf16.mxu0 0
  %1922 = vmatpush1.bf16.msra.mxu0 0
  %1923 = vmatprep.mubr.bf16.mxu0 0
  %1924 = vmatmul.mubr.bf16.gmra.mrb[0].mxu0 %v1825
  %v1925 = vpop.f32.mrb[0].mxu0
  %v1926 = vadd.f32 0.0, %v1925
  %v1927 = vpop.f32.mrb[0].mxu0
  %v1928 = vpop.f32.mrb[0].mxu0
  %v1929 = vpop.f32.mrb[0].mxu0
  %1930 = vdwg.mxu0
  %v1931 = vadd.f32 %v1726, %v1926
  %s1932 = scalar_lea.vmem %s0, 128
  %v1933 = vld [vmem:[%s1932] sm:$0xff]
  %v1934 = vld [vmem:[%s1932 + $0x8] sm:$0xff]
  %v1937 = vunpack.c.l.b16 %v1933
  %v1938 = vunpack.c.h.b16 %v1933
  %v1939 = vunpack.c.l.b16 %v1934
  %v1940 = vunpack.c.h.b16 %v1934
  %v1941 = vpack.c.b16 %v1937, %v1937
  %v1942 = vpack.c.b16 %v1938, %v1938
  %v1943 = vpack.c.b16 %v1939, %v1939
  %v1944 = vpack.c.b16 %v1940, %v1940
  %1949 = vmatprep.subr.bf16.mxu0 0
  %1950 = vmatpush1.bf16.msra.mxu0 %v248
  %1951 = vmatprep.subr.bf16.mxu0 0
  %1952 = vmatpush1.bf16.msra.mxu0 %v249
  %1953 = vmatprep.subr.bf16.mxu0 0
  %1954 = vmatpush1.bf16.msra.mxu0 %v250
  %1955 = vmatprep.subr.bf16.mxu0 0
  %1956 = vmatpush1.bf16.msra.mxu0 %v251
  %1957 = vmatprep.subr.bf16.mxu0 0
  %1958 = vmatpush1.bf16.msra.mxu0 %v252
  %1959 = vmatprep.subr.bf16.mxu0 0
  %1960 = vmatpush1.bf16.msra.mxu0 %v253
  %1961 = vmatprep.subr.bf16.mxu0 0
  %1962 = vmatpush1.bf16.msra.mxu0 %v254
  %1963 = vmatprep.subr.bf16.mxu0 0
  %1964 = vmatpush1.bf16.msra.mxu0 %v255
  %1965 = vmatprep.subr.bf16.mxu0 0
  %1966 = vmatpush1.bf16.msra.mxu0 %v256
  %1967 = vmatprep.subr.bf16.mxu0 0
  %1968 = vmatpush1.bf16.msra.mxu0 %v257
  %1969 = vmatprep.subr.bf16.mxu0 0
  %1970 = vmatpush1.bf16.msra.mxu0 %v258
  %1971 = vmatprep.subr.bf16.mxu0 0
  %1972 = vmatpush1.bf16.msra.mxu0 %v259
  %1973 = vmatprep.subr.bf16.mxu0 0
  %1974 = vmatpush1.bf16.msra.mxu0 %v260
  %1975 = vmatprep.subr.bf16.mxu0 0
  %1976 = vmatpush1.bf16.msra.mxu0 %v261
  %1977 = vmatprep.subr.bf16.mxu0 0
  %1978 = vmatpush1.bf16.msra.mxu0 %v262
  %1979 = vmatprep.subr.bf16.mxu0 0
  %1980 = vmatpush1.bf16.msra.mxu0 %v263
  %1981 = vmatprep.mubr.bf16.mxu0 %v1942
  %1982 = vmatmul.mubr.bf16.gmra.mrb[0].mxu0 %v1941
  %v1983 = vpop.f32.mrb[0].mxu0
  %v1984 = vadd.f32 %v104, %v1983
  %v1985 = vpop.f32.mrb[0].mxu0
  %v1986 = vpop.f32.mrb[0].mxu0
  %v1987 = vpop.f32.mrb[0].mxu0
  %1988 = vdwg.mxu0
  %1989 = vmatprep.subr.bf16.mxu0 0
  %1990 = vmatpush1.bf16.msra.mxu0 %v264
  %1991 = vmatprep.subr.bf16.mxu0 0
  %1992 = vmatpush1.bf16.msra.mxu0 %v265
  %1993 = vmatprep.subr.bf16.mxu0 0
  %1994 = vmatpush1.bf16.msra.mxu0 %v266
  %1995 = vmatprep.subr.bf16.mxu0 0
  %1996 = vmatpush1.bf16.msra.mxu0 %v267
  %1997 = vmatprep.subr.bf16.mxu0 0
  %1998 = vmatpush1.bf16.msra.mxu0 %v268
  %1999 = vmatprep.subr.bf16.mxu0 0
  %2000 = vmatpush1.bf16.msra.mxu0 %v269
  %2001 = vmatprep.subr.bf16.mxu0 0
  %2002 = vmatpush1.bf16.msra.mxu0 %v270
  %2003 = vmatprep.subr.bf16.mxu0 0
  %2004 = vmatpush1.bf16.msra.mxu0 %v271
  %2005 = vmatprep.subr.bf16.mxu0 0
  %2006 = vmatpush1.bf16.msra.mxu0 %v272
  %2007 = vmatprep.subr.bf16.mxu0 0
  %2008 = vmatpush1.bf16.msra.mxu0 %v273
  %2009 = vmatprep.subr.bf16.mxu0 0
  %2010 = vmatpush1.bf16.msra.mxu0 %v274
  %2011 = vmatprep.subr.bf16.mxu0 0
  %2012 = vmatpush1.bf16.msra.mxu0 %v275
  %2013 = vmatprep.subr.bf16.mxu0 0
  %2014 = vmatpush1.bf16.msra.mxu0 %v276
  %2015 = vmatprep.subr.bf16.mxu0 0
  %2016 = vmatpush1.bf16.msra.mxu0 %v277
  %2017 = vmatprep.subr.bf16.mxu0 0
  %2018 = vmatpush1.bf16.msra.mxu0 %v278
  %2019 = vmatprep.subr.bf16.mxu0 0
  %2020 = vmatpush1.bf16.msra.mxu0 %v279
  %2021 = vmatprep.mubr.bf16.mxu0 %v1944
  %2022 = vmatmul.mubr.bf16.gmra.mrb[0].mxu0 %v1943
  %v2023 = vpop.f32.mrb[0].mxu0
  %v2024 = vadd.f32 %v1984, %v2023
  %v2025 = vpop.f32.mrb[0].mxu0
  %v2026 = vpop.f32.mrb[0].mxu0
  %v2027 = vpop.f32.mrb[0].mxu0
  %2028 = vdwg.mxu0
  %v2029 = vmax.f32 %v2024, 0.0
  %v2030 = vpack.c.bf16 %v2029, %v2029
  %s2031 = scalar_lea.vmem %s3, 512
  %v2032 = vld [vmem:[%s2031] sm:$0xf]
  %v2033 = vld [vmem:[%s2031 + $0x4] sm:$0xf]
  %v2034 = vld [vmem:[%s2031 + $0x8] sm:$0xf]
  %v2035 = vld [vmem:[%s2031 + $0xc] sm:$0xf]
  %v2036 = vld [vmem:[%s2031 + $0x10] sm:$0xf]
  %v2037 = vld [vmem:[%s2031 + $0x14] sm:$0xf]
  %v2038 = vld [vmem:[%s2031 + $0x18] sm:$0xf]
  %v2039 = vld [vmem:[%s2031 + $0x1c] sm:$0xf]
  %v2040 = vld [vmem:[%s2031 + $0x20] sm:$0xf]
  %v2041 = vld [vmem:[%s2031 + $0x24] sm:$0xf]
  %v2042 = vld [vmem:[%s2031 + $0x28] sm:$0xf]
  %v2043 = vld [vmem:[%s2031 + $0x2c] sm:$0xf]
  %v2044 = vld [vmem:[%s2031 + $0x30] sm:$0xf]
  %v2045 = vld [vmem:[%s2031 + $0x34] sm:$0xf]
  %v2046 = vld [vmem:[%s2031 + $0x38] sm:$0xf]
  %v2047 = vld [vmem:[%s2031 + $0x3c] sm:$0xf]
  %v2064 = vunpack.c.l.b16 %v2032
  %v2065 = vunpack.c.l.b16 %v2033
  %v2066 = vunpack.c.l.b16 %v2034
  %v2067 = vunpack.c.l.b16 %v2035
  %v2068 = vunpack.c.l.b16 %v2036
  %v2069 = vunpack.c.l.b16 %v2037
  %v2070 = vunpack.c.l.b16 %v2038
  %v2071 = vunpack.c.l.b16 %v2039
  %v2072 = vunpack.c.l.b16 %v2040
  %v2073 = vunpack.c.l.b16 %v2041
  %v2074 = vunpack.c.l.b16 %v2042
  %v2075 = vunpack.c.l.b16 %v2043
  %v2076 = vunpack.c.l.b16 %v2044
  %v2077 = vunpack.c.l.b16 %v2045
  %v2078 = vunpack.c.l.b16 %v2046
  %v2079 = vunpack.c.l.b16 %v2047
  %v2080 = vpack.c.b16 %v2065, %v2064
  %v2081 = vpack.c.b16 %v2067, %v2066
  %v2082 = vpack.c.b16 %v2069, %v2068
  %v2083 = vpack.c.b16 %v2071, %v2070
  %v2084 = vpack.c.b16 %v2073, %v2072
  %v2085 = vpack.c.b16 %v2075, %v2074
  %v2086 = vpack.c.b16 %v2077, %v2076
  %v2087 = vpack.c.b16 %v2079, %v2078
  %2096 = vmatprep.subr.bf16.mxu0 0
  %2097 = vmatpush1.bf16.msra.mxu0 %v2080
  %2098 = vmatprep.subr.bf16.mxu0 0
  %2099 = vmatpush1.bf16.msra.mxu0 %v2081
  %2100 = vmatprep.subr.bf16.mxu0 0
  %2101 = vmatpush1.bf16.msra.mxu0 %v2082
  %2102 = vmatprep.subr.bf16.mxu0 0
  %2103 = vmatpush1.bf16.msra.mxu0 %v2083
  %2104 = vmatprep.subr.bf16.mxu0 0
  %2105 = vmatpush1.bf16.msra.mxu0 %v2084
  %2106 = vmatprep.subr.bf16.mxu0 0
  %2107 = vmatpush1.bf16.msra.mxu0 %v2085
  %2108 = vmatprep.subr.bf16.mxu0 0
  %2109 = vmatpush1.bf16.msra.mxu0 %v2086
  %2110 = vmatprep.subr.bf16.mxu0 0
  %2111 = vmatpush1.bf16.msra.mxu0 %v2087
  %2112 = vmatprep.subr.bf16.mxu0 0
  %2113 = vmatpush1.bf16.msra.mxu0 0
  %2114 = vmatprep.subr.bf16.mxu0 0
  %2115 = vmatpush1.bf16.msra.mxu0 0
  %2116 = vmatprep.subr.bf16.mxu0 0
  %2117 = vmatpush1.bf16.msra.mxu0 0
  %2118 = vmatprep.subr.bf16.mxu0 0
  %2119 = vmatpush1.bf16.msra.mxu0 0
  %2120 = vmatprep.subr.bf16.mxu0 0
  %2121 = vmatpush1.bf16.msra.mxu0 0
  %2122 = vmatprep.subr.bf16.mxu0 0
  %2123 = vmatpush1.bf16.msra.mxu0 0
  %2124 = vmatprep.subr.bf16.mxu0 0
  %2125 = vmatpush1.bf16.msra.mxu0 0
  %2126 = vmatprep.subr.bf16.mxu0 0
  %2127 = vmatpush1.bf16.msra.mxu0 0
  %2128 = vmatprep.mubr.bf16.mxu0 0
  %2129 = vmatmul.mubr.bf16.gmra.mrb[0].mxu0 %v2030
  %v2130 = vpop.f32.mrb[0].mxu0
  %v2131 = vadd.f32 0.0, %v2130
  %v2132 = vpop.f32.mrb[0].mxu0
  %v2133 = vpop.f32.mrb[0].mxu0
  %v2134 = vpop.f32.mrb[0].mxu0
  %2135 = vdwg.mxu0
  %v2136 = vadd.f32 %v1931, %v2131
  %v2137 = vld [vmem:[%s4] sm:$0x1]
  %v2139 = vlaneseq
  %v2140 = vshrl.u32 %v2139, 7
  %v2141 = vsub.s32 0, %v2140
  %v2142 = vrot.slane %v2137, %v2141
  %v2144 = vadd.f32 %v2136, %v2142
  %v2145 = vmax.f32 %v2144, 0.0
  %v2146 = vpack.c.bf16 %v2145, %v2145
  %v2147 = vld [vmem:[%s5] sm:$0xff]
  %v2148 = vld [vmem:[%s5 + $0x8] sm:$0xff]
  %v2149 = vld [vmem:[%s5 + $0x10] sm:$0xff]
  %v2150 = vld [vmem:[%s5 + $0x18] sm:$0xff]
  %v2151 = vld [vmem:[%s5 + $0x20] sm:$0xff]
  %v2152 = vld [vmem:[%s5 + $0x28] sm:$0xff]
  %v2153 = vld [vmem:[%s5 + $0x30] sm:$0xff]
  %v2154 = vld [vmem:[%s5 + $0x38] sm:$0xff]
  %v2155 = vld [vmem:[%s5 + $0x40] sm:$0xff]
  %v2156 = vld [vmem:[%s5 + $0x48] sm:$0xff]
  %v2157 = vld [vmem:[%s5 + $0x50] sm:$0xff]
  %v2158 = vld [vmem:[%s5 + $0x58] sm:$0xff]
  %v2159 = vld [vmem:[%s5 + $0x60] sm:$0xff]
  %v2160 = vld [vmem:[%s5 + $0x68] sm:$0xff]
  %v2161 = vld [vmem:[%s5 + $0x70] sm:$0xff]
  %v2162 = vld [vmem:[%s5 + $0x78] sm:$0xff]
  %v2163 = vld [vmem:[%s5 + $0x80] sm:$0xff]
  %v2164 = vld [vmem:[%s5 + $0x88] sm:$0xff]
  %v2165 = vld [vmem:[%s5 + $0x90] sm:$0xff]
  %v2166 = vld [vmem:[%s5 + $0x98] sm:$0xff]
  %v2167 = vld [vmem:[%s5 + $0xa0] sm:$0xff]
  %v2168 = vld [vmem:[%s5 + $0xa8] sm:$0xff]
  %v2169 = vld [vmem:[%s5 + $0xb0] sm:$0xff]
  %v2170 = vld [vmem:[%s5 + $0xb8] sm:$0xff]
  %v2171 = vld [vmem:[%s5 + $0xc0] sm:$0xff]
  %v2172 = vld [vmem:[%s5 + $0xc8] sm:$0xff]
  %v2173 = vld [vmem:[%s5 + $0xd0] sm:$0xff]
  %v2174 = vld [vmem:[%s5 + $0xd8] sm:$0xff]
  %v2175 = vld [vmem:[%s5 + $0xe0] sm:$0xff]
  %v2176 = vld [vmem:[%s5 + $0xe8] sm:$0xff]
  %v2177 = vld [vmem:[%s5 + $0xf0] sm:$0xff]
  %v2178 = vld [vmem:[%s5 + $0xf8] sm:$0xff]
  %v2179 = vld [vmem:[%s6] sm:$0xf]
  %v2181 = vlaneseq
  %v2182 = vshrl.u32 %v2181, 7
  %v2183 = vsub.s32 0, %v2182
  %v2184 = vrot.slane %v2179, %v2183
  %v2185 = vlaneseq
  %v2186 = vshrl.u32 %v2185, 7
  %v2187 = vsub.s32 1, %v2186
  %v2188 = vrot.slane %v2179, %v2187
  %v2189 = vlaneseq
  %v2190 = vshrl.u32 %v2189, 7
  %v2191 = vsub.s32 2, %v2190
  %v2192 = vrot.slane %v2179, %v2191
  %v2193 = vlaneseq
  %v2194 = vshrl.u32 %v2193, 7
  %v2195 = vsub.s32 3, %v2194
  %v2196 = vrot.slane %v2179, %v2195
  %v2233 = vunpack.c.l.b16 %v2147
  %v2234 = vunpack.c.h.b16 %v2147
  %v2235 = vunpack.c.l.b16 %v2148
  %v2236 = vunpack.c.h.b16 %v2148
  %v2237 = vunpack.c.l.b16 %v2149
  %v2238 = vunpack.c.h.b16 %v2149
  %v2239 = vunpack.c.l.b16 %v2150
  %v2240 = vunpack.c.h.b16 %v2150
  %v2241 = vunpack.c.l.b16 %v2151
  %v2242 = vunpack.c.h.b16 %v2151
  %v2243 = vunpack.c.l.b16 %v2152
  %v2244 = vunpack.c.h.b16 %v2152
  %v2245 = vunpack.c.l.b16 %v2153
  %v2246 = vunpack.c.h.b16 %v2153
  %v2247 = vunpack.c.l.b16 %v2154
  %v2248 = vunpack.c.h.b16 %v2154
  %v2249 = vunpack.c.l.b16 %v2155
  %v2250 = vunpack.c.h.b16 %v2155
  %v2251 = vunpack.c.l.b16 %v2156
  %v2252 = vunpack.c.h.b16 %v2156
  %v2253 = vunpack.c.l.b16 %v2157
  %v2254 = vunpack.c.h.b16 %v2157
  %v2255 = vunpack.c.l.b16 %v2158
  %v2256 = vunpack.c.h.b16 %v2158
  %v2257 = vunpack.c.l.b16 %v2159
  %v2258 = vunpack.c.h.b16 %v2159
  %v2259 = vunpack.c.l.b16 %v2160
  %v2260 = vunpack.c.h.b16 %v2160
  %v2261 = vunpack.c.l.b16 %v2161
  %v2262 = vunpack.c.h.b16 %v2161
  %v2263 = vunpack.c.l.b16 %v2162
  %v2264 = vunpack.c.h.b16 %v2162
  %v2265 = vunpack.c.l.b16 %v2163
  %v2266 = vunpack.c.h.b16 %v2163
  %v2267 = vunpack.c.l.b16 %v2164
  %v2268 = vunpack.c.h.b16 %v2164
  %v2269 = vunpack.c.l.b16 %v2165
  %v2270 = vunpack.c.h.b16 %v2165
  %v2271 = vunpack.c.l.b16 %v2166
  %v2272 = vunpack.c.h.b16 %v2166
  %v2273 = vunpack.c.l.b16 %v2167
  %v2274 = vunpack.c.h.b16 %v2167
  %v2275 = vunpack.c.l.b16 %v2168
  %v2276 = vunpack.c.h.b16 %v2168
  %v2277 = vunpack.c.l.b16 %v2169
  %v2278 = vunpack.c.h.b16 %v2169
  %v2279 = vunpack.c.l.b16 %v2170
  %v2280 = vunpack.c.h.b16 %v2170
  %v2281 = vunpack.c.l.b16 %v2171
  %v2282 = vunpack.c.h.b16 %v2171
  %v2283 = vunpack.c.l.b16 %v2172
  %v2284 = vunpack.c.h.b16 %v2172
  %v2285 = vunpack.c.l.b16 %v2173
  %v2286 = vunpack.c.h.b16 %v2173
  %v2287 = vunpack.c.l.b16 %v2174
  %v2288 = vunpack.c.h.b16 %v2174
  %v2289 = vunpack.c.l.b16 %v2175
  %v2290 = vunpack.c.h.b16 %v2175
  %v2291 = vunpack.c.l.b16 %v2176
  %v2292 = vunpack.c.h.b16 %v2176
  %v2293 = vunpack.c.l.b16 %v2177
  %v2294 = vunpack.c.h.b16 %v2177
  %v2295 = vunpack.c.l.b16 %v2178
  %v2296 = vunpack.c.h.b16 %v2178
  %v2297 = vpack.c.b16 %v2237, %v2233
  %v2298 = vpack.c.b16 %v2238, %v2234
  %v2299 = vpack.c.b16 %v2239, %v2235
  %v2300 = vpack.c.b16 %v2240, %v2236
  %v2301 = vpack.c.b16 %v2245, %v2241
  %v2302 = vpack.c.b16 %v2246, %v2242
  %v2303 = vpack.c.b16 %v2247, %v2243
  %v2304 = vpack.c.b16 %v2248, %v2244
  %v2305 = vpack.c.b16 %v2253, %v2249
  %v2306 = vpack.c.b16 %v2254, %v2250
  %v2307 = vpack.c.b16 %v2255, %v2251
  %v2308 = vpack.c.b16 %v2256, %v2252
  %v2309 = vpack.c.b16 %v2261, %v2257
  %v2310 = vpack.c.b16 %v2262, %v2258
  %v2311 = vpack.c.b16 %v2263, %v2259
  %v2312 = vpack.c.b16 %v2264, %v2260
  %v2313 = vpack.c.b16 %v2269, %v2265
  %v2314 = vpack.c.b16 %v2270, %v2266
  %v2315 = vpack.c.b16 %v2271, %v2267
  %v2316 = vpack.c.b16 %v2272, %v2268
  %v2317 = vpack.c.b16 %v2277, %v2273
  %v2318 = vpack.c.b16 %v2278, %v2274
  %v2319 = vpack.c.b16 %v2279, %v2275
  %v2320 = vpack.c.b16 %v2280, %v2276
  %v2321 = vpack.c.b16 %v2285, %v2281
  %v2322 = vpack.c.b16 %v2286, %v2282
  %v2323 = vpack.c.b16 %v2287, %v2283
  %v2324 = vpack.c.b16 %v2288, %v2284
  %v2325 = vpack.c.b16 %v2293, %v2289
  %v2326 = vpack.c.b16 %v2294, %v2290
  %v2327 = vpack.c.b16 %v2295, %v2291
  %v2328 = vpack.c.b16 %v2296, %v2292
  %2361 = vmatprep.subr.bf16.mxu0 %v2298
  %2362 = vmatpush1.bf16.msra.mxu0 %v2297
  %2363 = vmatprep.subr.bf16.mxu0 %v2302
  %2364 = vmatpush1.bf16.msra.mxu0 %v2301
  %2365 = vmatprep.subr.bf16.mxu0 %v2306
  %2366 = vmatpush1.bf16.msra.mxu0 %v2305
  %2367 = vmatprep.subr.bf16.mxu0 %v2310
  %2368 = vmatpush1.bf16.msra.mxu0 %v2309
  %2369 = vmatprep.subr.bf16.mxu0 %v2314
  %2370 = vmatpush1.bf16.msra.mxu0 %v2313
  %2371 = vmatprep.subr.bf16.mxu0 %v2318
  %2372 = vmatpush1.bf16.msra.mxu0 %v2317
  %2373 = vmatprep.subr.bf16.mxu0 %v2322
  %2374 = vmatpush1.bf16.msra.mxu0 %v2321
  %2375 = vmatprep.subr.bf16.mxu0 %v2326
  %2376 = vmatpush1.bf16.msra.mxu0 %v2325
  %2377 = vmatprep.subr.bf16.mxu0 0
  %2378 = vmatpush1.bf16.msra.mxu0 0
  %2379 = vmatprep.subr.bf16.mxu0 0
  %2380 = vmatpush1.bf16.msra.mxu0 0
  %2381 = vmatprep.subr.bf16.mxu0 0
  %2382 = vmatpush1.bf16.msra.mxu0 0
  %2383 = vmatprep.subr.bf16.mxu0 0
  %2384 = vmatpush1.bf16.msra.mxu0 0
  %2385 = vmatprep.subr.bf16.mxu0 0
  %2386 = vmatpush1.bf16.msra.mxu0 0
  %2387 = vmatprep.subr.bf16.mxu0 0
  %2388 = vmatpush1.bf16.msra.mxu0 0
  %2389 = vmatprep.subr.bf16.mxu0 0
  %2390 = vmatpush1.bf16.msra.mxu0 0
  %2391 = vmatprep.subr.bf16.mxu0 0
  %2392 = vmatpush1.bf16.msra.mxu0 0
  %2393 = vmatprep.mubr.bf16.mxu0 0
  %2394 = vmatmul.mubr.bf16.gmra.mrb[0].mxu0 %v2146
  %v2395 = vpop.f32.mrb[0].mxu0
  %v2396 = vadd.f32 %v2184, %v2395
  %v2397 = vpop.f32.mrb[0].mxu0
  %v2398 = vadd.f32 %v2188, %v2397
  %v2399 = vpop.f32.mrb[0].mxu0
  %v2400 = vpop.f32.mrb[0].mxu0
  %2401 = vdwg.mxu0
  %2402 = vmatprep.subr.bf16.mxu0 %v2300
  %2403 = vmatpush1.bf16.msra.mxu0 %v2299
  %2404 = vmatprep.subr.bf16.mxu0 %v2304
  %2405 = vmatpush1.bf16.msra.mxu0 %v2303
  %2406 = vmatprep.subr.bf16.mxu0 %v2308
  %2407 = vmatpush1.bf16.msra.mxu0 %v2307
  %2408 = vmatprep.subr.bf16.mxu0 %v2312
  %2409 = vmatpush1.bf16.msra.mxu0 %v2311
  %2410 = vmatprep.subr.bf16.mxu0 %v2316
  %2411 = vmatpush1.bf16.msra.mxu0 %v2315
  %2412 = vmatprep.subr.bf16.mxu0 %v2320
  %2413 = vmatpush1.bf16.msra.mxu0 %v2319
  %2414 = vmatprep.subr.bf16.mxu0 %v2324
  %2415 = vmatpush1.bf16.msra.mxu0 %v2323
  %2416 = vmatprep.subr.bf16.mxu0 %v2328
  %2417 = vmatpush1.bf16.msra.mxu0 %v2327
  %2418 = vmatprep.subr.bf16.mxu0 0
  %2419 = vmatpush1.bf16.msra.mxu0 0
  %2420 = vmatprep.subr.bf16.mxu0 0
  %2421 = vmatpush1.bf16.msra.mxu0 0
  %2422 = vmatprep.subr.bf16.mxu0 0
  %2423 = vmatpush1.bf16.msra.mxu0 0
  %2424 = vmatprep.subr.bf16.mxu0 0
  %2425 = vmatpush1.bf16.msra.mxu0 0
  %2426 = vmatprep.subr.bf16.mxu0 0
  %2427 = vmatpush1.bf16.msra.mxu0 0
  %2428 = vmatprep.subr.bf16.mxu0 0
  %2429 = vmatpush1.bf16.msra.mxu0 0
  %2430 = vmatprep.subr.bf16.mxu0 0
  %2431 = vmatpush1.bf16.msra.mxu0 0
  %2432 = vmatprep.subr.bf16.mxu0 0
  %2433 = vmatpush1.bf16.msra.mxu0 0
  %2434 = vmatprep.mubr.bf16.mxu0 0
  %2435 = vmatmul.mubr.bf16.gmra.mrb[0].mxu0 %v2146
  %v2436 = vpop.f32.mrb[0].mxu0
  %v2437 = vadd.f32 %v2192, %v2436
  %v2438 = vpop.f32.mrb[0].mxu0
  %v2439 = vadd.f32 %v2196, %v2438
  %v2440 = vpop.f32.mrb[0].mxu0
  %v2441 = vpop.f32.mrb[0].mxu0
  %2442 = vdwg.mxu0
  %v2443 = vmax.f32 %v2396, 0.0
  %v2444 = vmax.f32 %v2398, 0.0
  %v2445 = vmax.f32 %v2437, 0.0
  %v2446 = vmax.f32 %v2439, 0.0
  %v2447 = vpack.c.bf16 %v2443, %v2443
  %v2448 = vpack.c.bf16 %v2444, %v2444
  %v2449 = vpack.c.bf16 %v2445, %v2445
  %v2450 = vpack.c.bf16 %v2446, %v2446
  %v2451 = vld [vmem:[%s7] sm:$0xf]
  %v2452 = vld [vmem:[%s7 + $0x4] sm:$0xf]
  %v2453 = vld [vmem:[%s7 + $0x8] sm:$0xf]
  %v2454 = vld [vmem:[%s7 + $0xc] sm:$0xf]
  %v2455 = vld [vmem:[%s7 + $0x10] sm:$0xf]
  %v2456 = vld [vmem:[%s7 + $0x14] sm:$0xf]
  %v2457 = vld [vmem:[%s7 + $0x18] sm:$0xf]
  %v2458 = vld [vmem:[%s7 + $0x1c] sm:$0xf]
  %v2459 = vld [vmem:[%s7 + $0x20] sm:$0xf]
  %v2460 = vld [vmem:[%s7 + $0x24] sm:$0xf]
  %v2461 = vld [vmem:[%s7 + $0x28] sm:$0xf]
  %v2462 = vld [vmem:[%s7 + $0x2c] sm:$0xf]
  %v2463 = vld [vmem:[%s7 + $0x30] sm:$0xf]
  %v2464 = vld [vmem:[%s7 + $0x34] sm:$0xf]
  %v2465 = vld [vmem:[%s7 + $0x38] sm:$0xf]
  %v2466 = vld [vmem:[%s7 + $0x3c] sm:$0xf]
  %v2467 = vld [vmem:[%s7 + $0x40] sm:$0xf]
  %v2468 = vld [vmem:[%s7 + $0x44] sm:$0xf]
  %v2469 = vld [vmem:[%s7 + $0x48] sm:$0xf]
  %v2470 = vld [vmem:[%s7 + $0x4c] sm:$0xf]
  %v2471 = vld [vmem:[%s7 + $0x50] sm:$0xf]
  %v2472 = vld [vmem:[%s7 + $0x54] sm:$0xf]
  %v2473 = vld [vmem:[%s7 + $0x58] sm:$0xf]
  %v2474 = vld [vmem:[%s7 + $0x5c] sm:$0xf]
  %v2475 = vld [vmem:[%s7 + $0x60] sm:$0xf]
  %v2476 = vld [vmem:[%s7 + $0x64] sm:$0xf]
  %v2477 = vld [vmem:[%s7 + $0x68] sm:$0xf]
  %v2478 = vld [vmem:[%s7 + $0x6c] sm:$0xf]
  %v2479 = vld [vmem:[%s7 + $0x70] sm:$0xf]
  %v2480 = vld [vmem:[%s7 + $0x74] sm:$0xf]
  %v2481 = vld [vmem:[%s7 + $0x78] sm:$0xf]
  %v2482 = vld [vmem:[%s7 + $0x7c] sm:$0xf]
  %v2483 = vld [vmem:[%s7 + $0x80] sm:$0xf]
  %v2484 = vld [vmem:[%s7 + $0x84] sm:$0xf]
  %v2485 = vld [vmem:[%s7 + $0x88] sm:$0xf]
  %v2486 = vld [vmem:[%s7 + $0x8c] sm:$0xf]
  %v2487 = vld [vmem:[%s7 + $0x90] sm:$0xf]
  %v2488 = vld [vmem:[%s7 + $0x94] sm:$0xf]
  %v2489 = vld [vmem:[%s7 + $0x98] sm:$0xf]
  %v2490 = vld [vmem:[%s7 + $0x9c] sm:$0xf]
  %v2491 = vld [vmem:[%s7 + $0xa0] sm:$0xf]
  %v2492 = vld [vmem:[%s7 + $0xa4] sm:$0xf]
  %v2493 = vld [vmem:[%s7 + $0xa8] sm:$0xf]
  %v2494 = vld [vmem:[%s7 + $0xac] sm:$0xf]
  %v2495 = vld [vmem:[%s7 + $0xb0] sm:$0xf]
  %v2496 = vld [vmem:[%s7 + $0xb4] sm:$0xf]
  %v2497 = vld [vmem:[%s7 + $0xb8] sm:$0xf]
  %v2498 = vld [vmem:[%s7 + $0xbc] sm:$0xf]
  %v2499 = vld [vmem:[%s7 + $0xc0] sm:$0xf]
  %v2500 = vld [vmem:[%s7 + $0xc4] sm:$0xf]
  %v2501 = vld [vmem:[%s7 + $0xc8] sm:$0xf]
  %v2502 = vld [vmem:[%s7 + $0xcc] sm:$0xf]
  %v2503 = vld [vmem:[%s7 + $0xd0] sm:$0xf]
  %v2504 = vld [vmem:[%s7 + $0xd4] sm:$0xf]
  %v2505 = vld [vmem:[%s7 + $0xd8] sm:$0xf]
  %v2506 = vld [vmem:[%s7 + $0xdc] sm:$0xf]
  %v2507 = vld [vmem:[%s7 + $0xe0] sm:$0xf]
  %v2508 = vld [vmem:[%s7 + $0xe4] sm:$0xf]
  %v2509 = vld [vmem:[%s7 + $0xe8] sm:$0xf]
  %v2510 = vld [vmem:[%s7 + $0xec] sm:$0xf]
  %v2511 = vld [vmem:[%s7 + $0xf0] sm:$0xf]
  %v2512 = vld [vmem:[%s7 + $0xf4] sm:$0xf]
  %v2513 = vld [vmem:[%s7 + $0xf8] sm:$0xf]
  %v2514 = vld [vmem:[%s7 + $0xfc] sm:$0xf]
  %v2515 = vld [vmem:[%s8] sm:$0x1]
  %v2517 = vlaneseq
  %v2518 = vshrl.u32 %v2517, 7
  %v2519 = vsub.s32 0, %v2518
  %v2520 = vrot.slane %v2515, %v2519
  %v2586 = vunpack.c.l.b16 %v2451
  %v2587 = vunpack.c.l.b16 %v2452
  %v2588 = vunpack.c.l.b16 %v2453
  %v2589 = vunpack.c.l.b16 %v2454
  %v2590 = vunpack.c.l.b16 %v2455
  %v2591 = vunpack.c.l.b16 %v2456
  %v2592 = vunpack.c.l.b16 %v2457
  %v2593 = vunpack.c.l.b16 %v2458
  %v2594 = vunpack.c.l.b16 %v2459
  %v2595 = vunpack.c.l.b16 %v2460
  %v2596 = vunpack.c.l.b16 %v2461
  %v2597 = vunpack.c.l.b16 %v2462
  %v2598 = vunpack.c.l.b16 %v2463
  %v2599 = vunpack.c.l.b16 %v2464
  %v2600 = vunpack.c.l.b16 %v2465
  %v2601 = vunpack.c.l.b16 %v2466
  %v2602 = vunpack.c.l.b16 %v2467
  %v2603 = vunpack.c.l.b16 %v2468
  %v2604 = vunpack.c.l.b16 %v2469
  %v2605 = vunpack.c.l.b16 %v2470
  %v2606 = vunpack.c.l.b16 %v2471
  %v2607 = vunpack.c.l.b16 %v2472
  %v2608 = vunpack.c.l.b16 %v2473
  %v2609 = vunpack.c.l.b16 %v2474
  %v2610 = vunpack.c.l.b16 %v2475
  %v2611 = vunpack.c.l.b16 %v2476
  %v2612 = vunpack.c.l.b16 %v2477
  %v2613 = vunpack.c.l.b16 %v2478
  %v2614 = vunpack.c.l.b16 %v2479
  %v2615 = vunpack.c.l.b16 %v2480
  %v2616 = vunpack.c.l.b16 %v2481
  %v2617 = vunpack.c.l.b16 %v2482
  %v2618 = vunpack.c.l.b16 %v2483
  %v2619 = vunpack.c.l.b16 %v2484
  %v2620 = vunpack.c.l.b16 %v2485
  %v2621 = vunpack.c.l.b16 %v2486
  %v2622 = vunpack.c.l.b16 %v2487
  %v2623 = vunpack.c.l.b16 %v2488
  %v2624 = vunpack.c.l.b16 %v2489
  %v2625 = vunpack.c.l.b16 %v2490
  %v2626 = vunpack.c.l.b16 %v2491
  %v2627 = vunpack.c.l.b16 %v2492
  %v2628 = vunpack.c.l.b16 %v2493
  %v2629 = vunpack.c.l.b16 %v2494
  %v2630 = vunpack.c.l.b16 %v2495
  %v2631 = vunpack.c.l.b16 %v2496
  %v2632 = vunpack.c.l.b16 %v2497
  %v2633 = vunpack.c.l.b16 %v2498
  %v2634 = vunpack.c.l.b16 %v2499
  %v2635 = vunpack.c.l.b16 %v2500
  %v2636 = vunpack.c.l.b16 %v2501
  %v2637 = vunpack.c.l.b16 %v2502
  %v2638 = vunpack.c.l.b16 %v2503
  %v2639 = vunpack.c.l.b16 %v2504
  %v2640 = vunpack.c.l.b16 %v2505
  %v2641 = vunpack.c.l.b16 %v2506
  %v2642 = vunpack.c.l.b16 %v2507
  %v2643 = vunpack.c.l.b16 %v2508
  %v2644 = vunpack.c.l.b16 %v2509
  %v2645 = vunpack.c.l.b16 %v2510
  %v2646 = vunpack.c.l.b16 %v2511
  %v2647 = vunpack.c.l.b16 %v2512
  %v2648 = vunpack.c.l.b16 %v2513
  %v2649 = vunpack.c.l.b16 %v2514
  %v2650 = vpack.c.b16 %v2587, %v2586
  %v2651 = vpack.c.b16 %v2589, %v2588
  %v2652 = vpack.c.b16 %v2591, %v2590
  %v2653 = vpack.c.b16 %v2593, %v2592
  %v2654 = vpack.c.b16 %v2595, %v2594
  %v2655 = vpack.c.b16 %v2597, %v2596
  %v2656 = vpack.c.b16 %v2599, %v2598
  %v2657 = vpack.c.b16 %v2601, %v2600
  %v2658 = vpack.c.b16 %v2603, %v2602
  %v2659 = vpack.c.b16 %v2605, %v2604
  %v2660 = vpack.c.b16 %v2607, %v2606
  %v2661 = vpack.c.b16 %v2609, %v2608
  %v2662 = vpack.c.b16 %v2611, %v2610
  %v2663 = vpack.c.b16 %v2613, %v2612
  %v2664 = vpack.c.b16 %v2615, %v2614
  %v2665 = vpack.c.b16 %v2617, %v2616
  %v2666 = vpack.c.b16 %v2619, %v2618
  %v2667 = vpack.c.b16 %v2621, %v2620
  %v2668 = vpack.c.b16 %v2623, %v2622
  %v2669 = vpack.c.b16 %v2625, %v2624
  %v2670 = vpack.c.b16 %v2627, %v2626
  %v2671 = vpack.c.b16 %v2629, %v2628
  %v2672 = vpack.c.b16 %v2631, %v2630
  %v2673 = vpack.c.b16 %v2633, %v2632
  %v2674 = vpack.c.b16 %v2635, %v2634
  %v2675 = vpack.c.b16 %v2637, %v2636
  %v2676 = vpack.c.b16 %v2639, %v2638
  %v2677 = vpack.c.b16 %v2641, %v2640
  %v2678 = vpack.c.b16 %v2643, %v2642
  %v2679 = vpack.c.b16 %v2645, %v2644
  %v2680 = vpack.c.b16 %v2647, %v2646
  %v2681 = vpack.c.b16 %v2649, %v2648
  %2714 = vmatprep.subr.bf16.mxu0 0
  %2715 = vmatpush1.bf16.msra.mxu0 %v2650
  %2716 = vmatprep.subr.bf16.mxu0 0
  %2717 = vmatpush1.bf16.msra.mxu0 %v2651
  %2718 = vmatprep.subr.bf16.mxu0 0
  %2719 = vmatpush1.bf16.msra.mxu0 %v2652
  %2720 = vmatprep.subr.bf16.mxu0 0
  %2721 = vmatpush1.bf16.msra.mxu0 %v2653
  %2722 = vmatprep.subr.bf16.mxu0 0
  %2723 = vmatpush1.bf16.msra.mxu0 %v2654
  %2724 = vmatprep.subr.bf16.mxu0 0
  %2725 = vmatpush1.bf16.msra.mxu0 %v2655
  %2726 = vmatprep.subr.bf16.mxu0 0
  %2727 = vmatpush1.bf16.msra.mxu0 %v2656
  %2728 = vmatprep.subr.bf16.mxu0 0
  %2729 = vmatpush1.bf16.msra.mxu0 %v2657
  %2730 = vmatprep.subr.bf16.mxu0 0
  %2731 = vmatpush1.bf16.msra.mxu0 %v2658
  %2732 = vmatprep.subr.bf16.mxu0 0
  %2733 = vmatpush1.bf16.msra.mxu0 %v2659
  %2734 = vmatprep.subr.bf16.mxu0 0
  %2735 = vmatpush1.bf16.msra.mxu0 %v2660
  %2736 = vmatprep.subr.bf16.mxu0 0
  %2737 = vmatpush1.bf16.msra.mxu0 %v2661
  %2738 = vmatprep.subr.bf16.mxu0 0
  %2739 = vmatpush1.bf16.msra.mxu0 %v2662
  %2740 = vmatprep.subr.bf16.mxu0 0
  %2741 = vmatpush1.bf16.msra.mxu0 %v2663
  %2742 = vmatprep.subr.bf16.mxu0 0
  %2743 = vmatpush1.bf16.msra.mxu0 %v2664
  %2744 = vmatprep.subr.bf16.mxu0 0
  %2745 = vmatpush1.bf16.msra.mxu0 %v2665
  %2746 = vmatprep.mubr.bf16.mxu0 %v2448
  %2747 = vmatmul.mubr.bf16.gmra.mrb[0].mxu0 %v2447
  %v2748 = vpop.f32.mrb[0].mxu0
  %v2749 = vadd.f32 %v2520, %v2748
  %v2750 = vpop.f32.mrb[0].mxu0
  %v2751 = vpop.f32.mrb[0].mxu0
  %v2752 = vpop.f32.mrb[0].mxu0
  %2753 = vdwg.mxu0
  %2754 = vmatprep.subr.bf16.mxu0 0
  %2755 = vmatpush1.bf16.msra.mxu0 %v2666
  %2756 = vmatprep.subr.bf16.mxu0 0
  %2757 = vmatpush1.bf16.msra.mxu0 %v2667
  %2758 = vmatprep.subr.bf16.mxu0 0
  %2759 = vmatpush1.bf16.msra.mxu0 %v2668
  %2760 = vmatprep.subr.bf16.mxu0 0
  %2761 = vmatpush1.bf16.msra.mxu0 %v2669
  %2762 = vmatprep.subr.bf16.mxu0 0
  %2763 = vmatpush1.bf16.msra.mxu0 %v2670
  %2764 = vmatprep.subr.bf16.mxu0 0
  %2765 = vmatpush1.bf16.msra.mxu0 %v2671
  %2766 = vmatprep.subr.bf16.mxu0 0
  %2767 = vmatpush1.bf16.msra.mxu0 %v2672
  %2768 = vmatprep.subr.bf16.mxu0 0
  %2769 = vmatpush1.bf16.msra.mxu0 %v2673
  %2770 = vmatprep.subr.bf16.mxu0 0
  %2771 = vmatpush1.bf16.msra.mxu0 %v2674
  %2772 = vmatprep.subr.bf16.mxu0 0
  %2773 = vmatpush1.bf16.msra.mxu0 %v2675
  %2774 = vmatprep.subr.bf16.mxu0 0
  %2775 = vmatpush1.bf16.msra.mxu0 %v2676
  %2776 = vmatprep.subr.bf16.mxu0 0
  %2777 = vmatpush1.bf16.msra.mxu0 %v2677
  %2778 = vmatprep.subr.bf16.mxu0 0
  %2779 = vmatpush1.bf16.msra.mxu0 %v2678
  %2780 = vmatprep.subr.bf16.mxu0 0
  %2781 = vmatpush1.bf16.msra.mxu0 %v2679
  %2782 = vmatprep.subr.bf16.mxu0 0
  %2783 = vmatpush1.bf16.msra.mxu0 %v2680
  %2784 = vmatprep.subr.bf16.mxu0 0
  %2785 = vmatpush1.bf16.msra.mxu0 %v2681
  %2786 = vmatprep.mubr.bf16.mxu0 %v2450
  %2787 = vmatmul.mubr.bf16.gmra.mrb[0].mxu0 %v2449
  %v2788 = vpop.f32.mrb[0].mxu0
  %v2789 = vadd.f32 %v2749, %v2788
  %v2790 = vpop.f32.mrb[0].mxu0
  %v2791 = vpop.f32.mrb[0].mxu0
  %v2792 = vpop.f32.mrb[0].mxu0
  %2793 = vdwg.mxu0
  %2794 = vst [vmem:[%s9] sm:$0xff] %v2789
  // Predicated region
  $region38: #{deep_q_network_forward.3} parent=0 // pred_check
    _
  $region39: #{deep_q_network_forward.3} parent=0 // pred_check_branch
    %2796 = sbr.rel (0) target = $region41
  $region40: #{deep_q_network_forward.3} parent=0 // pred_region
    _
  $region41: #{deep_q_network_forward.3} parent=0 // pred_fallthru
    _
  // Predicated region
  $region42: #{deep_q_network_forward.3} parent=0 // pred_check
    _
  $region43: #{deep_q_network_forward.3} parent=0 // pred_check_branch
    %2798 = sbr.rel (0) target = $region45
  $region44: #{deep_q_network_forward.3} parent=0 // pred_region
    _
  $region45: #{deep_q_network_forward.3} parent=0 // pred_fallthru
    _

</llo_original>
